<compile_context>
chip_gen: v6e
topology: v6e:2x2x1
jax: 0.10.0
libtpu: 0.0.40
codegen_flags: <defaults>
</compile_context>

<pallas_src>
import jax
import jax.numpy as jnp
import numpy as np
from jax.experimental import pallas as pl
from jax.experimental.pallas import tpu as pltpu

LANE = 128
SUBLANE = 8


def _round_up(n: int, m: int) -> int:
    return ((n + m - 1) // m) * m


def _pad_to(a, shape):
    return jnp.pad(a, [(0, t - s) for s, t in zip(a.shape, shape)])


def _make_kernel(layer_num: int, L: int, TL: int, FH: int, W: int):
    # Offset so the per-row "position within its length-L sequence" can be computed
    # from non-negative integers while preserving the value mod L.
    OFFS = _round_up(FH, L) - FH

    def kernel(xw_ref, pre_w_ref, pre_b_ref, w1_ref, b1_ref,
               w2_ref, b2_ref, w3_ref, b3_ref, o_ref):
        t = pl.program_id(0)

        # pre: 1x1 conv == channel matmul (bf16 MXU, f32 accumulation).
        x = xw_ref[0].astype(jnp.bfloat16)                                  # (W, CinP)
        h = jnp.dot(x, pre_w_ref[...],
                    preferred_element_type=jnp.float32) + pre_b_ref[...]    # (W, CP) f32

        # (W, 1) position of every window row inside its own length-L sequence.
        local = jax.lax.broadcasted_iota(jnp.int32, (W, 1), 0)
        row_mod = (t * TL + local + OFFS) % L

        # Residual bottleneck dilated stack (unrolled; layer_num is static).
        for i in range(layer_num):
            d = 2 ** i
            r0 = jnp.maximum(h, 0.0).astype(jnp.bfloat16)                   # relu(h)
            a = jnp.dot(r0, w1_ref[i],
                        preferred_element_type=jnp.float32) + b1_ref[i]     # (W, C4P)
            r1 = jnp.maximum(a, 0.0)                                        # f32

            # Dilated k=3 taps at t-d / t / t+d, zero-padded *per sequence*:
            # masks on row_mod keep taps from crossing batch boundaries.
            r_m = jnp.where(row_mod >= d, pltpu.roll(r1, shift=d, axis=0), 0.0)
            r_p = jnp.where(row_mod < L - d, pltpu.roll(r1, shift=W - d, axis=0), 0.0)

            # Three accumulating dots instead of concat + fused dot (no tap copies).
            b2v = jnp.dot(r1.astype(jnp.bfloat16), w2_ref[3 * i + 1],
                          preferred_element_type=jnp.float32)
            b2v += jnp.dot(r_m.astype(jnp.bfloat16), w2_ref[3 * i + 0],
                           preferred_element_type=jnp.float32)
            b2v += jnp.dot(r_p.astype(jnp.bfloat16), w2_ref[3 * i + 2],
                           preferred_element_type=jnp.float32)
            r2 = jnp.maximum(b2v + b2_ref[i], 0.0).astype(jnp.bfloat16)

            h = h + jnp.dot(r2, w3_ref[i],
                            preferred_element_type=jnp.float32) + b3_ref[i]

        # Write only the central TL rows; halo rows are recomputed by neighbours.
        o_ref[0] = h[FH:FH + TL, :]

    return kernel


def residual_bottleneck_dilated_cnn_pallas(x, pre_w, pre_b,
                                           w1_eff, b1, w2_eff, b2, w3_eff, b3,
                                           *, tile_rows: int = 1024):
    """
    x      : (B, L, Cin) float32
    pre_w  : (C, Cin, 1)           PyTorch Conv1d weight
    pre_b  : (C,)
    w1_eff : (layers, C4, C, 1)    effective (post weight-norm) conv1 weights
    b1     : (layers, C4)
    w2_eff : (layers, C4, C4, 3)   effective conv2 weights (k=3, dilation=2^i)
    b2     : (layers, C4)
    w3_eff : (layers, C, C4, 1)    effective conv3 weights
    b3     : (layers, C)
    returns: (B, L, C) float32
    """
    B, L, Cin = x.shape
    C = pre_w.shape[0]
    layers = w1_eff.shape[0]
    C4 = w1_eff.shape[1]

    CP = _round_up(C, LANE)
    C4P = _round_up(C4, LANE)
    CinP = _round_up(Cin, SUBLANE)          # sublane pad only; no 16x lane padding

    halo = 2 ** layers - 1                  # total dilated receptive-field reach
    FH = max(SUBLANE, _round_up(halo, SUBLANE))
    N = B * L
    TL = max(16, min(_round_up(tile_rows, 16), _round_up(N, 16)))
    W = TL + 2 * FH                         # window rows per tile (multiple of 8)
    num_tiles = pl.cdiv(N, TL)
    total = num_tiles * TL

    # ---- lane/sublane-dense re-layout (plain JAX glue, done once in HBM) ----
    # Flatten (B, L) into rows and gather overlapping (TL + 2*FH)-row windows so
    # every grid step is an independent, halo-complete tile (overlap cost 2*FH/TL,
    # and only on the cheap Cin-channel input).
    xf = x.reshape(N, Cin).astype(jnp.float32)
    xf = jnp.pad(xf, ((FH, total - N + FH), (0, CinP - Cin)))
    win_idx = (jnp.arange(num_tiles, dtype=jnp.int32)[:, None] * TL
               + jnp.arange(W, dtype=jnp.int32)[None, :])
    xw = jnp.take(xf, win_idx, axis=0)                         # (num_tiles, W, CinP)

    wdt = jnp.bfloat16                                         # MXU-native weights
    pre_w_t = _pad_to(jnp.transpose(pre_w[:, :, 0], (1, 0)), (CinP, CP)).astype(wdt)
    pre_b_p = _pad_to(pre_b, (CP,)).reshape(1, CP).astype(jnp.float32)

    w1_t = _pad_to(jnp.transpose(w1_eff[:, :, :, 0], (0, 2, 1)),
                   (layers, CP, C4P)).astype(wdt)              # (layers, CP, C4P)
    b1_p = _pad_to(b1, (layers, C4P)).reshape(layers, 1, C4P).astype(jnp.float32)

    # (layers, C4out, C4in, 3) -> (layers, 3, C4in, C4out) -> (3*layers, C4P, C4P)
    w2_t = jnp.transpose(w2_eff, (0, 3, 2, 1))
    w2_t = _pad_to(w2_t, (layers, 3, C4P, C4P)).reshape(3 * layers, C4P, C4P).astype(wdt)
    b2_p = _pad_to(b2, (layers, C4P)).reshape(layers, 1, C4P).astype(jnp.float32)

    w3_t = _pad_to(jnp.transpose(w3_eff[:, :, :, 0], (0, 2, 1)),
                   (layers, C4P, CP)).astype(wdt)              # (layers, C4P, CP)
    b3_p = _pad_to(b3, (layers, CP)).reshape(layers, 1, CP).astype(jnp.float32)

    kernel = _make_kernel(layers, L, TL, FH, W)

    def call(single_buffer_weights: bool):
        def const_spec(shape):
            if len(shape) == 2:
                index_map = lambda t: (0, 0)
            else:
                index_map = lambda t: (0, 0, 0)
            if single_buffer_weights:
                # Constant-index blocks are never re-fetched: single-buffer them.
                return pl.BlockSpec(shape, index_map, pipeline_mode=pl.Buffered(1))
            return pl.BlockSpec(shape, index_map)

        return pl.pallas_call(
            kernel,
            out_shape=jax.ShapeDtypeStruct((num_tiles, TL, CP), jnp.float32),
            grid_spec=pltpu.PrefetchScalarGridSpec(
                num_scalar_prefetch=0,
                grid=(num_tiles,),
                in_specs=[
                    pl.BlockSpec((1, W, CinP), lambda t: (t, 0, 0)),
                    const_spec((CinP, CP)),
                    const_spec((1, CP)),
                    const_spec((layers, CP, C4P)),
                    const_spec((layers, 1, C4P)),
                    const_spec((3 * layers, C4P, C4P)),
                    const_spec((layers, 1, C4P)),
                    const_spec((layers, C4P, CP)),
                    const_spec((layers, 1, CP)),
                ],
                out_specs=pl.BlockSpec((1, TL, CP), lambda t: (t, 0, 0)),
            ),
            compiler_params=pltpu.CompilerParams(
                dimension_semantics=("parallel",),
                # Sized against v7x's 64 MiB/TC budget (actual use is a few MiB at
                # tile_rows=1024); on v5e/v6e this can be raised toward ~100 MiB
                # together with a larger tile_rows.
                vmem_limit_bytes=48 * 1024 * 1024,
            ),
        )(xw, pre_w_t, pre_b_p, w1_t, b1_p, w2_t, b2_p, w3_t, b3_p)

    try:
        out = call(True)
    except Exception:
        # Fallback for JAX builds without BlockSpec pipeline_mode support; only the
        # single-buffering of the constant weight blocks is lost.
        out = call(False)

    out = out.reshape(num_tiles * TL, CP)[:N, :C]
    return out.reshape(B, L, C)


def weight_norm_effective(v, g):
    """PyTorch nn.utils.weight_norm (dim=0): w[o] = g[o] * v[o] / ||v[o]||_F.
    v: (layers, out, in, k), g: (layers, out)."""
    norm = jnp.sqrt(jnp.sum(v ** 2, axis=(2, 3), keepdims=True))
    return g[:, :, None, None] * v / norm


def reference_jax(x, pre_w, pre_b, w1, b1, w2, b2, w3, b3):
    """Pure-JAX reference mirroring the PyTorch forward (NCH conv layout)."""
    dn = ("NCH", "OIH", "NCH")
    h = jnp.transpose(x, (0, 2, 1))                                   # (B, Cin, L)
    h = jax.lax.conv_general_dilated(
        h, pre_w, window_strides=(1,), padding="VALID",
        dimension_numbers=dn) + pre_b[None, :, None]
    for i in range(w1.shape[0]):
        d = 2 ** i
        t = jax.nn.relu(h)
        t = jax.lax.conv_general_dilated(
            t, w1[i], window_strides=(1,), padding="VALID",
            dimension_numbers=dn) + b1[i][None, :, None]
        t = jax.nn.relu(t)
        t = jax.lax.conv_general_dilated(
            t, w2[i], window_strides=(1,), padding=[(d, d)],
            rhs_dilation=(d,), dimension_numbers=dn) + b2[i][None, :, None]
        t = jax.nn.relu(t)
        t = jax.lax.conv_general_dilated(
            t, w3[i], window_strides=(1,), padding="VALID",
            dimension_numbers=dn) + b3[i][None, :, None]
        h = h + t
    return jnp.transpose(h, (0, 2, 1))


if __name__ == "__main__":
    # Shapes consistent with the module: input_size=8, conditioning_size=32
    # (bottleneck = 8), layer_num=3 (dilations 1, 2, 4).
    B, L, input_size, conditioning_size, layer_num = 2, 16, 8, 32, 3
    C = conditioning_size
    C4 = C // 4

    key = jax.random.PRNGKey(0)
    ks = jax.random.split(key, 13)

    x = jax.random.normal(ks[0], (B, L, input_size), dtype=jnp.float32)

    pre_w = 0.3 * jax.random.normal(ks[1], (C, input_size, 1), dtype=jnp.float32)
    pre_b = 0.1 * jax.random.normal(ks[2], (C,), dtype=jnp.float32)

    c1_v = 0.3 * jax.random.normal(ks[3], (layer_num, C4, C, 1), dtype=jnp.float32)
    c1_g = 1.0 + 0.1 * jax.random.normal(ks[4], (layer_num, C4), dtype=jnp.float32)
    c1_b = 0.1 * jax.random.normal(ks[5], (layer_num, C4), dtype=jnp.float32)

    c2_v = 0.3 * jax.random.normal(ks[6], (layer_num, C4, C4, 3), dtype=jnp.float32)
    c2_g = 1.0 + 0.1 * jax.random.normal(ks[7], (layer_num, C4), dtype=jnp.float32)
    c2_b = 0.1 * jax.random.normal(ks[8], (layer_num, C4), dtype=jnp.float32)

    c3_v = 0.3 * jax.random.normal(ks[9], (layer_num, C, C4, 1), dtype=jnp.float32)
    c3_g = 1.0 + 0.1 * jax.random.normal(ks[10], (layer_num, C), dtype=jnp.float32)
    c3_b = 0.1 * jax.random.normal(ks[11], (layer_num, C), dtype=jnp.float32)

    w1_eff = weight_norm_effective(c1_v, c1_g)   # (layers, C4, C, 1)
    w2_eff = weight_norm_effective(c2_v, c2_g)   # (layers, C4, C4, 3)
    w3_eff = weight_norm_effective(c3_v, c3_g)   # (layers, C, C4, 1)

    # bf16 matmuls with f32 accumulation -> slightly looser tolerance than pure f32.
    TOL = dict(rtol=2e-2, atol=2e-2)

    # --- Test 1: small batch, short sequence (single tile; B folded into M). ---
    out = residual_bottleneck_dilated_cnn_pallas(
        x, pre_w, pre_b, w1_eff, c1_b, w2_eff, c2_b, w3_eff, c3_b)
    out = jax.block_until_ready(out)
    ref = jax.block_until_ready(
        reference_jax(x, pre_w, pre_b, w1_eff, c1_b, w2_eff, c2_b, w3_eff, c3_b))
    np.testing.assert_allclose(np.asarray(out), np.asarray(ref), **TOL)

    # --- Test 2: multi-tile path with halos and mid-tile batch boundaries. ---
    x2 = jax.random.normal(ks[12], (3, 50, input_size), dtype=jnp.float32)
    out2 = residual_bottleneck_dilated_cnn_pallas(
        x2, pre_w, pre_b, w1_eff, c1_b, w2_eff, c2_b, w3_eff, c3_b, tile_rows=48)
    out2 = jax.block_until_ready(out2)
    ref2 = jax.block_until_ready(
        reference_jax(x2, pre_w, pre_b, w1_eff, c1_b, w2_eff, c2_b, w3_eff, c3_b))
    np.testing.assert_allclose(np.asarray(out2), np.asarray(ref2), **TOL)

    print("KERNEL_OK")
</pallas_src>

<mosaic_0001>
module attributes {stable_mosaic.version = 11 : i64} {
  func.func @kernel(%arg0: i32, %arg1: memref<1x48x8xf32, #tpu.memory_space<vmem>>, %arg2: memref<8x128xbf16, #tpu.memory_space<vmem>>, %arg3: memref<1x128xf32, #tpu.memory_space<vmem>>, %arg4: memref<3x128x128xbf16, #tpu.memory_space<vmem>>, %arg5: memref<3x1x128xf32, #tpu.memory_space<vmem>>, %arg6: memref<9x128x128xbf16, #tpu.memory_space<vmem>>, %arg7: memref<3x1x128xf32, #tpu.memory_space<vmem>>, %arg8: memref<3x128x128xbf16, #tpu.memory_space<vmem>>, %arg9: memref<3x1x128xf32, #tpu.memory_space<vmem>>, %arg10: memref<1x32x128xf32, #tpu.memory_space<vmem>>) attributes {dimension_semantics = [#tpu.dimension_semantics<parallel>], iteration_bounds = array<i64: 1>, scalar_prefetch = 0 : i64, scratch_operands = 0 : i64, tpu.core_type = #tpu.core_type<tc>, window_params = [{transform_indices = @transform_0, window_bounds = array<i64: 1, 48, 8>}, {pipeline_mode = #tpu.pipeline_mode<synchronous>, transform_indices = @transform_1, window_bounds = array<i64: 8, 128>}, {pipeline_mode = #tpu.pipeline_mode<synchronous>, transform_indices = @transform_2, window_bounds = array<i64: 1, 128>}, {pipeline_mode = #tpu.pipeline_mode<synchronous>, transform_indices = @transform_3, window_bounds = array<i64: 3, 128, 128>}, {pipeline_mode = #tpu.pipeline_mode<synchronous>, transform_indices = @transform_4, window_bounds = array<i64: 3, 1, 128>}, {pipeline_mode = #tpu.pipeline_mode<synchronous>, transform_indices = @transform_5, window_bounds = array<i64: 9, 128, 128>}, {pipeline_mode = #tpu.pipeline_mode<synchronous>, transform_indices = @transform_6, window_bounds = array<i64: 3, 1, 128>}, {pipeline_mode = #tpu.pipeline_mode<synchronous>, transform_indices = @transform_7, window_bounds = array<i64: 3, 128, 128>}, {pipeline_mode = #tpu.pipeline_mode<synchronous>, transform_indices = @transform_8, window_bounds = array<i64: 3, 1, 128>}, {transform_indices = @transform_9, window_bounds = array<i64: 1, 32, 128>}]} {
    %c0 = arith.constant 0 : index
    %c0_0 = arith.constant 0 : index
    %c0_1 = arith.constant 0 : index
    %0 = vector.load %arg1[%c0, %c0_0, %c0_1] : memref<1x48x8xf32, #tpu.memory_space<vmem>>, vector<1x48x8xf32>
    %1 = vector.shape_cast %0 : vector<1x48x8xf32> to vector<48x8xf32>
    %2 = arith.truncf %1 : vector<48x8xf32> to vector<48x8xbf16>
    %c0_2 = arith.constant 0 : index
    %c0_3 = arith.constant 0 : index
    %3 = vector.load %arg2[%c0_2, %c0_3] : memref<8x128xbf16, #tpu.memory_space<vmem>>, vector<8x128xbf16>
    %cst = arith.constant dense<0.000000e+00> : vector<48x128xf32>
    %4 = tpu.matmul %2, %3, %cst {dimension_numbers = #tpu.dot_dimension_numbers<[1], [0], [0], [1], [0, 0, 1, 1], [], []>} : vector<48x8xbf16>, vector<8x128xbf16>, vector<48x128xf32> -> vector<48x128xf32>
    %c0_4 = arith.constant 0 : index
    %c0_5 = arith.constant 0 : index
    %5 = vector.load %arg3[%c0_4, %c0_5] : memref<1x128xf32, #tpu.memory_space<vmem>>, vector<1x128xf32>
    %6 = vector.broadcast %5 : vector<1x128xf32> to vector<48x128xf32>
    %7 = arith.addf %4, %6 : vector<48x128xf32>
    %8 = tpu.iota {dimensions = array<i32: 0>} : vector<48x1xi32>
    %c32_i32 = arith.constant 32 : i32
    %9 = arith.muli %arg0, %c32_i32 : i32
    %10 = vector.broadcast %9 : i32 to vector<48x1xi32>
    %11 = arith.addi %10, %8 : vector<48x1xi32>
    %c8_i32 = arith.constant 8 : i32
    %12 = vector.broadcast %c8_i32 : i32 to vector<48x1xi32>
    %13 = arith.addi %11, %12 : vector<48x1xi32>
    %c16_i32 = arith.constant 16 : i32
    %c0_i32 = arith.constant 0 : i32
    %14 = arith.cmpi eq, %c16_i32, %c0_i32 : i32
    %c1_i32 = arith.constant 1 : i32
    %15 = arith.select %14, %c1_i32, %c16_i32 : i32
    %16 = vector.broadcast %15 : i32 to vector<48x1xi32>
    %17 = arith.remsi %13, %16 : vector<48x1xi32>
    %c0_i32_6 = arith.constant 0 : i32
    %18 = vector.broadcast %c0_i32_6 : i32 to vector<48x1xi32>
    %19 = arith.cmpi ne, %17, %18 : vector<48x1xi32>
    %c0_i32_7 = arith.constant 0 : i32
    %20 = vector.broadcast %c0_i32_7 : i32 to vector<48x1xi32>
    %21 = arith.cmpi slt, %17, %20 : vector<48x1xi32>
    %c0_i32_8 = arith.constant 0 : i32
    %22 = arith.cmpi slt, %15, %c0_i32_8 : i32
    %23 = vector.broadcast %22 : i1 to vector<48x1xi1>
    %24 = vector.broadcast %23 : vector<48x1xi1> to vector<48x1xi1>
    %25 = arith.xori %21, %24 : vector<48x1xi1>
    %26 = arith.andi %25, %19 : vector<48x1xi1>
    %27 = vector.broadcast %15 : i32 to vector<48x1xi32>
    %28 = arith.addi %17, %27 : vector<48x1xi32>
    %29 = arith.select %26, %28, %17 : vector<48x1xi1>, vector<48x1xi32>
    %cst_9 = arith.constant 0.000000e+00 : f32
    %30 = vector.broadcast %cst_9 : f32 to vector<48x128xf32>
    %31 = arith.maximumf %7, %30 : vector<48x128xf32>
    %32 = arith.truncf %31 : vector<48x128xf32> to vector<48x128xbf16>
    %c0_10 = arith.constant 0 : index
    %c0_11 = arith.constant 0 : index
    %c0_12 = arith.constant 0 : index
    %33 = vector.load %arg4[%c0_10, %c0_11, %c0_12] : memref<3x128x128xbf16, #tpu.memory_space<vmem>>, vector<1x128x128xbf16>
    %34 = vector.shape_cast %33 : vector<1x128x128xbf16> to vector<128x128xbf16>
    %cst_13 = arith.constant dense<0.000000e+00> : vector<48x128xf32>
    %35 = tpu.matmul %32, %34, %cst_13 {dimension_numbers = #tpu.dot_dimension_numbers<[1], [0], [0], [1], [0, 0, 1, 1], [], []>} : vector<48x128xbf16>, vector<128x128xbf16>, vector<48x128xf32> -> vector<48x128xf32>
    %c0_14 = arith.constant 0 : index
    %c0_15 = arith.constant 0 : index
    %c0_16 = arith.constant 0 : index
    %36 = vector.load %arg5[%c0_14, %c0_15, %c0_16] : memref<3x1x128xf32, #tpu.memory_space<vmem>>, vector<1x1x128xf32>
    %37 = vector.shape_cast %36 : vector<1x1x128xf32> to vector<1x128xf32>
    %38 = vector.broadcast %37 : vector<1x128xf32> to vector<48x128xf32>
    %39 = arith.addf %35, %38 : vector<48x128xf32>
    %cst_17 = arith.constant 0.000000e+00 : f32
    %40 = vector.broadcast %cst_17 : f32 to vector<48x128xf32>
    %41 = arith.maximumf %39, %40 : vector<48x128xf32>
    %c1_i32_18 = arith.constant 1 : i32
    %42 = vector.broadcast %c1_i32_18 : i32 to vector<48x1xi32>
    %43 = arith.cmpi sge, %29, %42 : vector<48x1xi32>
    %c1_i32_19 = arith.constant 1 : i32
    %44 = tpu.dynamic_rotate %41 by %c1_i32_19 dim 0 : vector<48x128xf32>, i32 -> vector<48x128xf32>
    %cst_20 = arith.constant 0.000000e+00 : f32
    %45 = vector.shape_cast %43 : vector<48x1xi1> to vector<48x1xi1>
    %46 = vector.broadcast %45 : vector<48x1xi1> to vector<48x128xi1>
    %47 = vector.broadcast %cst_20 : f32 to vector<48x128xf32>
    %48 = arith.select %46, %44, %47 : vector<48x128xi1>, vector<48x128xf32>
    %c15_i32 = arith.constant 15 : i32
    %49 = vector.broadcast %c15_i32 : i32 to vector<48x1xi32>
    %50 = arith.cmpi slt, %29, %49 : vector<48x1xi32>
    %c47_i32 = arith.constant 47 : i32
    %51 = tpu.dynamic_rotate %41 by %c47_i32 dim 0 : vector<48x128xf32>, i32 -> vector<48x128xf32>
    %cst_21 = arith.constant 0.000000e+00 : f32
    %52 = vector.shape_cast %50 : vector<48x1xi1> to vector<48x1xi1>
    %53 = vector.broadcast %52 : vector<48x1xi1> to vector<48x128xi1>
    %54 = vector.broadcast %cst_21 : f32 to vector<48x128xf32>
    %55 = arith.select %53, %51, %54 : vector<48x128xi1>, vector<48x128xf32>
    %56 = arith.truncf %41 : vector<48x128xf32> to vector<48x128xbf16>
    %c1 = arith.constant 1 : index
    %c0_22 = arith.constant 0 : index
    %c0_23 = arith.constant 0 : index
    %57 = vector.load %arg6[%c1, %c0_22, %c0_23] : memref<9x128x128xbf16, #tpu.memory_space<vmem>>, vector<1x128x128xbf16>
    %58 = vector.shape_cast %57 : vector<1x128x128xbf16> to vector<128x128xbf16>
    %cst_24 = arith.constant dense<0.000000e+00> : vector<48x128xf32>
    %59 = tpu.matmul %56, %58, %cst_24 {dimension_numbers = #tpu.dot_dimension_numbers<[1], [0], [0], [1], [0, 0, 1, 1], [], []>} : vector<48x128xbf16>, vector<128x128xbf16>, vector<48x128xf32> -> vector<48x128xf32>
    %60 = arith.truncf %48 : vector<48x128xf32> to vector<48x128xbf16>
    %c0_25 = arith.constant 0 : index
    %c0_26 = arith.constant 0 : index
    %c0_27 = arith.constant 0 : index
    %61 = vector.load %arg6[%c0_25, %c0_26, %c0_27] : memref<9x128x128xbf16, #tpu.memory_space<vmem>>, vector<1x128x128xbf16>
    %62 = vector.shape_cast %61 : vector<1x128x128xbf16> to vector<128x128xbf16>
    %cst_28 = arith.constant dense<0.000000e+00> : vector<48x128xf32>
    %63 = tpu.matmul %60, %62, %cst_28 {dimension_numbers = #tpu.dot_dimension_numbers<[1], [0], [0], [1], [0, 0, 1, 1], [], []>} : vector<48x128xbf16>, vector<128x128xbf16>, vector<48x128xf32> -> vector<48x128xf32>
    %64 = arith.addf %59, %63 : vector<48x128xf32>
    %65 = arith.truncf %55 : vector<48x128xf32> to vector<48x128xbf16>
    %c2 = arith.constant 2 : index
    %c0_29 = arith.constant 0 : index
    %c0_30 = arith.constant 0 : index
    %66 = vector.load %arg6[%c2, %c0_29, %c0_30] : memref<9x128x128xbf16, #tpu.memory_space<vmem>>, vector<1x128x128xbf16>
    %67 = vector.shape_cast %66 : vector<1x128x128xbf16> to vector<128x128xbf16>
    %cst_31 = arith.constant dense<0.000000e+00> : vector<48x128xf32>
    %68 = tpu.matmul %65, %67, %cst_31 {dimension_numbers = #tpu.dot_dimension_numbers<[1], [0], [0], [1], [0, 0, 1, 1], [], []>} : vector<48x128xbf16>, vector<128x128xbf16>, vector<48x128xf32> -> vector<48x128xf32>
    %69 = arith.addf %64, %68 : vector<48x128xf32>
    %c0_32 = arith.constant 0 : index
    %c0_33 = arith.constant 0 : index
    %c0_34 = arith.constant 0 : index
    %70 = vector.load %arg7[%c0_32, %c0_33, %c0_34] : memref<3x1x128xf32, #tpu.memory_space<vmem>>, vector<1x1x128xf32>
    %71 = vector.shape_cast %70 : vector<1x1x128xf32> to vector<1x128xf32>
    %72 = vector.broadcast %71 : vector<1x128xf32> to vector<48x128xf32>
    %73 = arith.addf %69, %72 : vector<48x128xf32>
    %cst_35 = arith.constant 0.000000e+00 : f32
    %74 = vector.broadcast %cst_35 : f32 to vector<48x128xf32>
    %75 = arith.maximumf %73, %74 : vector<48x128xf32>
    %76 = arith.truncf %75 : vector<48x128xf32> to vector<48x128xbf16>
    %c0_36 = arith.constant 0 : index
    %c0_37 = arith.constant 0 : index
    %c0_38 = arith.constant 0 : index
    %77 = vector.load %arg8[%c0_36, %c0_37, %c0_38] : memref<3x128x128xbf16, #tpu.memory_space<vmem>>, vector<1x128x128xbf16>
    %78 = vector.shape_cast %77 : vector<1x128x128xbf16> to vector<128x128xbf16>
    %cst_39 = arith.constant dense<0.000000e+00> : vector<48x128xf32>
    %79 = tpu.matmul %76, %78, %cst_39 {dimension_numbers = #tpu.dot_dimension_numbers<[1], [0], [0], [1], [0, 0, 1, 1], [], []>} : vector<48x128xbf16>, vector<128x128xbf16>, vector<48x128xf32> -> vector<48x128xf32>
    %80 = arith.addf %7, %79 : vector<48x128xf32>
    %c0_40 = arith.constant 0 : index
    %c0_41 = arith.constant 0 : index
    %c0_42 = arith.constant 0 : index
    %81 = vector.load %arg9[%c0_40, %c0_41, %c0_42] : memref<3x1x128xf32, #tpu.memory_space<vmem>>, vector<1x1x128xf32>
    %82 = vector.shape_cast %81 : vector<1x1x128xf32> to vector<1x128xf32>
    %83 = vector.broadcast %82 : vector<1x128xf32> to vector<48x128xf32>
    %84 = arith.addf %80, %83 : vector<48x128xf32>
    %cst_43 = arith.constant 0.000000e+00 : f32
    %85 = vector.broadcast %cst_43 : f32 to vector<48x128xf32>
    %86 = arith.maximumf %84, %85 : vector<48x128xf32>
    %87 = arith.truncf %86 : vector<48x128xf32> to vector<48x128xbf16>
    %c1_44 = arith.constant 1 : index
    %c0_45 = arith.constant 0 : index
    %c0_46 = arith.constant 0 : index
    %88 = vector.load %arg4[%c1_44, %c0_45, %c0_46] : memref<3x128x128xbf16, #tpu.memory_space<vmem>>, vector<1x128x128xbf16>
    %89 = vector.shape_cast %88 : vector<1x128x128xbf16> to vector<128x128xbf16>
    %cst_47 = arith.constant dense<0.000000e+00> : vector<48x128xf32>
    %90 = tpu.matmul %87, %89, %cst_47 {dimension_numbers = #tpu.dot_dimension_numbers<[1], [0], [0], [1], [0, 0, 1, 1], [], []>} : vector<48x128xbf16>, vector<128x128xbf16>, vector<48x128xf32> -> vector<48x128xf32>
    %c1_48 = arith.constant 1 : index
    %c0_49 = arith.constant 0 : index
    %c0_50 = arith.constant 0 : index
    %91 = vector.load %arg5[%c1_48, %c0_49, %c0_50] : memref<3x1x128xf32, #tpu.memory_space<vmem>>, vector<1x1x128xf32>
    %92 = vector.shape_cast %91 : vector<1x1x128xf32> to vector<1x128xf32>
    %93 = vector.broadcast %92 : vector<1x128xf32> to vector<48x128xf32>
    %94 = arith.addf %90, %93 : vector<48x128xf32>
    %cst_51 = arith.constant 0.000000e+00 : f32
    %95 = vector.broadcast %cst_51 : f32 to vector<48x128xf32>
    %96 = arith.maximumf %94, %95 : vector<48x128xf32>
    %c2_i32 = arith.constant 2 : i32
    %97 = vector.broadcast %c2_i32 : i32 to vector<48x1xi32>
    %98 = arith.cmpi sge, %29, %97 : vector<48x1xi32>
    %c2_i32_52 = arith.constant 2 : i32
    %99 = tpu.dynamic_rotate %96 by %c2_i32_52 dim 0 : vector<48x128xf32>, i32 -> vector<48x128xf32>
    %cst_53 = arith.constant 0.000000e+00 : f32
    %100 = vector.shape_cast %98 : vector<48x1xi1> to vector<48x1xi1>
    %101 = vector.broadcast %100 : vector<48x1xi1> to vector<48x128xi1>
    %102 = vector.broadcast %cst_53 : f32 to vector<48x128xf32>
    %103 = arith.select %101, %99, %102 : vector<48x128xi1>, vector<48x128xf32>
    %c14_i32 = arith.constant 14 : i32
    %104 = vector.broadcast %c14_i32 : i32 to vector<48x1xi32>
    %105 = arith.cmpi slt, %29, %104 : vector<48x1xi32>
    %c46_i32 = arith.constant 46 : i32
    %106 = tpu.dynamic_rotate %96 by %c46_i32 dim 0 : vector<48x128xf32>, i32 -> vector<48x128xf32>
    %cst_54 = arith.constant 0.000000e+00 : f32
    %107 = vector.shape_cast %105 : vector<48x1xi1> to vector<48x1xi1>
    %108 = vector.broadcast %107 : vector<48x1xi1> to vector<48x128xi1>
    %109 = vector.broadcast %cst_54 : f32 to vector<48x128xf32>
    %110 = arith.select %108, %106, %109 : vector<48x128xi1>, vector<48x128xf32>
    %111 = arith.truncf %96 : vector<48x128xf32> to vector<48x128xbf16>
    %c4 = arith.constant 4 : index
    %c0_55 = arith.constant 0 : index
    %c0_56 = arith.constant 0 : index
    %112 = vector.load %arg6[%c4, %c0_55, %c0_56] : memref<9x128x128xbf16, #tpu.memory_space<vmem>>, vector<1x128x128xbf16>
    %113 = vector.shape_cast %112 : vector<1x128x128xbf16> to vector<128x128xbf16>
    %cst_57 = arith.constant dense<0.000000e+00> : vector<48x128xf32>
    %114 = tpu.matmul %111, %113, %cst_57 {dimension_numbers = #tpu.dot_dimension_numbers<[1], [0], [0], [1], [0, 0, 1, 1], [], []>} : vector<48x128xbf16>, vector<128x128xbf16>, vector<48x128xf32> -> vector<48x128xf32>
    %115 = arith.truncf %103 : vector<48x128xf32> to vector<48x128xbf16>
    %c3 = arith.constant 3 : index
    %c0_58 = arith.constant 0 : index
    %c0_59 = arith.constant 0 : index
    %116 = vector.load %arg6[%c3, %c0_58, %c0_59] : memref<9x128x128xbf16, #tpu.memory_space<vmem>>, vector<1x128x128xbf16>
    %117 = vector.shape_cast %116 : vector<1x128x128xbf16> to vector<128x128xbf16>
    %cst_60 = arith.constant dense<0.000000e+00> : vector<48x128xf32>
    %118 = tpu.matmul %115, %117, %cst_60 {dimension_numbers = #tpu.dot_dimension_numbers<[1], [0], [0], [1], [0, 0, 1, 1], [], []>} : vector<48x128xbf16>, vector<128x128xbf16>, vector<48x128xf32> -> vector<48x128xf32>
    %119 = arith.addf %114, %118 : vector<48x128xf32>
    %120 = arith.truncf %110 : vector<48x128xf32> to vector<48x128xbf16>
    %c5 = arith.constant 5 : index
    %c0_61 = arith.constant 0 : index
    %c0_62 = arith.constant 0 : index
    %121 = vector.load %arg6[%c5, %c0_61, %c0_62] : memref<9x128x128xbf16, #tpu.memory_space<vmem>>, vector<1x128x128xbf16>
    %122 = vector.shape_cast %121 : vector<1x128x128xbf16> to vector<128x128xbf16>
    %cst_63 = arith.constant dense<0.000000e+00> : vector<48x128xf32>
    %123 = tpu.matmul %120, %122, %cst_63 {dimension_numbers = #tpu.dot_dimension_numbers<[1], [0], [0], [1], [0, 0, 1, 1], [], []>} : vector<48x128xbf16>, vector<128x128xbf16>, vector<48x128xf32> -> vector<48x128xf32>
    %124 = arith.addf %119, %123 : vector<48x128xf32>
    %c1_64 = arith.constant 1 : index
    %c0_65 = arith.constant 0 : index
    %c0_66 = arith.constant 0 : index
    %125 = vector.load %arg7[%c1_64, %c0_65, %c0_66] : memref<3x1x128xf32, #tpu.memory_space<vmem>>, vector<1x1x128xf32>
    %126 = vector.shape_cast %125 : vector<1x1x128xf32> to vector<1x128xf32>
    %127 = vector.broadcast %126 : vector<1x128xf32> to vector<48x128xf32>
    %128 = arith.addf %124, %127 : vector<48x128xf32>
    %cst_67 = arith.constant 0.000000e+00 : f32
    %129 = vector.broadcast %cst_67 : f32 to vector<48x128xf32>
    %130 = arith.maximumf %128, %129 : vector<48x128xf32>
    %131 = arith.truncf %130 : vector<48x128xf32> to vector<48x128xbf16>
    %c1_68 = arith.constant 1 : index
    %c0_69 = arith.constant 0 : index
    %c0_70 = arith.constant 0 : index
    %132 = vector.load %arg8[%c1_68, %c0_69, %c0_70] : memref<3x128x128xbf16, #tpu.memory_space<vmem>>, vector<1x128x128xbf16>
    %133 = vector.shape_cast %132 : vector<1x128x128xbf16> to vector<128x128xbf16>
    %cst_71 = arith.constant dense<0.000000e+00> : vector<48x128xf32>
    %134 = tpu.matmul %131, %133, %cst_71 {dimension_numbers = #tpu.dot_dimension_numbers<[1], [0], [0], [1], [0, 0, 1, 1], [], []>} : vector<48x128xbf16>, vector<128x128xbf16>, vector<48x128xf32> -> vector<48x128xf32>
    %135 = arith.addf %84, %134 : vector<48x128xf32>
    %c1_72 = arith.constant 1 : index
    %c0_73 = arith.constant 0 : index
    %c0_74 = arith.constant 0 : index
    %136 = vector.load %arg9[%c1_72, %c0_73, %c0_74] : memref<3x1x128xf32, #tpu.memory_space<vmem>>, vector<1x1x128xf32>
    %137 = vector.shape_cast %136 : vector<1x1x128xf32> to vector<1x128xf32>
    %138 = vector.broadcast %137 : vector<1x128xf32> to vector<48x128xf32>
    %139 = arith.addf %135, %138 : vector<48x128xf32>
    %cst_75 = arith.constant 0.000000e+00 : f32
    %140 = vector.broadcast %cst_75 : f32 to vector<48x128xf32>
    %141 = arith.maximumf %139, %140 : vector<48x128xf32>
    %142 = arith.truncf %141 : vector<48x128xf32> to vector<48x128xbf16>
    %c2_76 = arith.constant 2 : index
    %c0_77 = arith.constant 0 : index
    %c0_78 = arith.constant 0 : index
    %143 = vector.load %arg4[%c2_76, %c0_77, %c0_78] : memref<3x128x128xbf16, #tpu.memory_space<vmem>>, vector<1x128x128xbf16>
    %144 = vector.shape_cast %143 : vector<1x128x128xbf16> to vector<128x128xbf16>
    %cst_79 = arith.constant dense<0.000000e+00> : vector<48x128xf32>
    %145 = tpu.matmul %142, %144, %cst_79 {dimension_numbers = #tpu.dot_dimension_numbers<[1], [0], [0], [1], [0, 0, 1, 1], [], []>} : vector<48x128xbf16>, vector<128x128xbf16>, vector<48x128xf32> -> vector<48x128xf32>
    %c2_80 = arith.constant 2 : index
    %c0_81 = arith.constant 0 : index
    %c0_82 = arith.constant 0 : index
    %146 = vector.load %arg5[%c2_80, %c0_81, %c0_82] : memref<3x1x128xf32, #tpu.memory_space<vmem>>, vector<1x1x128xf32>
    %147 = vector.shape_cast %146 : vector<1x1x128xf32> to vector<1x128xf32>
    %148 = vector.broadcast %147 : vector<1x128xf32> to vector<48x128xf32>
    %149 = arith.addf %145, %148 : vector<48x128xf32>
    %cst_83 = arith.constant 0.000000e+00 : f32
    %150 = vector.broadcast %cst_83 : f32 to vector<48x128xf32>
    %151 = arith.maximumf %149, %150 : vector<48x128xf32>
    %c4_i32 = arith.constant 4 : i32
    %152 = vector.broadcast %c4_i32 : i32 to vector<48x1xi32>
    %153 = arith.cmpi sge, %29, %152 : vector<48x1xi32>
    %c4_i32_84 = arith.constant 4 : i32
    %154 = tpu.dynamic_rotate %151 by %c4_i32_84 dim 0 : vector<48x128xf32>, i32 -> vector<48x128xf32>
    %cst_85 = arith.constant 0.000000e+00 : f32
    %155 = vector.shape_cast %153 : vector<48x1xi1> to vector<48x1xi1>
    %156 = vector.broadcast %155 : vector<48x1xi1> to vector<48x128xi1>
    %157 = vector.broadcast %cst_85 : f32 to vector<48x128xf32>
    %158 = arith.select %156, %154, %157 : vector<48x128xi1>, vector<48x128xf32>
    %c12_i32 = arith.constant 12 : i32
    %159 = vector.broadcast %c12_i32 : i32 to vector<48x1xi32>
    %160 = arith.cmpi slt, %29, %159 : vector<48x1xi32>
    %c44_i32 = arith.constant 44 : i32
    %161 = tpu.dynamic_rotate %151 by %c44_i32 dim 0 : vector<48x128xf32>, i32 -> vector<48x128xf32>
    %cst_86 = arith.constant 0.000000e+00 : f32
    %162 = vector.shape_cast %160 : vector<48x1xi1> to vector<48x1xi1>
    %163 = vector.broadcast %162 : vector<48x1xi1> to vector<48x128xi1>
    %164 = vector.broadcast %cst_86 : f32 to vector<48x128xf32>
    %165 = arith.select %163, %161, %164 : vector<48x128xi1>, vector<48x128xf32>
    %166 = arith.truncf %151 : vector<48x128xf32> to vector<48x128xbf16>
    %c7 = arith.constant 7 : index
    %c0_87 = arith.constant 0 : index
    %c0_88 = arith.constant 0 : index
    %167 = vector.load %arg6[%c7, %c0_87, %c0_88] : memref<9x128x128xbf16, #tpu.memory_space<vmem>>, vector<1x128x128xbf16>
    %168 = vector.shape_cast %167 : vector<1x128x128xbf16> to vector<128x128xbf16>
    %cst_89 = arith.constant dense<0.000000e+00> : vector<48x128xf32>
    %169 = tpu.matmul %166, %168, %cst_89 {dimension_numbers = #tpu.dot_dimension_numbers<[1], [0], [0], [1], [0, 0, 1, 1], [], []>} : vector<48x128xbf16>, vector<128x128xbf16>, vector<48x128xf32> -> vector<48x128xf32>
    %170 = arith.truncf %158 : vector<48x128xf32> to vector<48x128xbf16>
    %c6 = arith.constant 6 : index
    %c0_90 = arith.constant 0 : index
    %c0_91 = arith.constant 0 : index
    %171 = vector.load %arg6[%c6, %c0_90, %c0_91] : memref<9x128x128xbf16, #tpu.memory_space<vmem>>, vector<1x128x128xbf16>
    %172 = vector.shape_cast %171 : vector<1x128x128xbf16> to vector<128x128xbf16>
    %cst_92 = arith.constant dense<0.000000e+00> : vector<48x128xf32>
    %173 = tpu.matmul %170, %172, %cst_92 {dimension_numbers = #tpu.dot_dimension_numbers<[1], [0], [0], [1], [0, 0, 1, 1], [], []>} : vector<48x128xbf16>, vector<128x128xbf16>, vector<48x128xf32> -> vector<48x128xf32>
    %174 = arith.addf %169, %173 : vector<48x128xf32>
    %175 = arith.truncf %165 : vector<48x128xf32> to vector<48x128xbf16>
    %c8 = arith.constant 8 : index
    %c0_93 = arith.constant 0 : index
    %c0_94 = arith.constant 0 : index
    %176 = vector.load %arg6[%c8, %c0_93, %c0_94] : memref<9x128x128xbf16, #tpu.memory_space<vmem>>, vector<1x128x128xbf16>
    %177 = vector.shape_cast %176 : vector<1x128x128xbf16> to vector<128x128xbf16>
    %cst_95 = arith.constant dense<0.000000e+00> : vector<48x128xf32>
    %178 = tpu.matmul %175, %177, %cst_95 {dimension_numbers = #tpu.dot_dimension_numbers<[1], [0], [0], [1], [0, 0, 1, 1], [], []>} : vector<48x128xbf16>, vector<128x128xbf16>, vector<48x128xf32> -> vector<48x128xf32>
    %179 = arith.addf %174, %178 : vector<48x128xf32>
    %c2_96 = arith.constant 2 : index
    %c0_97 = arith.constant 0 : index
    %c0_98 = arith.constant 0 : index
    %180 = vector.load %arg7[%c2_96, %c0_97, %c0_98] : memref<3x1x128xf32, #tpu.memory_space<vmem>>, vector<1x1x128xf32>
    %181 = vector.shape_cast %180 : vector<1x1x128xf32> to vector<1x128xf32>
    %182 = vector.broadcast %181 : vector<1x128xf32> to vector<48x128xf32>
    %183 = arith.addf %179, %182 : vector<48x128xf32>
    %cst_99 = arith.constant 0.000000e+00 : f32
    %184 = vector.broadcast %cst_99 : f32 to vector<48x128xf32>
    %185 = arith.maximumf %183, %184 : vector<48x128xf32>
    %186 = arith.truncf %185 : vector<48x128xf32> to vector<48x128xbf16>
    %c2_100 = arith.constant 2 : index
    %c0_101 = arith.constant 0 : index
    %c0_102 = arith.constant 0 : index
    %187 = vector.load %arg8[%c2_100, %c0_101, %c0_102] : memref<3x128x128xbf16, #tpu.memory_space<vmem>>, vector<1x128x128xbf16>
    %188 = vector.shape_cast %187 : vector<1x128x128xbf16> to vector<128x128xbf16>
    %cst_103 = arith.constant dense<0.000000e+00> : vector<48x128xf32>
    %189 = tpu.matmul %186, %188, %cst_103 {dimension_numbers = #tpu.dot_dimension_numbers<[1], [0], [0], [1], [0, 0, 1, 1], [], []>} : vector<48x128xbf16>, vector<128x128xbf16>, vector<48x128xf32> -> vector<48x128xf32>
    %190 = arith.addf %139, %189 : vector<48x128xf32>
    %c2_104 = arith.constant 2 : index
    %c0_105 = arith.constant 0 : index
    %c0_106 = arith.constant 0 : index
    %191 = vector.load %arg9[%c2_104, %c0_105, %c0_106] : memref<3x1x128xf32, #tpu.memory_space<vmem>>, vector<1x1x128xf32>
    %192 = vector.shape_cast %191 : vector<1x1x128xf32> to vector<1x128xf32>
    %193 = vector.broadcast %192 : vector<1x128xf32> to vector<48x128xf32>
    %194 = arith.addf %190, %193 : vector<48x128xf32>
    %195 = vector.extract_strided_slice %194 {offsets = [8, 0], sizes = [32, 128], strides = [1, 1]} : vector<48x128xf32> to vector<32x128xf32>
    %c0_107 = arith.constant 0 : index
    %c0_108 = arith.constant 0 : index
    %c0_109 = arith.constant 0 : index
    %196 = vector.load %arg10[%c0_107, %c0_108, %c0_109] : memref<1x32x128xf32, #tpu.memory_space<vmem>>, vector<1x32x128xf32>
    %197 = vector.shape_cast %196 : vector<1x32x128xf32> to vector<32x128xf32>
    %198 = vector.shape_cast %195 : vector<32x128xf32> to vector<1x32x128xf32>
    tpu.vector_store %arg10[%c0_107, %c0_108, %c0_109], %198 {strides = array<i32>} : memref<1x32x128xf32, #tpu.memory_space<vmem>>, vector<1x32x128xf32>,
    return
  }
  func.func @transform_0(%arg0: i32) -> (i32, i32, i32) {
    %c0_i32 = arith.constant 0 : i32
    %c0_i32_0 = arith.constant 0 : i32
    %c0_i32_1 = arith.constant 0 : i32
    return %arg0, %c0_i32, %c0_i32_0 : i32, i32, i32
  }
  func.func @transform_1(%arg0: i32) -> (i32, i32) {
    %c0_i32 = arith.constant 0 : i32
    %c0_i32_0 = arith.constant 0 : i32
    %c0_i32_1 = arith.constant 0 : i32
    return %c0_i32, %c0_i32_0 : i32, i32
  }
  func.func @transform_2(%arg0: i32) -> (i32, i32) {
    %c0_i32 = arith.constant 0 : i32
    %c0_i32_0 = arith.constant 0 : i32
    %c0_i32_1 = arith.constant 0 : i32
    return %c0_i32, %c0_i32_0 : i32, i32
  }
  func.func @transform_3(%arg0: i32) -> (i32, i32, i32) {
    %c0_i32 = arith.constant 0 : i32
    %c0_i32_0 = arith.constant 0 : i32
    %c0_i32_1 = arith.constant 0 : i32
    %c0_i32_2 = arith.constant 0 : i32
    return %c0_i32, %c0_i32_0, %c0_i32_1 : i32, i32, i32
  }
  func.func @transform_4(%arg0: i32) -> (i32, i32, i32) {
    %c0_i32 = arith.constant 0 : i32
    %c0_i32_0 = arith.constant 0 : i32
    %c0_i32_1 = arith.constant 0 : i32
    %c0_i32_2 = arith.constant 0 : i32
    return %c0_i32, %c0_i32_0, %c0_i32_1 : i32, i32, i32
  }
  func.func @transform_5(%arg0: i32) -> (i32, i32, i32) {
    %c0_i32 = arith.constant 0 : i32
    %c0_i32_0 = arith.constant 0 : i32
    %c0_i32_1 = arith.constant 0 : i32
    %c0_i32_2 = arith.constant 0 : i32
    return %c0_i32, %c0_i32_0, %c0_i32_1 : i32, i32, i32
  }
  func.func @transform_6(%arg0: i32) -> (i32, i32, i32) {
    %c0_i32 = arith.constant 0 : i32
    %c0_i32_0 = arith.constant 0 : i32
    %c0_i32_1 = arith.constant 0 : i32
    %c0_i32_2 = arith.constant 0 : i32
    return %c0_i32, %c0_i32_0, %c0_i32_1 : i32, i32, i32
  }
  func.func @transform_7(%arg0: i32) -> (i32, i32, i32) {
    %c0_i32 = arith.constant 0 : i32
    %c0_i32_0 = arith.constant 0 : i32
    %c0_i32_1 = arith.constant 0 : i32
    %c0_i32_2 = arith.constant 0 : i32
    return %c0_i32, %c0_i32_0, %c0_i32_1 : i32, i32, i32
  }
  func.func @transform_8(%arg0: i32) -> (i32, i32, i32) {
    %c0_i32 = arith.constant 0 : i32
    %c0_i32_0 = arith.constant 0 : i32
    %c0_i32_1 = arith.constant 0 : i32
    %c0_i32_2 = arith.constant 0 : i32
    return %c0_i32, %c0_i32_0, %c0_i32_1 : i32, i32, i32
  }
  func.func @transform_9(%arg0: i32) -> (i32, i32, i32) {
    %c0_i32 = arith.constant 0 : i32
    %c0_i32_0 = arith.constant 0 : i32
    %c0_i32_1 = arith.constant 0 : i32
    return %arg0, %c0_i32, %c0_i32_0 : i32, i32, i32
  }
}

module attributes {stable_mosaic.version = 11 : i64} {
  func.func @kernel(%arg0: i32, %arg1: memref<1x48x8xf32, #tpu.memory_space<vmem>>, %arg2: memref<8x128xbf16, #tpu.memory_space<vmem>>, %arg3: memref<1x128xf32, #tpu.memory_space<vmem>>, %arg4: memref<3x128x128xbf16, #tpu.memory_space<vmem>>, %arg5: memref<3x1x128xf32, #tpu.memory_space<vmem>>, %arg6: memref<9x128x128xbf16, #tpu.memory_space<vmem>>, %arg7: memref<3x1x128xf32, #tpu.memory_space<vmem>>, %arg8: memref<3x128x128xbf16, #tpu.memory_space<vmem>>, %arg9: memref<3x1x128xf32, #tpu.memory_space<vmem>>, %arg10: memref<1x32x128xf32, #tpu.memory_space<vmem>>) attributes {dimension_semantics = [#tpu.dimension_semantics<parallel>], iteration_bounds = array<i64: 1>, scalar_prefetch = 0 : i64, scratch_operands = 0 : i64, tpu.core_type = #tpu.core_type<tc>, window_params = [{transform_indices = @transform_0, window_bounds = array<i64: 1, 48, 8>}, {pipeline_mode = #tpu.pipeline_mode<synchronous>, transform_indices = @transform_1, window_bounds = array<i64: 8, 128>}, {pipeline_mode = #tpu.pipeline_mode<synchronous>, transform_indices = @transform_2, window_bounds = array<i64: 1, 128>}, {pipeline_mode = #tpu.pipeline_mode<synchronous>, transform_indices = @transform_3, window_bounds = array<i64: 3, 128, 128>}, {pipeline_mode = #tpu.pipeline_mode<synchronous>, transform_indices = @transform_4, window_bounds = array<i64: 3, 1, 128>}, {pipeline_mode = #tpu.pipeline_mode<synchronous>, transform_indices = @transform_5, window_bounds = array<i64: 9, 128, 128>}, {pipeline_mode = #tpu.pipeline_mode<synchronous>, transform_indices = @transform_6, window_bounds = array<i64: 3, 1, 128>}, {pipeline_mode = #tpu.pipeline_mode<synchronous>, transform_indices = @transform_7, window_bounds = array<i64: 3, 128, 128>}, {pipeline_mode = #tpu.pipeline_mode<synchronous>, transform_indices = @transform_8, window_bounds = array<i64: 3, 1, 128>}, {transform_indices = @transform_9, window_bounds = array<i64: 1, 32, 128>}]} {
    %c0 = arith.constant 0 : index
    %c0_0 = arith.constant 0 : index
    %c0_1 = arith.constant 0 : index
    %0 = vector.load %arg1[%c0, %c0_0, %c0_1] : memref<1x48x8xf32, #tpu.memory_space<vmem>>, vector<1x48x8xf32>
    %1 = vector.shape_cast %0 : vector<1x48x8xf32> to vector<48x8xf32>
    %2 = arith.truncf %1 : vector<48x8xf32> to vector<48x8xbf16>
    %c0_2 = arith.constant 0 : index
    %c0_3 = arith.constant 0 : index
    %3 = vector.load %arg2[%c0_2, %c0_3] : memref<8x128xbf16, #tpu.memory_space<vmem>>, vector<8x128xbf16>
    %cst = arith.constant dense<0.000000e+00> : vector<48x128xf32>
    %4 = tpu.matmul %2, %3, %cst {dimension_numbers = #tpu.dot_dimension_numbers<[1], [0], [0], [1], [0, 0, 1, 1], [], []>} : vector<48x8xbf16>, vector<8x128xbf16>, vector<48x128xf32> -> vector<48x128xf32>
    %c0_4 = arith.constant 0 : index
    %c0_5 = arith.constant 0 : index
    %5 = vector.load %arg3[%c0_4, %c0_5] : memref<1x128xf32, #tpu.memory_space<vmem>>, vector<1x128xf32>
    %6 = vector.broadcast %5 : vector<1x128xf32> to vector<48x128xf32>
    %7 = arith.addf %4, %6 : vector<48x128xf32>
    %8 = tpu.iota {dimensions = array<i32: 0>} : vector<48x1xi32>
    %c32_i32 = arith.constant 32 : i32
    %9 = arith.muli %arg0, %c32_i32 : i32
    %10 = vector.broadcast %9 : i32 to vector<48x1xi32>
    %11 = arith.addi %10, %8 : vector<48x1xi32>
    %c8_i32 = arith.constant 8 : i32
    %12 = vector.broadcast %c8_i32 : i32 to vector<48x1xi32>
    %13 = arith.addi %11, %12 : vector<48x1xi32>
    %c16_i32 = arith.constant 16 : i32
    %c0_i32 = arith.constant 0 : i32
    %14 = arith.cmpi eq, %c16_i32, %c0_i32 : i32
    %c1_i32 = arith.constant 1 : i32
    %15 = arith.select %14, %c1_i32, %c16_i32 : i32
    %16 = vector.broadcast %15 : i32 to vector<48x1xi32>
    %17 = arith.remsi %13, %16 : vector<48x1xi32>
    %c0_i32_6 = arith.constant 0 : i32
    %18 = vector.broadcast %c0_i32_6 : i32 to vector<48x1xi32>
    %19 = arith.cmpi ne, %17, %18 : vector<48x1xi32>
    %c0_i32_7 = arith.constant 0 : i32
    %20 = vector.broadcast %c0_i32_7 : i32 to vector<48x1xi32>
    %21 = arith.cmpi slt, %17, %20 : vector<48x1xi32>
    %c0_i32_8 = arith.constant 0 : i32
    %22 = arith.cmpi slt, %15, %c0_i32_8 : i32
    %23 = vector.broadcast %22 : i1 to vector<48x1xi1>
    %24 = vector.broadcast %23 : vector<48x1xi1> to vector<48x1xi1>
    %25 = arith.xori %21, %24 : vector<48x1xi1>
    %26 = arith.andi %25, %19 : vector<48x1xi1>
    %27 = vector.broadcast %15 : i32 to vector<48x1xi32>
    %28 = arith.addi %17, %27 : vector<48x1xi32>
    %29 = arith.select %26, %28, %17 : vector<48x1xi1>, vector<48x1xi32>
    %cst_9 = arith.constant 0.000000e+00 : f32
    %30 = vector.broadcast %cst_9 : f32 to vector<48x128xf32>
    %31 = arith.maximumf %7, %30 : vector<48x128xf32>
    %32 = arith.truncf %31 : vector<48x128xf32> to vector<48x128xbf16>
    %c0_10 = arith.constant 0 : index
    %c0_11 = arith.constant 0 : index
    %c0_12 = arith.constant 0 : index
    %33 = vector.load %arg4[%c0_10, %c0_11, %c0_12] : memref<3x128x128xbf16, #tpu.memory_space<vmem>>, vector<1x128x128xbf16>
    %34 = vector.shape_cast %33 : vector<1x128x128xbf16> to vector<128x128xbf16>
    %cst_13 = arith.constant dense<0.000000e+00> : vector<48x128xf32>
    %35 = tpu.matmul %32, %34, %cst_13 {dimension_numbers = #tpu.dot_dimension_numbers<[1], [0], [0], [1], [0, 0, 1, 1], [], []>} : vector<48x128xbf16>, vector<128x128xbf16>, vector<48x128xf32> -> vector<48x128xf32>
    %c0_14 = arith.constant 0 : index
    %c0_15 = arith.constant 0 : index
    %c0_16 = arith.constant 0 : index
    %36 = vector.load %arg5[%c0_14, %c0_15, %c0_16] : memref<3x1x128xf32, #tpu.memory_space<vmem>>, vector<1x1x128xf32>
    %37 = vector.shape_cast %36 : vector<1x1x128xf32> to vector<1x128xf32>
    %38 = vector.broadcast %37 : vector<1x128xf32> to vector<48x128xf32>
    %39 = arith.addf %35, %38 : vector<48x128xf32>
    %cst_17 = arith.constant 0.000000e+00 : f32
    %40 = vector.broadcast %cst_17 : f32 to vector<48x128xf32>
    %41 = arith.maximumf %39, %40 : vector<48x128xf32>
    %c1_i32_18 = arith.constant 1 : i32
    %42 = vector.broadcast %c1_i32_18 : i32 to vector<48x1xi32>
    %43 = arith.cmpi sge, %29, %42 : vector<48x1xi32>
    %c1_i32_19 = arith.constant 1 : i32
    %44 = tpu.dynamic_rotate %41 by %c1_i32_19 dim 0 : vector<48x128xf32>, i32 -> vector<48x128xf32>
    %cst_20 = arith.constant 0.000000e+00 : f32
    %45 = vector.shape_cast %43 : vector<48x1xi1> to vector<48x1xi1>
    %46 = vector.broadcast %45 : vector<48x1xi1> to vector<48x128xi1>
    %47 = vector.broadcast %cst_20 : f32 to vector<48x128xf32>
    %48 = arith.select %46, %44, %47 : vector<48x128xi1>, vector<48x128xf32>
    %c15_i32 = arith.constant 15 : i32
    %49 = vector.broadcast %c15_i32 : i32 to vector<48x1xi32>
    %50 = arith.cmpi slt, %29, %49 : vector<48x1xi32>
    %c47_i32 = arith.constant 47 : i32
    %51 = tpu.dynamic_rotate %41 by %c47_i32 dim 0 : vector<48x128xf32>, i32 -> vector<48x128xf32>
    %cst_21 = arith.constant 0.000000e+00 : f32
    %52 = vector.shape_cast %50 : vector<48x1xi1> to vector<48x1xi1>
    %53 = vector.broadcast %52 : vector<48x1xi1> to vector<48x128xi1>
    %54 = vector.broadcast %cst_21 : f32 to vector<48x128xf32>
    %55 = arith.select %53, %51, %54 : vector<48x128xi1>, vector<48x128xf32>
    %56 = arith.truncf %41 : vector<48x128xf32> to vector<48x128xbf16>
    %c1 = arith.constant 1 : index
    %c0_22 = arith.constant 0 : index
    %c0_23 = arith.constant 0 : index
    %57 = vector.load %arg6[%c1, %c0_22, %c0_23] : memref<9x128x128xbf16, #tpu.memory_space<vmem>>, vector<1x128x128xbf16>
    %58 = vector.shape_cast %57 : vector<1x128x128xbf16> to vector<128x128xbf16>
    %cst_24 = arith.constant dense<0.000000e+00> : vector<48x128xf32>
    %59 = tpu.matmul %56, %58, %cst_24 {dimension_numbers = #tpu.dot_dimension_numbers<[1], [0], [0], [1], [0, 0, 1, 1], [], []>} : vector<48x128xbf16>, vector<128x128xbf16>, vector<48x128xf32> -> vector<48x128xf32>
    %60 = arith.truncf %48 : vector<48x128xf32> to vector<48x128xbf16>
    %c0_25 = arith.constant 0 : index
    %c0_26 = arith.constant 0 : index
    %c0_27 = arith.constant 0 : index
    %61 = vector.load %arg6[%c0_25, %c0_26, %c0_27] : memref<9x128x128xbf16, #tpu.memory_space<vmem>>, vector<1x128x128xbf16>
    %62 = vector.shape_cast %61 : vector<1x128x128xbf16> to vector<128x128xbf16>
    %cst_28 = arith.constant dense<0.000000e+00> : vector<48x128xf32>
    %63 = tpu.matmul %60, %62, %cst_28 {dimension_numbers = #tpu.dot_dimension_numbers<[1], [0], [0], [1], [0, 0, 1, 1], [], []>} : vector<48x128xbf16>, vector<128x128xbf16>, vector<48x128xf32> -> vector<48x128xf32>
    %64 = arith.addf %59, %63 : vector<48x128xf32>
    %65 = arith.truncf %55 : vector<48x128xf32> to vector<48x128xbf16>
    %c2 = arith.constant 2 : index
    %c0_29 = arith.constant 0 : index
    %c0_30 = arith.constant 0 : index
    %66 = vector.load %arg6[%c2, %c0_29, %c0_30] : memref<9x128x128xbf16, #tpu.memory_space<vmem>>, vector<1x128x128xbf16>
    %67 = vector.shape_cast %66 : vector<1x128x128xbf16> to vector<128x128xbf16>
    %cst_31 = arith.constant dense<0.000000e+00> : vector<48x128xf32>
    %68 = tpu.matmul %65, %67, %cst_31 {dimension_numbers = #tpu.dot_dimension_numbers<[1], [0], [0], [1], [0, 0, 1, 1], [], []>} : vector<48x128xbf16>, vector<128x128xbf16>, vector<48x128xf32> -> vector<48x128xf32>
    %69 = arith.addf %64, %68 : vector<48x128xf32>
    %c0_32 = arith.constant 0 : index
    %c0_33 = arith.constant 0 : index
    %c0_34 = arith.constant 0 : index
    %70 = vector.load %arg7[%c0_32, %c0_33, %c0_34] : memref<3x1x128xf32, #tpu.memory_space<vmem>>, vector<1x1x128xf32>
    %71 = vector.shape_cast %70 : vector<1x1x128xf32> to vector<1x128xf32>
    %72 = vector.broadcast %71 : vector<1x128xf32> to vector<48x128xf32>
    %73 = arith.addf %69, %72 : vector<48x128xf32>
    %cst_35 = arith.constant 0.000000e+00 : f32
    %74 = vector.broadcast %cst_35 : f32 to vector<48x128xf32>
    %75 = arith.maximumf %73, %74 : vector<48x128xf32>
    %76 = arith.truncf %75 : vector<48x128xf32> to vector<48x128xbf16>
    %c0_36 = arith.constant 0 : index
    %c0_37 = arith.constant 0 : index
    %c0_38 = arith.constant 0 : index
    %77 = vector.load %arg8[%c0_36, %c0_37, %c0_38] : memref<3x128x128xbf16, #tpu.memory_space<vmem>>, vector<1x128x128xbf16>
    %78 = vector.shape_cast %77 : vector<1x128x128xbf16> to vector<128x128xbf16>
    %cst_39 = arith.constant dense<0.000000e+00> : vector<48x128xf32>
    %79 = tpu.matmul %76, %78, %cst_39 {dimension_numbers = #tpu.dot_dimension_numbers<[1], [0], [0], [1], [0, 0, 1, 1], [], []>} : vector<48x128xbf16>, vector<128x128xbf16>, vector<48x128xf32> -> vector<48x128xf32>
    %80 = arith.addf %7, %79 : vector<48x128xf32>
    %c0_40 = arith.constant 0 : index
    %c0_41 = arith.constant 0 : index
    %c0_42 = arith.constant 0 : index
    %81 = vector.load %arg9[%c0_40, %c0_41, %c0_42] : memref<3x1x128xf32, #tpu.memory_space<vmem>>, vector<1x1x128xf32>
    %82 = vector.shape_cast %81 : vector<1x1x128xf32> to vector<1x128xf32>
    %83 = vector.broadcast %82 : vector<1x128xf32> to vector<48x128xf32>
    %84 = arith.addf %80, %83 : vector<48x128xf32>
    %cst_43 = arith.constant 0.000000e+00 : f32
    %85 = vector.broadcast %cst_43 : f32 to vector<48x128xf32>
    %86 = arith.maximumf %84, %85 : vector<48x128xf32>
    %87 = arith.truncf %86 : vector<48x128xf32> to vector<48x128xbf16>
    %c1_44 = arith.constant 1 : index
    %c0_45 = arith.constant 0 : index
    %c0_46 = arith.constant 0 : index
    %88 = vector.load %arg4[%c1_44, %c0_45, %c0_46] : memref<3x128x128xbf16, #tpu.memory_space<vmem>>, vector<1x128x128xbf16>
    %89 = vector.shape_cast %88 : vector<1x128x128xbf16> to vector<128x128xbf16>
    %cst_47 = arith.constant dense<0.000000e+00> : vector<48x128xf32>
    %90 = tpu.matmul %87, %89, %cst_47 {dimension_numbers = #tpu.dot_dimension_numbers<[1], [0], [0], [1], [0, 0, 1, 1], [], []>} : vector<48x128xbf16>, vector<128x128xbf16>, vector<48x128xf32> -> vector<48x128xf32>
    %c1_48 = arith.constant 1 : index
    %c0_49 = arith.constant 0 : index
    %c0_50 = arith.constant 0 : index
    %91 = vector.load %arg5[%c1_48, %c0_49, %c0_50] : memref<3x1x128xf32, #tpu.memory_space<vmem>>, vector<1x1x128xf32>
    %92 = vector.shape_cast %91 : vector<1x1x128xf32> to vector<1x128xf32>
    %93 = vector.broadcast %92 : vector<1x128xf32> to vector<48x128xf32>
    %94 = arith.addf %90, %93 : vector<48x128xf32>
    %cst_51 = arith.constant 0.000000e+00 : f32
    %95 = vector.broadcast %cst_51 : f32 to vector<48x128xf32>
    %96 = arith.maximumf %94, %95 : vector<48x128xf32>
    %c2_i32 = arith.constant 2 : i32
    %97 = vector.broadcast %c2_i32 : i32 to vector<48x1xi32>
    %98 = arith.cmpi sge, %29, %97 : vector<48x1xi32>
    %c2_i32_52 = arith.constant 2 : i32
    %99 = tpu.dynamic_rotate %96 by %c2_i32_52 dim 0 : vector<48x128xf32>, i32 -> vector<48x128xf32>
    %cst_53 = arith.constant 0.000000e+00 : f32
    %100 = vector.shape_cast %98 : vector<48x1xi1> to vector<48x1xi1>
    %101 = vector.broadcast %100 : vector<48x1xi1> to vector<48x128xi1>
    %102 = vector.broadcast %cst_53 : f32 to vector<48x128xf32>
    %103 = arith.select %101, %99, %102 : vector<48x128xi1>, vector<48x128xf32>
    %c14_i32 = arith.constant 14 : i32
    %104 = vector.broadcast %c14_i32 : i32 to vector<48x1xi32>
    %105 = arith.cmpi slt, %29, %104 : vector<48x1xi32>
    %c46_i32 = arith.constant 46 : i32
    %106 = tpu.dynamic_rotate %96 by %c46_i32 dim 0 : vector<48x128xf32>, i32 -> vector<48x128xf32>
    %cst_54 = arith.constant 0.000000e+00 : f32
    %107 = vector.shape_cast %105 : vector<48x1xi1> to vector<48x1xi1>
    %108 = vector.broadcast %107 : vector<48x1xi1> to vector<48x128xi1>
    %109 = vector.broadcast %cst_54 : f32 to vector<48x128xf32>
    %110 = arith.select %108, %106, %109 : vector<48x128xi1>, vector<48x128xf32>
    %111 = arith.truncf %96 : vector<48x128xf32> to vector<48x128xbf16>
    %c4 = arith.constant 4 : index
    %c0_55 = arith.constant 0 : index
    %c0_56 = arith.constant 0 : index
    %112 = vector.load %arg6[%c4, %c0_55, %c0_56] : memref<9x128x128xbf16, #tpu.memory_space<vmem>>, vector<1x128x128xbf16>
    %113 = vector.shape_cast %112 : vector<1x128x128xbf16> to vector<128x128xbf16>
    %cst_57 = arith.constant dense<0.000000e+00> : vector<48x128xf32>
    %114 = tpu.matmul %111, %113, %cst_57 {dimension_numbers = #tpu.dot_dimension_numbers<[1], [0], [0], [1], [0, 0, 1, 1], [], []>} : vector<48x128xbf16>, vector<128x128xbf16>, vector<48x128xf32> -> vector<48x128xf32>
    %115 = arith.truncf %103 : vector<48x128xf32> to vector<48x128xbf16>
    %c3 = arith.constant 3 : index
    %c0_58 = arith.constant 0 : index
    %c0_59 = arith.constant 0 : index
    %116 = vector.load %arg6[%c3, %c0_58, %c0_59] : memref<9x128x128xbf16, #tpu.memory_space<vmem>>, vector<1x128x128xbf16>
    %117 = vector.shape_cast %116 : vector<1x128x128xbf16> to vector<128x128xbf16>
    %cst_60 = arith.constant dense<0.000000e+00> : vector<48x128xf32>
    %118 = tpu.matmul %115, %117, %cst_60 {dimension_numbers = #tpu.dot_dimension_numbers<[1], [0], [0], [1], [0, 0, 1, 1], [], []>} : vector<48x128xbf16>, vector<128x128xbf16>, vector<48x128xf32> -> vector<48x128xf32>
    %119 = arith.addf %114, %118 : vector<48x128xf32>
    %120 = arith.truncf %110 : vector<48x128xf32> to vector<48x128xbf16>
    %c5 = arith.constant 5 : index
    %c0_61 = arith.constant 0 : index
    %c0_62 = arith.constant 0 : index
    %121 = vector.load %arg6[%c5, %c0_61, %c0_62] : memref<9x128x128xbf16, #tpu.memory_space<vmem>>, vector<1x128x128xbf16>
    %122 = vector.shape_cast %121 : vector<1x128x128xbf16> to vector<128x128xbf16>
    %cst_63 = arith.constant dense<0.000000e+00> : vector<48x128xf32>
    %123 = tpu.matmul %120, %122, %cst_63 {dimension_numbers = #tpu.dot_dimension_numbers<[1], [0], [0], [1], [0, 0, 1, 1], [], []>} : vector<48x128xbf16>, vector<128x128xbf16>, vector<48x128xf32> -> vector<48x128xf32>
    %124 = arith.addf %119, %123 : vector<48x128xf32>
    %c1_64 = arith.constant 1 : index
    %c0_65 = arith.constant 0 : index
    %c0_66 = arith.constant 0 : index
    %125 = vector.load %arg7[%c1_64, %c0_65, %c0_66] : memref<3x1x128xf32, #tpu.memory_space<vmem>>, vector<1x1x128xf32>
    %126 = vector.shape_cast %125 : vector<1x1x128xf32> to vector<1x128xf32>
    %127 = vector.broadcast %126 : vector<1x128xf32> to vector<48x128xf32>
    %128 = arith.addf %124, %127 : vector<48x128xf32>
    %cst_67 = arith.constant 0.000000e+00 : f32
    %129 = vector.broadcast %cst_67 : f32 to vector<48x128xf32>
    %130 = arith.maximumf %128, %129 : vector<48x128xf32>
    %131 = arith.truncf %130 : vector<48x128xf32> to vector<48x128xbf16>
    %c1_68 = arith.constant 1 : index
    %c0_69 = arith.constant 0 : index
    %c0_70 = arith.constant 0 : index
    %132 = vector.load %arg8[%c1_68, %c0_69, %c0_70] : memref<3x128x128xbf16, #tpu.memory_space<vmem>>, vector<1x128x128xbf16>
    %133 = vector.shape_cast %132 : vector<1x128x128xbf16> to vector<128x128xbf16>
    %cst_71 = arith.constant dense<0.000000e+00> : vector<48x128xf32>
    %134 = tpu.matmul %131, %133, %cst_71 {dimension_numbers = #tpu.dot_dimension_numbers<[1], [0], [0], [1], [0, 0, 1, 1], [], []>} : vector<48x128xbf16>, vector<128x128xbf16>, vector<48x128xf32> -> vector<48x128xf32>
    %135 = arith.addf %84, %134 : vector<48x128xf32>
    %c1_72 = arith.constant 1 : index
    %c0_73 = arith.constant 0 : index
    %c0_74 = arith.constant 0 : index
    %136 = vector.load %arg9[%c1_72, %c0_73, %c0_74] : memref<3x1x128xf32, #tpu.memory_space<vmem>>, vector<1x1x128xf32>
    %137 = vector.shape_cast %136 : vector<1x1x128xf32> to vector<1x128xf32>
    %138 = vector.broadcast %137 : vector<1x128xf32> to vector<48x128xf32>
    %139 = arith.addf %135, %138 : vector<48x128xf32>
    %cst_75 = arith.constant 0.000000e+00 : f32
    %140 = vector.broadcast %cst_75 : f32 to vector<48x128xf32>
    %141 = arith.maximumf %139, %140 : vector<48x128xf32>
    %142 = arith.truncf %141 : vector<48x128xf32> to vector<48x128xbf16>
    %c2_76 = arith.constant 2 : index
    %c0_77 = arith.constant 0 : index
    %c0_78 = arith.constant 0 : index
    %143 = vector.load %arg4[%c2_76, %c0_77, %c0_78] : memref<3x128x128xbf16, #tpu.memory_space<vmem>>, vector<1x128x128xbf16>
    %144 = vector.shape_cast %143 : vector<1x128x128xbf16> to vector<128x128xbf16>
    %cst_79 = arith.constant dense<0.000000e+00> : vector<48x128xf32>
    %145 = tpu.matmul %142, %144, %cst_79 {dimension_numbers = #tpu.dot_dimension_numbers<[1], [0], [0], [1], [0, 0, 1, 1], [], []>} : vector<48x128xbf16>, vector<128x128xbf16>, vector<48x128xf32> -> vector<48x128xf32>
    %c2_80 = arith.constant 2 : index
    %c0_81 = arith.constant 0 : index
    %c0_82 = arith.constant 0 : index
    %146 = vector.load %arg5[%c2_80, %c0_81, %c0_82] : memref<3x1x128xf32, #tpu.memory_space<vmem>>, vector<1x1x128xf32>
    %147 = vector.shape_cast %146 : vector<1x1x128xf32> to vector<1x128xf32>
    %148 = vector.broadcast %147 : vector<1x128xf32> to vector<48x128xf32>
    %149 = arith.addf %145, %148 : vector<48x128xf32>
    %cst_83 = arith.constant 0.000000e+00 : f32
    %150 = vector.broadcast %cst_83 : f32 to vector<48x128xf32>
    %151 = arith.maximumf %149, %150 : vector<48x128xf32>
    %c4_i32 = arith.constant 4 : i32
    %152 = vector.broadcast %c4_i32 : i32 to vector<48x1xi32>
    %153 = arith.cmpi sge, %29, %152 : vector<48x1xi32>
    %c4_i32_84 = arith.constant 4 : i32
    %154 = tpu.dynamic_rotate %151 by %c4_i32_84 dim 0 : vector<48x128xf32>, i32 -> vector<48x128xf32>
    %cst_85 = arith.constant 0.000000e+00 : f32
    %155 = vector.shape_cast %153 : vector<48x1xi1> to vector<48x1xi1>
    %156 = vector.broadcast %155 : vector<48x1xi1> to vector<48x128xi1>
    %157 = vector.broadcast %cst_85 : f32 to vector<48x128xf32>
    %158 = arith.select %156, %154, %157 : vector<48x128xi1>, vector<48x128xf32>
    %c12_i32 = arith.constant 12 : i32
    %159 = vector.broadcast %c12_i32 : i32 to vector<48x1xi32>
    %160 = arith.cmpi slt, %29, %159 : vector<48x1xi32>
    %c44_i32 = arith.constant 44 : i32
    %161 = tpu.dynamic_rotate %151 by %c44_i32 dim 0 : vector<48x128xf32>, i32 -> vector<48x128xf32>
    %cst_86 = arith.constant 0.000000e+00 : f32
    %162 = vector.shape_cast %160 : vector<48x1xi1> to vector<48x1xi1>
    %163 = vector.broadcast %162 : vector<48x1xi1> to vector<48x128xi1>
    %164 = vector.broadcast %cst_86 : f32 to vector<48x128xf32>
    %165 = arith.select %163, %161, %164 : vector<48x128xi1>, vector<48x128xf32>
    %166 = arith.truncf %151 : vector<48x128xf32> to vector<48x128xbf16>
    %c7 = arith.constant 7 : index
    %c0_87 = arith.constant 0 : index
    %c0_88 = arith.constant 0 : index
    %167 = vector.load %arg6[%c7, %c0_87, %c0_88] : memref<9x128x128xbf16, #tpu.memory_space<vmem>>, vector<1x128x128xbf16>
    %168 = vector.shape_cast %167 : vector<1x128x128xbf16> to vector<128x128xbf16>
    %cst_89 = arith.constant dense<0.000000e+00> : vector<48x128xf32>
    %169 = tpu.matmul %166, %168, %cst_89 {dimension_numbers = #tpu.dot_dimension_numbers<[1], [0], [0], [1], [0, 0, 1, 1], [], []>} : vector<48x128xbf16>, vector<128x128xbf16>, vector<48x128xf32> -> vector<48x128xf32>
    %170 = arith.truncf %158 : vector<48x128xf32> to vector<48x128xbf16>
    %c6 = arith.constant 6 : index
    %c0_90 = arith.constant 0 : index
    %c0_91 = arith.constant 0 : index
    %171 = vector.load %arg6[%c6, %c0_90, %c0_91] : memref<9x128x128xbf16, #tpu.memory_space<vmem>>, vector<1x128x128xbf16>
    %172 = vector.shape_cast %171 : vector<1x128x128xbf16> to vector<128x128xbf16>
    %cst_92 = arith.constant dense<0.000000e+00> : vector<48x128xf32>
    %173 = tpu.matmul %170, %172, %cst_92 {dimension_numbers = #tpu.dot_dimension_numbers<[1], [0], [0], [1], [0, 0, 1, 1], [], []>} : vector<48x128xbf16>, vector<128x128xbf16>, vector<48x128xf32> -> vector<48x128xf32>
    %174 = arith.addf %169, %173 : vector<48x128xf32>
    %175 = arith.truncf %165 : vector<48x128xf32> to vector<48x128xbf16>
    %c8 = arith.constant 8 : index
    %c0_93 = arith.constant 0 : index
    %c0_94 = arith.constant 0 : index
    %176 = vector.load %arg6[%c8, %c0_93, %c0_94] : memref<9x128x128xbf16, #tpu.memory_space<vmem>>, vector<1x128x128xbf16>
    %177 = vector.shape_cast %176 : vector<1x128x128xbf16> to vector<128x128xbf16>
    %cst_95 = arith.constant dense<0.000000e+00> : vector<48x128xf32>
    %178 = tpu.matmul %175, %177, %cst_95 {dimension_numbers = #tpu.dot_dimension_numbers<[1], [0], [0], [1], [0, 0, 1, 1], [], []>} : vector<48x128xbf16>, vector<128x128xbf16>, vector<48x128xf32> -> vector<48x128xf32>
    %179 = arith.addf %174, %178 : vector<48x128xf32>
    %c2_96 = arith.constant 2 : index
    %c0_97 = arith.constant 0 : index
    %c0_98 = arith.constant 0 : index
    %180 = vector.load %arg7[%c2_96, %c0_97, %c0_98] : memref<3x1x128xf32, #tpu.memory_space<vmem>>, vector<1x1x128xf32>
    %181 = vector.shape_cast %180 : vector<1x1x128xf32> to vector<1x128xf32>
    %182 = vector.broadcast %181 : vector<1x128xf32> to vector<48x128xf32>
    %183 = arith.addf %179, %182 : vector<48x128xf32>
    %cst_99 = arith.constant 0.000000e+00 : f32
    %184 = vector.broadcast %cst_99 : f32 to vector<48x128xf32>
    %185 = arith.maximumf %183, %184 : vector<48x128xf32>
    %186 = arith.truncf %185 : vector<48x128xf32> to vector<48x128xbf16>
    %c2_100 = arith.constant 2 : index
    %c0_101 = arith.constant 0 : index
    %c0_102 = arith.constant 0 : index
    %187 = vector.load %arg8[%c2_100, %c0_101, %c0_102] : memref<3x128x128xbf16, #tpu.memory_space<vmem>>, vector<1x128x128xbf16>
    %188 = vector.shape_cast %187 : vector<1x128x128xbf16> to vector<128x128xbf16>
    %cst_103 = arith.constant dense<0.000000e+00> : vector<48x128xf32>
    %189 = tpu.matmul %186, %188, %cst_103 {dimension_numbers = #tpu.dot_dimension_numbers<[1], [0], [0], [1], [0, 0, 1, 1], [], []>} : vector<48x128xbf16>, vector<128x128xbf16>, vector<48x128xf32> -> vector<48x128xf32>
    %190 = arith.addf %139, %189 : vector<48x128xf32>
    %c2_104 = arith.constant 2 : index
    %c0_105 = arith.constant 0 : index
    %c0_106 = arith.constant 0 : index
    %191 = vector.load %arg9[%c2_104, %c0_105, %c0_106] : memref<3x1x128xf32, #tpu.memory_space<vmem>>, vector<1x1x128xf32>
    %192 = vector.shape_cast %191 : vector<1x1x128xf32> to vector<1x128xf32>
    %193 = vector.broadcast %192 : vector<1x128xf32> to vector<48x128xf32>
    %194 = arith.addf %190, %193 : vector<48x128xf32>
    %195 = vector.extract_strided_slice %194 {offsets = [8, 0], sizes = [32, 128], strides = [1, 1]} : vector<48x128xf32> to vector<32x128xf32>
    %c0_107 = arith.constant 0 : index
    %c0_108 = arith.constant 0 : index
    %c0_109 = arith.constant 0 : index
    %196 = vector.load %arg10[%c0_107, %c0_108, %c0_109] : memref<1x32x128xf32, #tpu.memory_space<vmem>>, vector<1x32x128xf32>
    %197 = vector.shape_cast %196 : vector<1x32x128xf32> to vector<32x128xf32>
    %198 = vector.shape_cast %195 : vector<32x128xf32> to vector<1x32x128xf32>
    tpu.vector_store %arg10[%c0_107, %c0_108, %c0_109], %198 {strides = array<i32>} : memref<1x32x128xf32, #tpu.memory_space<vmem>>, vector<1x32x128xf32>,
    return
  }
  func.func @transform_0(%arg0: i32) -> (i32, i32, i32) {
    %c0_i32 = arith.constant 0 : i32
    %c0_i32_0 = arith.constant 0 : i32
    %c0_i32_1 = arith.constant 0 : i32
    return %arg0, %c0_i32, %c0_i32_0 : i32, i32, i32
  }
  func.func @transform_1(%arg0: i32) -> (i32, i32) {
    %c0_i32 = arith.constant 0 : i32
    %c0_i32_0 = arith.constant 0 : i32
    %c0_i32_1 = arith.constant 0 : i32
    return %c0_i32, %c0_i32_0 : i32, i32
  }
  func.func @transform_2(%arg0: i32) -> (i32, i32) {
    %c0_i32 = arith.constant 0 : i32
    %c0_i32_0 = arith.constant 0 : i32
    %c0_i32_1 = arith.constant 0 : i32
    return %c0_i32, %c0_i32_0 : i32, i32
  }
  func.func @transform_3(%arg0: i32) -> (i32, i32, i32) {
    %c0_i32 = arith.constant 0 : i32
    %c0_i32_0 = arith.constant 0 : i32
    %c0_i32_1 = arith.constant 0 : i32
    %c0_i32_2 = arith.constant 0 : i32
    return %c0_i32, %c0_i32_0, %c0_i32_1 : i32, i32, i32
  }
  func.func @transform_4(%arg0: i32) -> (i32, i32, i32) {
    %c0_i32 = arith.constant 0 : i32
    %c0_i32_0 = arith.constant 0 : i32
    %c0_i32_1 = arith.constant 0 : i32
    %c0_i32_2 = arith.constant 0 : i32
    return %c0_i32, %c0_i32_0, %c0_i32_1 : i32, i32, i32
  }
  func.func @transform_5(%arg0: i32) -> (i32, i32, i32) {
    %c0_i32 = arith.constant 0 : i32
    %c0_i32_0 = arith.constant 0 : i32
    %c0_i32_1 = arith.constant 0 : i32
    %c0_i32_2 = arith.constant 0 : i32
    return %c0_i32, %c0_i32_0, %c0_i32_1 : i32, i32, i32
  }
  func.func @transform_6(%arg0: i32) -> (i32, i32, i32) {
    %c0_i32 = arith.constant 0 : i32
    %c0_i32_0 = arith.constant 0 : i32
    %c0_i32_1 = arith.constant 0 : i32
    %c0_i32_2 = arith.constant 0 : i32
    return %c0_i32, %c0_i32_0, %c0_i32_1 : i32, i32, i32
  }
  func.func @transform_7(%arg0: i32) -> (i32, i32, i32) {
    %c0_i32 = arith.constant 0 : i32
    %c0_i32_0 = arith.constant 0 : i32
    %c0_i32_1 = arith.constant 0 : i32
    %c0_i32_2 = arith.constant 0 : i32
    return %c0_i32, %c0_i32_0, %c0_i32_1 : i32, i32, i32
  }
  func.func @transform_8(%arg0: i32) -> (i32, i32, i32) {
    %c0_i32 = arith.constant 0 : i32
    %c0_i32_0 = arith.constant 0 : i32
    %c0_i32_1 = arith.constant 0 : i32
    %c0_i32_2 = arith.constant 0 : i32
    return %c0_i32, %c0_i32_0, %c0_i32_1 : i32, i32, i32
  }
  func.func @transform_9(%arg0: i32) -> (i32, i32, i32) {
    %c0_i32 = arith.constant 0 : i32
    %c0_i32_0 = arith.constant 0 : i32
    %c0_i32_1 = arith.constant 0 : i32
    return %arg0, %c0_i32, %c0_i32_0 : i32, i32, i32
  }
}

</mosaic_0001>

<llo_original>
// kernel: tpu_custom_call.1
$region0: #{tpu_custom_call.1}
  #allocation0 [shape = 'u32[]', space=smem, size = 0x4, offset = 0x4, fixed_abs, tag = 'smem constant byte address 0x4 - core index']
  #allocation1 [shape = 'u32[144,128]{1,0:T(1,128)}', space=vmem, size = 0x12000, scoped, tag = 'internal scratch']
  %s0 = inlined_call_operand.vmem [shape: f32[1,48,8], index: 0, kind: input, shape index: {}]
  %s1 = inlined_call_operand.vmem [shape: bf16[8,128], index: 1, kind: input, shape index: {}]
  %s2 = inlined_call_operand.vmem [shape: f32[1,128], index: 2, kind: input, shape index: {}]
  %s3 = inlined_call_operand.hbm [shape: bf16[3,128,128], index: 3, kind: input, shape index: {}]
  %s4 = inlined_call_operand.vmem [shape: f32[3,1,128], index: 4, kind: input, shape index: {}]
  %s5 = inlined_call_operand.hbm [shape: bf16[9,128,128], index: 5, kind: input, shape index: {}]
  %s6 = inlined_call_operand.vmem [shape: f32[3,1,128], index: 6, kind: input, shape index: {}]
  %s7 = inlined_call_operand.hbm [shape: bf16[3,128,128], index: 7, kind: input, shape index: {}]
  %s8 = inlined_call_operand.vmem [shape: f32[3,1,128], index: 8, kind: input, shape index: {}]
  %s9 = inlined_call_operand.hbm [shape: f32[1,32,128], index: 9, kind: output, shape index: {}]
  %s10 = sld [smem:[#allocation0]]
  $region58: #{tpu_custom_call.1} parent=0
    _
  %s12 = ssub.s32 1, %s10
  %s13 = scalar_select 0, %s12, %s10
  $region1: #{tpu_custom_call.1} parent=0
    #allocation2 [shape = 'u8[98304]{0}', space=vmem, size = 0x18000, scoped, tag = 'input window, operand 3, single buffered']
    #allocation3 [shape = 's32[1]{0}', space=sflag, size = 0x4, scoped, tag = 'scoped memory for tpu_custom_call.1']
    #allocation4 [shape = 's32[1]{0}', space=sflag, size = 0x4, scoped, tag = 'scoped memory for tpu_custom_call.1']
    #allocation5 [shape = 'u8[294912]{0}', space=vmem, size = 0x48000, scoped, tag = 'input window, operand 5, single buffered']
    #allocation6 [shape = 's32[1]{0}', space=sflag, size = 0x4, scoped, tag = 'scoped memory for tpu_custom_call.1']
    #allocation7 [shape = 'u8[98304]{0}', space=vmem, size = 0x18000, scoped, tag = 'input window, operand 7, single buffered']
    #allocation8 [shape = 'u8[16384]{0}', space=vmem, size = 0x4000, scoped, tag = 'output window, operand 0, single buffered']
    %14 = vsyncpa [#allocation3], 0
    %15 = vsyncpa [#allocation6], 0
    %16 = vsyncpa [#allocation4], 0
    // Predicated region
    $region2: #{tpu_custom_call.1} parent=1 // pred_check
      _
    $region3: #{tpu_custom_call.1} parent=1 // pred_check_branch
      %18 = sbr.rel (0) target = $region5
    $region4: #{tpu_custom_call.1} parent=1 // pred_region
      _
    $region5: #{tpu_custom_call.1} parent=1 // pred_fallthru
      _
    // Predicated region
    $region6: #{tpu_custom_call.1} parent=1 // pred_check
      _
    $region7: #{tpu_custom_call.1} parent=1 // pred_check_branch
      %20 = sbr.rel (0) target = $region9
    $region8: #{tpu_custom_call.1} parent=1 // pred_region
      _
    $region9: #{tpu_custom_call.1} parent=1 // pred_fallthru
      _
    // Predicated region
    $region10: #{tpu_custom_call.1} parent=1 // pred_check
      _
    $region11: #{tpu_custom_call.1} parent=1 // pred_check_branch
      %22 = sbr.rel (0) target = $region13
    $region12: #{tpu_custom_call.1} parent=1 // pred_region
      _
    $region13: #{tpu_custom_call.1} parent=1 // pred_fallthru
      _
    // Predicated region
    $region14: #{tpu_custom_call.1} parent=1 // pred_check
      _
    $region15: #{tpu_custom_call.1} parent=1 // pred_check_branch
      %24 = sbr.rel (0) target = $region17
    $region16: #{tpu_custom_call.1} parent=1 // pred_region
      %s26 = ssub.s32 3072, 3072
      %27 = vsyncadd [#allocation3], %s26
      %s28 = sshll.u32 [#allocation2], 4
      %s29 = int_to_ptr.vmem [resolvable:$true] %s28
      %34 = dma.hbm_to_vmem [thread:$0]  %s3, 3072, %s29, [#allocation3], 64, 64, 4
    $region17: #{tpu_custom_call.1} parent=1 // pred_fallthru
      _
    // Predicated region
    $region18: #{tpu_custom_call.1} parent=1 // pred_check
      _
    $region19: #{tpu_custom_call.1} parent=1 // pred_check_branch
      %36 = sbr.rel (0) target = $region21
    $region20: #{tpu_custom_call.1} parent=1 // pred_region
      _
    $region21: #{tpu_custom_call.1} parent=1 // pred_fallthru
      _
    // Predicated region
    $region22: #{tpu_custom_call.1} parent=1 // pred_check
      _
    $region23: #{tpu_custom_call.1} parent=1 // pred_check_branch
      %38 = sbr.rel (0) target = $region25
    $region24: #{tpu_custom_call.1} parent=1 // pred_region
      %s40 = ssub.s32 9216, 9216
      %41 = vsyncadd [#allocation6], %s40
      %s42 = sshll.u32 [#allocation5], 4
      %s43 = int_to_ptr.vmem [resolvable:$true] %s42
      %48 = dma.hbm_to_vmem [thread:$0]  %s5, 9216, %s43, [#allocation6], 64, 64, 4
    $region25: #{tpu_custom_call.1} parent=1 // pred_fallthru
      _
    // Predicated region
    $region26: #{tpu_custom_call.1} parent=1 // pred_check
      _
    $region27: #{tpu_custom_call.1} parent=1 // pred_check_branch
      %50 = sbr.rel (0) target = $region29
    $region28: #{tpu_custom_call.1} parent=1 // pred_region
      _
    $region29: #{tpu_custom_call.1} parent=1 // pred_fallthru
      _
    // Predicated region
    $region30: #{tpu_custom_call.1} parent=1 // pred_check
      _
    $region31: #{tpu_custom_call.1} parent=1 // pred_check_branch
      %52 = sbr.rel (0) target = $region33
    $region32: #{tpu_custom_call.1} parent=1 // pred_region
      %s54 = ssub.s32 3072, 3072
      %55 = vsyncadd [#allocation6], %s54
      %s56 = sshll.u32 [#allocation7], 4
      %s57 = int_to_ptr.vmem [resolvable:$true] %s56
      %62 = dma.hbm_to_vmem [thread:$0]  %s7, 3072, %s57, [#allocation6], 64, 64, 4
    $region33: #{tpu_custom_call.1} parent=1 // pred_fallthru
      _
    // Predicated region
    $region34: #{tpu_custom_call.1} parent=1 // pred_check
      _
    $region35: #{tpu_custom_call.1} parent=1 // pred_check_branch
      %64 = sbr.rel (0) target = $region37
    $region36: #{tpu_custom_call.1} parent=1 // pred_region
      _
    $region37: #{tpu_custom_call.1} parent=1 // pred_fallthru
      _
    // Predicated region
    $region38: #{tpu_custom_call.1} parent=1 // pred_check
      _
    $region39: #{tpu_custom_call.1} parent=1 // pred_check_branch
      %66 = sbr.rel (0) target = $region41
    $region40: #{tpu_custom_call.1} parent=1 // pred_region
      %67 = dma.done [#allocation3], 3072
    $region41: #{tpu_custom_call.1} parent=1 // pred_fallthru
      _
    // Predicated region
    $region42: #{tpu_custom_call.1} parent=1 // pred_check
      _
    $region43: #{tpu_custom_call.1} parent=1 // pred_check_branch
      %69 = sbr.rel (0) target = $region45
    $region44: #{tpu_custom_call.1} parent=1 // pred_region
      %70 = dma.done [#allocation6], 9216
    $region45: #{tpu_custom_call.1} parent=1 // pred_fallthru
      _
    // Predicated region
    $region46: #{tpu_custom_call.1} parent=1 // pred_check
      _
    $region47: #{tpu_custom_call.1} parent=1 // pred_check_branch
      %72 = sbr.rel (0) target = $region49
    $region48: #{tpu_custom_call.1} parent=1 // pred_region
      %73 = dma.done [#allocation6], 3072
    $region49: #{tpu_custom_call.1} parent=1 // pred_fallthru
      _
    %v75 = vld [vmem:[%s0] sm:$0xff]
    %v76 = vld [vmem:[%s0 + $0x8] sm:$0xff]
    %v77 = vld [vmem:[%s0 + $0x10] sm:$0xff]
    %v78 = vld [vmem:[%s0 + $0x18] sm:$0xff]
    %v79 = vld [vmem:[%s0 + $0x20] sm:$0xff]
    %v80 = vld [vmem:[%s0 + $0x28] sm:$0xff]
    %v81 = vpack.c.bf16 %v76, %v75
    %v82 = vpack.c.bf16 %v78, %v77
    %v83 = vpack.c.bf16 %v80, %v79
    %v84 = vld [vmem:[%s1] sm:$0xf]
    %v85 = vld [vmem:[%s2] sm:$0x1]
    %v87 = vlaneseq
    %v88 = vshrl.u32 %v87, 7
    %v89 = vsub.s32 0, %v88
    %v90 = vrot.slane %v85, %v89
    %vm92 = vcmask 64512
    %v94 = vsel %vm92, %v81, 0
    %v97 = vsel %vm92, %v82, 0
    %v100 = vsel %vm92, %v83, 0
    %vm102 = vcmask 1043456
    %v104 = vsel %vm102, %v84, 0
    %106 = vmatprep.subr.bf16.mxu0 0
    %107 = vmatpush1.bf16.msra.mxu0 0
    %108 = vmatprep.subr.bf16.mxu0 0
    %109 = vmatpush1.bf16.msra.mxu0 0
    %110 = vmatprep.subr.bf16.mxu0 0
    %111 = vmatpush1.bf16.msra.mxu0 0
    %112 = vmatprep.subr.bf16.mxu0 0
    %113 = vmatpush1.bf16.msra.mxu0 0
    %114 = vmatprep.subr.bf16.mxu0 0
    %115 = vmatpush1.bf16.msra.mxu0 0
    %116 = vmatprep.subr.bf16.mxu0 0
    %117 = vmatpush1.bf16.msra.mxu0 0
    %118 = vmatprep.subr.bf16.mxu0 0
    %119 = vmatpush1.bf16.msra.mxu0 0
    %120 = vmatprep.subr.bf16.mxu0 0
    %121 = vmatpush1.bf16.msra.mxu0 %v104
    %122 = vmatprep.subr.bf16.mxu0 0
    %123 = vmatpush2.bf16.msra.mxu0 0
    %124 = vmatprep.subr.bf16.mxu0 0
    %125 = vmatpush2.bf16.msra.mxu0 0
    %126 = vmatprep.subr.bf16.mxu0 0
    %127 = vmatpush2.bf16.msra.mxu0 0
    %128 = vmatprep.subr.bf16.mxu0 0
    %129 = vmatpush2.bf16.msra.mxu0 0
    %130 = vmatprep.subr.bf16.mxu0 0
    %131 = vmatpush2.bf16.msra.mxu0 0
    %132 = vmatprep.subr.bf16.mxu0 0
    %133 = vmatpush2.bf16.msra.mxu0 0
    %134 = vmatprep.subr.bf16.mxu0 0
    %135 = vmatpush2.bf16.msra.mxu0 0
    %136 = vmatprep.subr.bf16.mxu0 0
    %137 = vmatpush2.bf16.msra.mxu0 0
    %138 = vmatprep.mubr.bf16.mxu0 0
    %139 = vmatmul.mubr.bf16.gmra.mxu0 %v94
    %v140 = vpop.f32.mrf.mxu0
    %v141 = vadd.f32 %v90, %v140
    %v142 = vpop.f32.mrf.mxu0
    %v143 = vpop.f32.mrf.mxu0
    %v144 = vadd.f32 %v90, %v143
    %v145 = vpop.f32.mrf.mxu0
    %146 = vmatprep.mubr.bf16.mxu0 0
    %147 = vmatmul.mubr.bf16.gmra.mxu0 %v97
    %v148 = vpop.f32.mrf.mxu0
    %v149 = vadd.f32 %v90, %v148
    %v150 = vpop.f32.mrf.mxu0
    %v151 = vpop.f32.mrf.mxu0
    %v152 = vadd.f32 %v90, %v151
    %v153 = vpop.f32.mrf.mxu0
    %154 = vmatprep.mubr.bf16.mxu0 0
    %155 = vmatmul.mubr.bf16.gmra.mxu0 %v100
    %v156 = vpop.f32.mrf.mxu0
    %v157 = vadd.f32 %v90, %v156
    %v158 = vpop.f32.mrf.mxu0
    %v159 = vpop.f32.mrf.mxu0
    %v160 = vadd.f32 %v90, %v159
    %v161 = vpop.f32.mrf.mxu0
    %162 = vdwg.mxu0
    %v163 = vlaneseq
    %v164 = vshrl.u32 %v163, 7
    %v165 = vadd.s32 %v164, 8
    %v166 = vadd.s32 %v164, 16
    %v167 = vadd.s32 %v164, 24
    %v168 = vadd.s32 %v164, 32
    %v169 = vadd.s32 %v164, 40
    %s170 = smul.u32 0, 32
    %v171 = vstv %s170
    %v172 = vadd.s32 %v171, %v164
    %v173 = vadd.s32 %v171, %v165
    %v174 = vadd.s32 %v171, %v166
    %v175 = vadd.s32 %v171, %v167
    %v176 = vadd.s32 %v171, %v168
    %v177 = vadd.s32 %v171, %v169
    %v178 = vadd.s32 %v172, 8
    %v179 = vadd.s32 %v173, 8
    %v180 = vadd.s32 %v174, 8
    %v181 = vadd.s32 %v175, 8
    %v182 = vadd.s32 %v176, 8
    %v183 = vadd.s32 %v177, 8
    %vm184 = vcmp.lt.s32.totalorder %v178, 0
    %v185 = vsub.s32 0, %v178
    %v186 = vsel %vm184, %v185, %v178
    %v187 = vshrl.u32 %v186, 4
    %v188 = vand.u32 %v186, 15
    %v189 = vsub.s32 0, %v188
    %v190 = vsel %vm184, %v189, %v188
    %vm191 = vcmp.lt.s32.totalorder %v179, 0
    %v192 = vsub.s32 0, %v179
    %v193 = vsel %vm191, %v192, %v179
    %v194 = vshrl.u32 %v193, 4
    %v195 = vand.u32 %v193, 15
    %v196 = vsub.s32 0, %v195
    %v197 = vsel %vm191, %v196, %v195
    %vm198 = vcmp.lt.s32.totalorder %v180, 0
    %v199 = vsub.s32 0, %v180
    %v200 = vsel %vm198, %v199, %v180
    %v201 = vshrl.u32 %v200, 4
    %v202 = vand.u32 %v200, 15
    %v203 = vsub.s32 0, %v202
    %v204 = vsel %vm198, %v203, %v202
    %vm205 = vcmp.lt.s32.totalorder %v181, 0
    %v206 = vsub.s32 0, %v181
    %v207 = vsel %vm205, %v206, %v181
    %v208 = vshrl.u32 %v207, 4
    %v209 = vand.u32 %v207, 15
    %v210 = vsub.s32 0, %v209
    %v211 = vsel %vm205, %v210, %v209
    %vm212 = vcmp.lt.s32.totalorder %v182, 0
    %v213 = vsub.s32 0, %v182
    %v214 = vsel %vm212, %v213, %v182
    %v215 = vshrl.u32 %v214, 4
    %v216 = vand.u32 %v214, 15
    %v217 = vsub.s32 0, %v216
    %v218 = vsel %vm212, %v217, %v216
    %vm219 = vcmp.lt.s32.totalorder %v183, 0
    %v220 = vsub.s32 0, %v183
    %v221 = vsel %vm219, %v220, %v183
    %v222 = vshrl.u32 %v221, 4
    %v223 = vand.u32 %v221, 15
    %v224 = vsub.s32 0, %v223
    %v225 = vsel %vm219, %v224, %v223
    %vm226 = vcmp.ne.s32.totalorder %v190, 0
    %vm227 = vcmp.ne.s32.totalorder %v197, 0
    %vm228 = vcmp.ne.s32.totalorder %v204, 0
    %vm229 = vcmp.ne.s32.totalorder %v211, 0
    %vm230 = vcmp.ne.s32.totalorder %v218, 0
    %vm231 = vcmp.ne.s32.totalorder %v225, 0
    %vm232 = vcmp.lt.s32.totalorder %v190, 0
    %vm233 = vcmp.lt.s32.totalorder %v197, 0
    %vm234 = vcmp.lt.s32.totalorder %v204, 0
    %vm235 = vcmp.lt.s32.totalorder %v211, 0
    %vm236 = vcmp.lt.s32.totalorder %v218, 0
    %vm237 = vcmp.lt.s32.totalorder %v225, 0
    %vm238 = vmand %vm232, %vm226
    %vm239 = vmand %vm233, %vm227
    %vm240 = vmand %vm234, %vm228
    %vm241 = vmand %vm235, %vm229
    %vm242 = vmand %vm236, %vm230
    %vm243 = vmand %vm237, %vm231
    %v244 = vadd.s32 %v190, 16
    %v245 = vadd.s32 %v197, 16
    %v246 = vadd.s32 %v204, 16
    %v247 = vadd.s32 %v211, 16
    %v248 = vadd.s32 %v218, 16
    %v249 = vadd.s32 %v225, 16
    %v250 = vsel %vm238, %v244, %v190
    %v251 = vsel %vm239, %v245, %v197
    %v252 = vsel %vm240, %v246, %v204
    %v253 = vsel %vm241, %v247, %v211
    %v254 = vsel %vm242, %v248, %v218
    %v255 = vsel %vm243, %v249, %v225
    %v256 = vmax.f32 %v141, 0.0
    %v257 = vmax.f32 %v144, 0.0
    %v258 = vmax.f32 %v149, 0.0
    %v259 = vmax.f32 %v152, 0.0
    %v260 = vmax.f32 %v157, 0.0
    %v261 = vmax.f32 %v160, 0.0
    %v262 = vpack.c.bf16 %v257, %v256
    %v263 = vpack.c.bf16 %v259, %v258
    %v264 = vpack.c.bf16 %v261, %v260
    %v265 = vld [vmem:[#allocation2] sm:$0xf]
    %v266 = vld [vmem:[#allocation2 + $0x4] sm:$0xf]
    %v267 = vld [vmem:[#allocation2 + $0x8] sm:$0xf]
    %v268 = vld [vmem:[#allocation2 + $0xc] sm:$0xf]
    %v269 = vld [vmem:[#allocation2 + $0x10] sm:$0xf]
    %v270 = vld [vmem:[#allocation2 + $0x14] sm:$0xf]
    %v271 = vld [vmem:[#allocation2 + $0x18] sm:$0xf]
    %v272 = vld [vmem:[#allocation2 + $0x1c] sm:$0xf]
    %v273 = vld [vmem:[#allocation2 + $0x20] sm:$0xf]
    %v274 = vld [vmem:[#allocation2 + $0x24] sm:$0xf]
    %v275 = vld [vmem:[#allocation2 + $0x28] sm:$0xf]
    %v276 = vld [vmem:[#allocation2 + $0x2c] sm:$0xf]
    %v277 = vld [vmem:[#allocation2 + $0x30] sm:$0xf]
    %v278 = vld [vmem:[#allocation2 + $0x34] sm:$0xf]
    %v279 = vld [vmem:[#allocation2 + $0x38] sm:$0xf]
    %v280 = vld [vmem:[#allocation2 + $0x3c] sm:$0xf]
    %v281 = vld [vmem:[%s4] sm:$0x1]
    %v283 = vlaneseq
    %v284 = vshrl.u32 %v283, 7
    %v285 = vsub.s32 0, %v284
    %v286 = vrot.slane %v281, %v285
    %v304 = vunpack.c.l.b16 %v265
    %v305 = vunpack.c.l.b16 %v266
    %v306 = vunpack.c.l.b16 %v267
    %v307 = vunpack.c.l.b16 %v268
    %v308 = vunpack.c.l.b16 %v269
    %v309 = vunpack.c.l.b16 %v270
    %v310 = vunpack.c.l.b16 %v271
    %v311 = vunpack.c.l.b16 %v272
    %v312 = vunpack.c.l.b16 %v273
    %v313 = vunpack.c.l.b16 %v274
    %v314 = vunpack.c.l.b16 %v275
    %v315 = vunpack.c.l.b16 %v276
    %v316 = vunpack.c.l.b16 %v277
    %v317 = vunpack.c.l.b16 %v278
    %v318 = vunpack.c.l.b16 %v279
    %v319 = vunpack.c.l.b16 %v280
    %v320 = vpack.c.b16 %v305, %v304
    %v321 = vpack.c.b16 %v307, %v306
    %v322 = vpack.c.b16 %v309, %v308
    %v323 = vpack.c.b16 %v311, %v310
    %v324 = vpack.c.b16 %v313, %v312
    %v325 = vpack.c.b16 %v315, %v314
    %v326 = vpack.c.b16 %v317, %v316
    %v327 = vpack.c.b16 %v319, %v318
    %336 = vmatprep.subr.bf16.mxu0 0
    %337 = vmatpush1.bf16.msra.mxu0 %v327
    %338 = vmatprep.subr.bf16.mxu0 0
    %339 = vmatpush1.bf16.msra.mxu0 %v326
    %340 = vmatprep.subr.bf16.mxu0 0
    %341 = vmatpush1.bf16.msra.mxu0 %v325
    %342 = vmatprep.subr.bf16.mxu0 0
    %343 = vmatpush1.bf16.msra.mxu0 %v324
    %344 = vmatprep.subr.bf16.mxu0 0
    %345 = vmatpush1.bf16.msra.mxu0 %v323
    %346 = vmatprep.subr.bf16.mxu0 0
    %347 = vmatpush1.bf16.msra.mxu0 %v322
    %348 = vmatprep.subr.bf16.mxu0 0
    %349 = vmatpush1.bf16.msra.mxu0 %v321
    %350 = vmatprep.subr.bf16.mxu0 0
    %351 = vmatpush1.bf16.msra.mxu0 %v320
    %352 = vmatprep.subr.bf16.mxu0 0
    %353 = vmatpush2.bf16.msra.mxu0 0
    %354 = vmatprep.subr.bf16.mxu0 0
    %355 = vmatpush2.bf16.msra.mxu0 0
    %356 = vmatprep.subr.bf16.mxu0 0
    %357 = vmatpush2.bf16.msra.mxu0 0
    %358 = vmatprep.subr.bf16.mxu0 0
    %359 = vmatpush2.bf16.msra.mxu0 0
    %360 = vmatprep.subr.bf16.mxu0 0
    %361 = vmatpush2.bf16.msra.mxu0 0
    %362 = vmatprep.subr.bf16.mxu0 0
    %363 = vmatpush2.bf16.msra.mxu0 0
    %364 = vmatprep.subr.bf16.mxu0 0
    %365 = vmatpush2.bf16.msra.mxu0 0
    %366 = vmatprep.subr.bf16.mxu0 0
    %367 = vmatpush2.bf16.msra.mxu0 0
    %368 = vmatprep.mubr.bf16.mxu0 0
    %369 = vmatmul.mubr.bf16.gmra.mxu0 %v262
    %v370 = vpop.f32.mrf.mxu0
    %v371 = vadd.f32 %v286, %v370
    %v372 = vpop.f32.mrf.mxu0
    %v373 = vpop.f32.mrf.mxu0
    %v374 = vadd.f32 %v286, %v373
    %v375 = vpop.f32.mrf.mxu0
    %376 = vmatprep.mubr.bf16.mxu0 0
    %377 = vmatmul.mubr.bf16.gmra.mxu0 %v263
    %v378 = vpop.f32.mrf.mxu0
    %v379 = vadd.f32 %v286, %v378
    %v380 = vpop.f32.mrf.mxu0
    %v381 = vpop.f32.mrf.mxu0
    %v382 = vadd.f32 %v286, %v381
    %v383 = vpop.f32.mrf.mxu0
    %384 = vmatprep.mubr.bf16.mxu0 0
    %385 = vmatmul.mubr.bf16.gmra.mxu0 %v264
    %v386 = vpop.f32.mrf.mxu0
    %v387 = vadd.f32 %v286, %v386
    %v388 = vpop.f32.mrf.mxu0
    %v389 = vpop.f32.mrf.mxu0
    %v390 = vadd.f32 %v286, %v389
    %v391 = vpop.f32.mrf.mxu0
    %392 = vdwg.mxu0
    %v393 = vmax.f32 %v371, 0.0
    %v394 = vmax.f32 %v374, 0.0
    %v395 = vmax.f32 %v379, 0.0
    %v396 = vmax.f32 %v382, 0.0
    %v397 = vmax.f32 %v387, 0.0
    %v398 = vmax.f32 %v390, 0.0
    %vm399 = vcmp.ge.s32.totalorder %v250, 1
    %vm400 = vcmp.ge.s32.totalorder %v251, 1
    %vm401 = vcmp.ge.s32.totalorder %v252, 1
    %vm402 = vcmp.ge.s32.totalorder %v253, 1
    %vm403 = vcmp.ge.s32.totalorder %v254, 1
    %vm404 = vcmp.ge.s32.totalorder %v255, 1
    %v405 = vrot.slane %v393, 7
    %v406 = vrot.slane %v394, 7
    %v407 = vrot.slane %v395, 7
    %v408 = vrot.slane %v396, 7
    %v409 = vrot.slane %v397, 7
    %v410 = vrot.slane %v398, 7
    %vm411 = vcmp.lt.s32.totalorder %v164, 1
    %v412 = vsel %vm411, %v409, %v410
    %v413 = vsel %vm411, %v408, %v409
    %v414 = vsel %vm411, %v407, %v408
    %v415 = vsel %vm411, %v406, %v407
    %v416 = vsel %vm411, %v405, %v406
    %v417 = vsel %vm411, %v410, %v405
    %v418 = vsel %vm399, 1, 0
    %v419 = vsel %vm400, 1, 0
    %v420 = vsel %vm401, 1, 0
    %v421 = vsel %vm402, 1, 0
    %v422 = vsel %vm403, 1, 0
    %v423 = vsel %vm404, 1, 0
    %vm424 = vcmp.eq.s32.totalorder %v418, 1
    %vm425 = vcmp.eq.s32.totalorder %v419, 1
    %vm426 = vcmp.eq.s32.totalorder %v420, 1
    %vm427 = vcmp.eq.s32.totalorder %v421, 1
    %vm428 = vcmp.eq.s32.totalorder %v422, 1
    %vm429 = vcmp.eq.s32.totalorder %v423, 1
    %v430 = vsel %vm424, %v417, 0.0
    %v431 = vsel %vm425, %v416, 0.0
    %v432 = vsel %vm426, %v415, 0.0
    %v433 = vsel %vm427, %v414, 0.0
    %v434 = vsel %vm428, %v413, 0.0
    %v435 = vsel %vm429, %v412, 0.0
    %vm436 = vcmp.lt.s32.totalorder %v250, 15
    %vm437 = vcmp.lt.s32.totalorder %v251, 15
    %vm438 = vcmp.lt.s32.totalorder %v252, 15
    %vm439 = vcmp.lt.s32.totalorder %v253, 15
    %vm440 = vcmp.lt.s32.totalorder %v254, 15
    %vm441 = vcmp.lt.s32.totalorder %v255, 15
    %v442 = vrot.slane %v393, 1
    %v443 = vrot.slane %v394, 1
    %v444 = vrot.slane %v395, 1
    %v445 = vrot.slane %v396, 1
    %v446 = vrot.slane %v397, 1
    %v447 = vrot.slane %v398, 1
    %vm448 = vcmp.lt.s32.totalorder %v164, 7
    %v449 = vsel %vm448, %v446, %v447
    %v450 = vsel %vm448, %v445, %v446
    %v451 = vsel %vm448, %v444, %v445
    %v452 = vsel %vm448, %v443, %v444
    %v453 = vsel %vm448, %v442, %v443
    %v454 = vsel %vm448, %v447, %v442
    %v455 = vsel %vm436, 1, 0
    %v456 = vsel %vm437, 1, 0
    %v457 = vsel %vm438, 1, 0
    %v458 = vsel %vm439, 1, 0
    %v459 = vsel %vm440, 1, 0
    %v460 = vsel %vm441, 1, 0
    %vm461 = vcmp.eq.s32.totalorder %v455, 1
    %vm462 = vcmp.eq.s32.totalorder %v456, 1
    %vm463 = vcmp.eq.s32.totalorder %v457, 1
    %vm464 = vcmp.eq.s32.totalorder %v458, 1
    %vm465 = vcmp.eq.s32.totalorder %v459, 1
    %vm466 = vcmp.eq.s32.totalorder %v460, 1
    %v467 = vsel %vm461, %v453, 0.0
    %v468 = vsel %vm462, %v452, 0.0
    %v469 = vsel %vm463, %v451, 0.0
    %v470 = vsel %vm464, %v450, 0.0
    %v471 = vsel %vm465, %v449, 0.0
    %v472 = vsel %vm466, %v454, 0.0
    %v473 = vpack.c.bf16 %v394, %v393
    %v474 = vpack.c.bf16 %v396, %v395
    %v475 = vpack.c.bf16 %v398, %v397
    %s476 = scalar_lea.vmem [#allocation5], 64
    %v477 = vld [vmem:[%s476] sm:$0xf]
    %v478 = vld [vmem:[%s476 + $0x4] sm:$0xf]
    %v479 = vld [vmem:[%s476 + $0x8] sm:$0xf]
    %v480 = vld [vmem:[%s476 + $0xc] sm:$0xf]
    %v481 = vld [vmem:[%s476 + $0x10] sm:$0xf]
    %v482 = vld [vmem:[%s476 + $0x14] sm:$0xf]
    %v483 = vld [vmem:[%s476 + $0x18] sm:$0xf]
    %v484 = vld [vmem:[%s476 + $0x1c] sm:$0xf]
    %v485 = vld [vmem:[%s476 + $0x20] sm:$0xf]
    %v486 = vld [vmem:[%s476 + $0x24] sm:$0xf]
    %v487 = vld [vmem:[%s476 + $0x28] sm:$0xf]
    %v488 = vld [vmem:[%s476 + $0x2c] sm:$0xf]
    %v489 = vld [vmem:[%s476 + $0x30] sm:$0xf]
    %v490 = vld [vmem:[%s476 + $0x34] sm:$0xf]
    %v491 = vld [vmem:[%s476 + $0x38] sm:$0xf]
    %v492 = vld [vmem:[%s476 + $0x3c] sm:$0xf]
    %v493 = vpack.c.bf16 %v431, %v430
    %v494 = vpack.c.bf16 %v433, %v432
    %v495 = vpack.c.bf16 %v435, %v434
    %v496 = vld [vmem:[#allocation5] sm:$0xf]
    %v497 = vld [vmem:[#allocation5 + $0x4] sm:$0xf]
    %v498 = vld [vmem:[#allocation5 + $0x8] sm:$0xf]
    %v499 = vld [vmem:[#allocation5 + $0xc] sm:$0xf]
    %v500 = vld [vmem:[#allocation5 + $0x10] sm:$0xf]
    %v501 = vld [vmem:[#allocation5 + $0x14] sm:$0xf]
    %v502 = vld [vmem:[#allocation5 + $0x18] sm:$0xf]
    %v503 = vld [vmem:[#allocation5 + $0x1c] sm:$0xf]
    %v504 = vld [vmem:[#allocation5 + $0x20] sm:$0xf]
    %v505 = vld [vmem:[#allocation5 + $0x24] sm:$0xf]
    %v506 = vld [vmem:[#allocation5 + $0x28] sm:$0xf]
    %v507 = vld [vmem:[#allocation5 + $0x2c] sm:$0xf]
    %v508 = vld [vmem:[#allocation5 + $0x30] sm:$0xf]
    %v509 = vld [vmem:[#allocation5 + $0x34] sm:$0xf]
    %v510 = vld [vmem:[#allocation5 + $0x38] sm:$0xf]
    %v511 = vld [vmem:[#allocation5 + $0x3c] sm:$0xf]
    %v528 = vunpack.c.l.b16 %v496
    %v529 = vunpack.c.l.b16 %v497
    %v530 = vunpack.c.l.b16 %v498
    %v531 = vunpack.c.l.b16 %v499
    %v532 = vunpack.c.l.b16 %v500
    %v533 = vunpack.c.l.b16 %v501
    %v534 = vunpack.c.l.b16 %v502
    %v535 = vunpack.c.l.b16 %v503
    %v536 = vunpack.c.l.b16 %v504
    %v537 = vunpack.c.l.b16 %v505
    %v538 = vunpack.c.l.b16 %v506
    %v539 = vunpack.c.l.b16 %v507
    %v540 = vunpack.c.l.b16 %v508
    %v541 = vunpack.c.l.b16 %v509
    %v542 = vunpack.c.l.b16 %v510
    %v543 = vunpack.c.l.b16 %v511
    %v544 = vpack.c.b16 %v529, %v528
    %v545 = vpack.c.b16 %v531, %v530
    %v546 = vpack.c.b16 %v533, %v532
    %v547 = vpack.c.b16 %v535, %v534
    %v548 = vpack.c.b16 %v537, %v536
    %v549 = vpack.c.b16 %v539, %v538
    %v550 = vpack.c.b16 %v541, %v540
    %v551 = vpack.c.b16 %v543, %v542
    %560 = vmatprep.subr.bf16.mxu0 0
    %561 = vmatpush1.bf16.msra.mxu0 %v551
    %562 = vmatprep.subr.bf16.mxu0 0
    %563 = vmatpush1.bf16.msra.mxu0 %v550
    %564 = vmatprep.subr.bf16.mxu0 0
    %565 = vmatpush1.bf16.msra.mxu0 %v549
    %566 = vmatprep.subr.bf16.mxu0 0
    %567 = vmatpush1.bf16.msra.mxu0 %v548
    %568 = vmatprep.subr.bf16.mxu0 0
    %569 = vmatpush1.bf16.msra.mxu0 %v547
    %570 = vmatprep.subr.bf16.mxu0 0
    %571 = vmatpush1.bf16.msra.mxu0 %v546
    %572 = vmatprep.subr.bf16.mxu0 0
    %573 = vmatpush1.bf16.msra.mxu0 %v545
    %574 = vmatprep.subr.bf16.mxu0 0
    %575 = vmatpush1.bf16.msra.mxu0 %v544
    %576 = vmatprep.subr.bf16.mxu0 0
    %577 = vmatpush2.bf16.msra.mxu0 0
    %578 = vmatprep.subr.bf16.mxu0 0
    %579 = vmatpush2.bf16.msra.mxu0 0
    %580 = vmatprep.subr.bf16.mxu0 0
    %581 = vmatpush2.bf16.msra.mxu0 0
    %582 = vmatprep.subr.bf16.mxu0 0
    %583 = vmatpush2.bf16.msra.mxu0 0
    %584 = vmatprep.subr.bf16.mxu0 0
    %585 = vmatpush2.bf16.msra.mxu0 0
    %586 = vmatprep.subr.bf16.mxu0 0
    %587 = vmatpush2.bf16.msra.mxu0 0
    %588 = vmatprep.subr.bf16.mxu0 0
    %589 = vmatpush2.bf16.msra.mxu0 0
    %590 = vmatprep.subr.bf16.mxu0 0
    %591 = vmatpush2.bf16.msra.mxu0 0
    %592 = vmatprep.mubr.bf16.mxu0 0
    %593 = vmatmul.mubr.bf16.gmra.mxu0 %v493
    %v594 = vpop.f32.mrf.mxu0
    %v595 = vadd.f32 0.0, %v594
    %v596 = vpop.f32.mrf.mxu0
    %v597 = vpop.f32.mrf.mxu0
    %v598 = vadd.f32 0.0, %v597
    %v599 = vpop.f32.mrf.mxu0
    %600 = vmatprep.mubr.bf16.mxu0 0
    %601 = vmatmul.mubr.bf16.gmra.mxu0 %v494
    %v602 = vpop.f32.mrf.mxu0
    %v603 = vadd.f32 0.0, %v602
    %v604 = vpop.f32.mrf.mxu0
    %v605 = vpop.f32.mrf.mxu0
    %v606 = vadd.f32 0.0, %v605
    %v607 = vpop.f32.mrf.mxu0
    %608 = vmatprep.mubr.bf16.mxu0 0
    %609 = vmatmul.mubr.bf16.gmra.mxu0 %v495
    %v610 = vpop.f32.mrf.mxu0
    %v611 = vadd.f32 0.0, %v610
    %v612 = vpop.f32.mrf.mxu0
    %v613 = vpop.f32.mrf.mxu0
    %v614 = vadd.f32 0.0, %v613
    %v615 = vpop.f32.mrf.mxu0
    %616 = vdwg.mxu0
    %v633 = vunpack.c.l.b16 %v477
    %v634 = vunpack.c.l.b16 %v478
    %v635 = vunpack.c.l.b16 %v479
    %v636 = vunpack.c.l.b16 %v480
    %v637 = vunpack.c.l.b16 %v481
    %v638 = vunpack.c.l.b16 %v482
    %v639 = vunpack.c.l.b16 %v483
    %v640 = vunpack.c.l.b16 %v484
    %v641 = vunpack.c.l.b16 %v485
    %v642 = vunpack.c.l.b16 %v486
    %v643 = vunpack.c.l.b16 %v487
    %v644 = vunpack.c.l.b16 %v488
    %v645 = vunpack.c.l.b16 %v489
    %v646 = vunpack.c.l.b16 %v490
    %v647 = vunpack.c.l.b16 %v491
    %v648 = vunpack.c.l.b16 %v492
    %v649 = vpack.c.b16 %v634, %v633
    %v650 = vpack.c.b16 %v636, %v635
    %v651 = vpack.c.b16 %v638, %v637
    %v652 = vpack.c.b16 %v640, %v639
    %v653 = vpack.c.b16 %v642, %v641
    %v654 = vpack.c.b16 %v644, %v643
    %v655 = vpack.c.b16 %v646, %v645
    %v656 = vpack.c.b16 %v648, %v647
    %665 = vmatprep.subr.bf16.mxu0 0
    %666 = vmatpush1.bf16.msra.mxu0 %v656
    %667 = vmatprep.subr.bf16.mxu0 0
    %668 = vmatpush1.bf16.msra.mxu0 %v655
    %669 = vmatprep.subr.bf16.mxu0 0
    %670 = vmatpush1.bf16.msra.mxu0 %v654
    %671 = vmatprep.subr.bf16.mxu0 0
    %672 = vmatpush1.bf16.msra.mxu0 %v653
    %673 = vmatprep.subr.bf16.mxu0 0
    %674 = vmatpush1.bf16.msra.mxu0 %v652
    %675 = vmatprep.subr.bf16.mxu0 0
    %676 = vmatpush1.bf16.msra.mxu0 %v651
    %677 = vmatprep.subr.bf16.mxu0 0
    %678 = vmatpush1.bf16.msra.mxu0 %v650
    %679 = vmatprep.subr.bf16.mxu0 0
    %680 = vmatpush1.bf16.msra.mxu0 %v649
    %681 = vmatprep.subr.bf16.mxu0 0
    %682 = vmatpush2.bf16.msra.mxu0 0
    %683 = vmatprep.subr.bf16.mxu0 0
    %684 = vmatpush2.bf16.msra.mxu0 0
    %685 = vmatprep.subr.bf16.mxu0 0
    %686 = vmatpush2.bf16.msra.mxu0 0
    %687 = vmatprep.subr.bf16.mxu0 0
    %688 = vmatpush2.bf16.msra.mxu0 0
    %689 = vmatprep.subr.bf16.mxu0 0
    %690 = vmatpush2.bf16.msra.mxu0 0
    %691 = vmatprep.subr.bf16.mxu0 0
    %692 = vmatpush2.bf16.msra.mxu0 0
    %693 = vmatprep.subr.bf16.mxu0 0
    %694 = vmatpush2.bf16.msra.mxu0 0
    %695 = vmatprep.subr.bf16.mxu0 0
    %696 = vmatpush2.bf16.msra.mxu0 0
    %697 = vmatprep.mubr.bf16.mxu0 0
    %698 = vmatmul.mubr.bf16.gmra.mxu0 %v473
    %v699 = vpop.f32.mrf.mxu0
    %v700 = vadd.f32 %v595, %v699
    %v701 = vpop.f32.mrf.mxu0
    %v702 = vpop.f32.mrf.mxu0
    %v703 = vadd.f32 %v598, %v702
    %v704 = vpop.f32.mrf.mxu0
    %705 = vmatprep.mubr.bf16.mxu0 0
    %706 = vmatmul.mubr.bf16.gmra.mxu0 %v474
    %v707 = vpop.f32.mrf.mxu0
    %v708 = vadd.f32 %v603, %v707
    %v709 = vpop.f32.mrf.mxu0
    %v710 = vpop.f32.mrf.mxu0
    %v711 = vadd.f32 %v606, %v710
    %v712 = vpop.f32.mrf.mxu0
    %713 = vmatprep.mubr.bf16.mxu0 0
    %714 = vmatmul.mubr.bf16.gmra.mxu0 %v475
    %v715 = vpop.f32.mrf.mxu0
    %v716 = vadd.f32 %v611, %v715
    %v717 = vpop.f32.mrf.mxu0
    %v718 = vpop.f32.mrf.mxu0
    %v719 = vadd.f32 %v614, %v718
    %v720 = vpop.f32.mrf.mxu0
    %721 = vdwg.mxu0
    %v722 = vpack.c.bf16 %v468, %v467
    %v723 = vpack.c.bf16 %v470, %v469
    %v724 = vpack.c.bf16 %v472, %v471
    %s725 = scalar_lea.vmem [#allocation5], 128
    %v726 = vld [vmem:[%s725] sm:$0xf]
    %v727 = vld [vmem:[%s725 + $0x4] sm:$0xf]
    %v728 = vld [vmem:[%s725 + $0x8] sm:$0xf]
    %v729 = vld [vmem:[%s725 + $0xc] sm:$0xf]
    %v730 = vld [vmem:[%s725 + $0x10] sm:$0xf]
    %v731 = vld [vmem:[%s725 + $0x14] sm:$0xf]
    %v732 = vld [vmem:[%s725 + $0x18] sm:$0xf]
    %v733 = vld [vmem:[%s725 + $0x1c] sm:$0xf]
    %v734 = vld [vmem:[%s725 + $0x20] sm:$0xf]
    %v735 = vld [vmem:[%s725 + $0x24] sm:$0xf]
    %v736 = vld [vmem:[%s725 + $0x28] sm:$0xf]
    %v737 = vld [vmem:[%s725 + $0x2c] sm:$0xf]
    %v738 = vld [vmem:[%s725 + $0x30] sm:$0xf]
    %v739 = vld [vmem:[%s725 + $0x34] sm:$0xf]
    %v740 = vld [vmem:[%s725 + $0x38] sm:$0xf]
    %v741 = vld [vmem:[%s725 + $0x3c] sm:$0xf]
    %v758 = vunpack.c.l.b16 %v726
    %v759 = vunpack.c.l.b16 %v727
    %v760 = vunpack.c.l.b16 %v728
    %v761 = vunpack.c.l.b16 %v729
    %v762 = vunpack.c.l.b16 %v730
    %v763 = vunpack.c.l.b16 %v731
    %v764 = vunpack.c.l.b16 %v732
    %v765 = vunpack.c.l.b16 %v733
    %v766 = vunpack.c.l.b16 %v734
    %v767 = vunpack.c.l.b16 %v735
    %v768 = vunpack.c.l.b16 %v736
    %v769 = vunpack.c.l.b16 %v737
    %v770 = vunpack.c.l.b16 %v738
    %v771 = vunpack.c.l.b16 %v739
    %v772 = vunpack.c.l.b16 %v740
    %v773 = vunpack.c.l.b16 %v741
    %v774 = vpack.c.b16 %v759, %v758
    %v775 = vpack.c.b16 %v761, %v760
    %v776 = vpack.c.b16 %v763, %v762
    %v777 = vpack.c.b16 %v765, %v764
    %v778 = vpack.c.b16 %v767, %v766
    %v779 = vpack.c.b16 %v769, %v768
    %v780 = vpack.c.b16 %v771, %v770
    %v781 = vpack.c.b16 %v773, %v772
    %790 = vmatprep.subr.bf16.mxu0 0
    %791 = vmatpush1.bf16.msra.mxu0 %v781
    %792 = vmatprep.subr.bf16.mxu0 0
    %793 = vmatpush1.bf16.msra.mxu0 %v780
    %794 = vmatprep.subr.bf16.mxu0 0
    %795 = vmatpush1.bf16.msra.mxu0 %v779
    %796 = vmatprep.subr.bf16.mxu0 0
    %797 = vmatpush1.bf16.msra.mxu0 %v778
    %798 = vmatprep.subr.bf16.mxu0 0
    %799 = vmatpush1.bf16.msra.mxu0 %v777
    %800 = vmatprep.subr.bf16.mxu0 0
    %801 = vmatpush1.bf16.msra.mxu0 %v776
    %802 = vmatprep.subr.bf16.mxu0 0
    %803 = vmatpush1.bf16.msra.mxu0 %v775
    %804 = vmatprep.subr.bf16.mxu0 0
    %805 = vmatpush1.bf16.msra.mxu0 %v774
    %806 = vmatprep.subr.bf16.mxu0 0
    %807 = vmatpush2.bf16.msra.mxu0 0
    %808 = vmatprep.subr.bf16.mxu0 0
    %809 = vmatpush2.bf16.msra.mxu0 0
    %810 = vmatprep.subr.bf16.mxu0 0
    %811 = vmatpush2.bf16.msra.mxu0 0
    %812 = vmatprep.subr.bf16.mxu0 0
    %813 = vmatpush2.bf16.msra.mxu0 0
    %814 = vmatprep.subr.bf16.mxu0 0
    %815 = vmatpush2.bf16.msra.mxu0 0
    %816 = vmatprep.subr.bf16.mxu0 0
    %817 = vmatpush2.bf16.msra.mxu0 0
    %818 = vmatprep.subr.bf16.mxu0 0
    %819 = vmatpush2.bf16.msra.mxu0 0
    %820 = vmatprep.subr.bf16.mxu0 0
    %821 = vmatpush2.bf16.msra.mxu0 0
    %822 = vmatprep.mubr.bf16.mxu0 0
    %823 = vmatmul.mubr.bf16.gmra.mxu0 %v722
    %v824 = vpop.f32.mrf.mxu0
    %v825 = vadd.f32 0.0, %v824
    %v826 = vpop.f32.mrf.mxu0
    %v827 = vpop.f32.mrf.mxu0
    %v828 = vadd.f32 0.0, %v827
    %v829 = vpop.f32.mrf.mxu0
    %830 = vmatprep.mubr.bf16.mxu0 0
    %831 = vmatmul.mubr.bf16.gmra.mxu0 %v723
    %v832 = vpop.f32.mrf.mxu0
    %v833 = vadd.f32 0.0, %v832
    %v834 = vpop.f32.mrf.mxu0
    %v835 = vpop.f32.mrf.mxu0
    %v836 = vadd.f32 0.0, %v835
    %v837 = vpop.f32.mrf.mxu0
    %838 = vmatprep.mubr.bf16.mxu0 0
    %839 = vmatmul.mubr.bf16.gmra.mxu0 %v724
    %v840 = vpop.f32.mrf.mxu0
    %v841 = vadd.f32 0.0, %v840
    %v842 = vpop.f32.mrf.mxu0
    %v843 = vpop.f32.mrf.mxu0
    %v844 = vadd.f32 0.0, %v843
    %v845 = vpop.f32.mrf.mxu0
    %846 = vdwg.mxu0
    %v847 = vadd.f32 %v700, %v825
    %v848 = vadd.f32 %v703, %v828
    %v849 = vadd.f32 %v708, %v833
    %v850 = vadd.f32 %v711, %v836
    %v851 = vadd.f32 %v716, %v841
    %v852 = vadd.f32 %v719, %v844
    %v853 = vld [vmem:[%s6] sm:$0x1]
    %v855 = vlaneseq
    %v856 = vshrl.u32 %v855, 7
    %v857 = vsub.s32 0, %v856
    %v858 = vrot.slane %v853, %v857
    %v860 = vadd.f32 %v847, %v858
    %v861 = vadd.f32 %v848, %v858
    %v862 = vadd.f32 %v849, %v858
    %v863 = vadd.f32 %v850, %v858
    %v864 = vadd.f32 %v851, %v858
    %v865 = vadd.f32 %v852, %v858
    %v866 = vmax.f32 %v860, 0.0
    %v867 = vmax.f32 %v861, 0.0
    %v868 = vmax.f32 %v862, 0.0
    %v869 = vmax.f32 %v863, 0.0
    %v870 = vmax.f32 %v864, 0.0
    %v871 = vmax.f32 %v865, 0.0
    %v872 = vpack.c.bf16 %v867, %v866
    %v873 = vpack.c.bf16 %v869, %v868
    %v874 = vpack.c.bf16 %v871, %v870
    %v875 = vld [vmem:[#allocation7] sm:$0xf]
    %v876 = vld [vmem:[#allocation7 + $0x4] sm:$0xf]
    %v877 = vld [vmem:[#allocation7 + $0x8] sm:$0xf]
    %v878 = vld [vmem:[#allocation7 + $0xc] sm:$0xf]
    %v879 = vld [vmem:[#allocation7 + $0x10] sm:$0xf]
    %v880 = vld [vmem:[#allocation7 + $0x14] sm:$0xf]
    %v881 = vld [vmem:[#allocation7 + $0x18] sm:$0xf]
    %v882 = vld [vmem:[#allocation7 + $0x1c] sm:$0xf]
    %v883 = vld [vmem:[#allocation7 + $0x20] sm:$0xf]
    %v884 = vld [vmem:[#allocation7 + $0x24] sm:$0xf]
    %v885 = vld [vmem:[#allocation7 + $0x28] sm:$0xf]
    %v886 = vld [vmem:[#allocation7 + $0x2c] sm:$0xf]
    %v887 = vld [vmem:[#allocation7 + $0x30] sm:$0xf]
    %v888 = vld [vmem:[#allocation7 + $0x34] sm:$0xf]
    %v889 = vld [vmem:[#allocation7 + $0x38] sm:$0xf]
    %v890 = vld [vmem:[#allocation7 + $0x3c] sm:$0xf]
    %v907 = vunpack.c.l.b16 %v875
    %v908 = vunpack.c.l.b16 %v876
    %v909 = vunpack.c.l.b16 %v877
    %v910 = vunpack.c.l.b16 %v878
    %v911 = vunpack.c.l.b16 %v879
    %v912 = vunpack.c.l.b16 %v880
    %v913 = vunpack.c.l.b16 %v881
    %v914 = vunpack.c.l.b16 %v882
    %v915 = vunpack.c.l.b16 %v883
    %v916 = vunpack.c.l.b16 %v884
    %v917 = vunpack.c.l.b16 %v885
    %v918 = vunpack.c.l.b16 %v886
    %v919 = vunpack.c.l.b16 %v887
    %v920 = vunpack.c.l.b16 %v888
    %v921 = vunpack.c.l.b16 %v889
    %v922 = vunpack.c.l.b16 %v890
    %v923 = vpack.c.b16 %v908, %v907
    %v924 = vpack.c.b16 %v910, %v909
    %v925 = vpack.c.b16 %v912, %v911
    %v926 = vpack.c.b16 %v914, %v913
    %v927 = vpack.c.b16 %v916, %v915
    %v928 = vpack.c.b16 %v918, %v917
    %v929 = vpack.c.b16 %v920, %v919
    %v930 = vpack.c.b16 %v922, %v921
    %939 = vmatprep.subr.bf16.mxu0 0
    %940 = vmatpush1.bf16.msra.mxu0 %v930
    %941 = vmatprep.subr.bf16.mxu0 0
    %942 = vmatpush1.bf16.msra.mxu0 %v929
    %943 = vmatprep.subr.bf16.mxu0 0
    %944 = vmatpush1.bf16.msra.mxu0 %v928
    %945 = vmatprep.subr.bf16.mxu0 0
    %946 = vmatpush1.bf16.msra.mxu0 %v927
    %947 = vmatprep.subr.bf16.mxu0 0
    %948 = vmatpush1.bf16.msra.mxu0 %v926
    %949 = vmatprep.subr.bf16.mxu0 0
    %950 = vmatpush1.bf16.msra.mxu0 %v925
    %951 = vmatprep.subr.bf16.mxu0 0
    %952 = vmatpush1.bf16.msra.mxu0 %v924
    %953 = vmatprep.subr.bf16.mxu0 0
    %954 = vmatpush1.bf16.msra.mxu0 %v923
    %955 = vmatprep.subr.bf16.mxu0 0
    %956 = vmatpush2.bf16.msra.mxu0 0
    %957 = vmatprep.subr.bf16.mxu0 0
    %958 = vmatpush2.bf16.msra.mxu0 0
    %959 = vmatprep.subr.bf16.mxu0 0
    %960 = vmatpush2.bf16.msra.mxu0 0
    %961 = vmatprep.subr.bf16.mxu0 0
    %962 = vmatpush2.bf16.msra.mxu0 0
    %963 = vmatprep.subr.bf16.mxu0 0
    %964 = vmatpush2.bf16.msra.mxu0 0
    %965 = vmatprep.subr.bf16.mxu0 0
    %966 = vmatpush2.bf16.msra.mxu0 0
    %967 = vmatprep.subr.bf16.mxu0 0
    %968 = vmatpush2.bf16.msra.mxu0 0
    %969 = vmatprep.subr.bf16.mxu0 0
    %970 = vmatpush2.bf16.msra.mxu0 0
    %971 = vmatprep.mubr.bf16.mxu0 0
    %972 = vmatmul.mubr.bf16.gmra.mxu0 %v872
    %v973 = vpop.f32.mrf.mxu0
    %v974 = vadd.f32 0.0, %v973
    %v975 = vpop.f32.mrf.mxu0
    %v976 = vpop.f32.mrf.mxu0
    %v977 = vadd.f32 0.0, %v976
    %v978 = vpop.f32.mrf.mxu0
    %979 = vmatprep.mubr.bf16.mxu0 0
    %980 = vmatmul.mubr.bf16.gmra.mxu0 %v873
    %v981 = vpop.f32.mrf.mxu0
    %v982 = vadd.f32 0.0, %v981
    %v983 = vpop.f32.mrf.mxu0
    %v984 = vpop.f32.mrf.mxu0
    %v985 = vadd.f32 0.0, %v984
    %v986 = vpop.f32.mrf.mxu0
    %987 = vmatprep.mubr.bf16.mxu0 0
    %988 = vmatmul.mubr.bf16.gmra.mxu0 %v874
    %v989 = vpop.f32.mrf.mxu0
    %v990 = vadd.f32 0.0, %v989
    %v991 = vpop.f32.mrf.mxu0
    %v992 = vpop.f32.mrf.mxu0
    %v993 = vadd.f32 0.0, %v992
    %v994 = vpop.f32.mrf.mxu0
    %995 = vdwg.mxu0
    %v996 = vadd.f32 %v141, %v974
    %v997 = vadd.f32 %v144, %v977
    %v998 = vadd.f32 %v149, %v982
    %v999 = vadd.f32 %v152, %v985
    %v1000 = vadd.f32 %v157, %v990
    %v1001 = vadd.f32 %v160, %v993
    %v1002 = vld [vmem:[%s8] sm:$0x1]
    %v1004 = vlaneseq
    %v1005 = vshrl.u32 %v1004, 7
    %v1006 = vsub.s32 0, %v1005
    %v1007 = vrot.slane %v1002, %v1006
    %v1009 = vadd.f32 %v996, %v1007
    %v1010 = vadd.f32 %v997, %v1007
    %v1011 = vadd.f32 %v998, %v1007
    %v1012 = vadd.f32 %v999, %v1007
    %v1013 = vadd.f32 %v1000, %v1007
    %v1014 = vadd.f32 %v1001, %v1007
    %v1015 = vmax.f32 %v1009, 0.0
    %v1016 = vmax.f32 %v1010, 0.0
    %v1017 = vmax.f32 %v1011, 0.0
    %v1018 = vmax.f32 %v1012, 0.0
    %v1019 = vmax.f32 %v1013, 0.0
    %v1020 = vmax.f32 %v1014, 0.0
    %v1021 = vpack.c.bf16 %v1016, %v1015
    %v1022 = vpack.c.bf16 %v1018, %v1017
    %v1023 = vpack.c.bf16 %v1020, %v1019
    %s1024 = scalar_lea.vmem [#allocation2], 64
    %v1025 = vld [vmem:[%s1024] sm:$0xf]
    %v1026 = vld [vmem:[%s1024 + $0x4] sm:$0xf]
    %v1027 = vld [vmem:[%s1024 + $0x8] sm:$0xf]
    %v1028 = vld [vmem:[%s1024 + $0xc] sm:$0xf]
    %v1029 = vld [vmem:[%s1024 + $0x10] sm:$0xf]
    %v1030 = vld [vmem:[%s1024 + $0x14] sm:$0xf]
    %v1031 = vld [vmem:[%s1024 + $0x18] sm:$0xf]
    %v1032 = vld [vmem:[%s1024 + $0x1c] sm:$0xf]
    %v1033 = vld [vmem:[%s1024 + $0x20] sm:$0xf]
    %v1034 = vld [vmem:[%s1024 + $0x24] sm:$0xf]
    %v1035 = vld [vmem:[%s1024 + $0x28] sm:$0xf]
    %v1036 = vld [vmem:[%s1024 + $0x2c] sm:$0xf]
    %v1037 = vld [vmem:[%s1024 + $0x30] sm:$0xf]
    %v1038 = vld [vmem:[%s1024 + $0x34] sm:$0xf]
    %v1039 = vld [vmem:[%s1024 + $0x38] sm:$0xf]
    %v1040 = vld [vmem:[%s1024 + $0x3c] sm:$0xf]
    %s1041 = scalar_lea.vmem %s4, 1
    %v1042 = vld [vmem:[%s1041] sm:$0x1]
    %v1044 = vlaneseq
    %v1045 = vshrl.u32 %v1044, 7
    %v1046 = vsub.s32 0, %v1045
    %v1047 = vrot.slane %v1042, %v1046
    %v1065 = vunpack.c.l.b16 %v1025
    %v1066 = vunpack.c.l.b16 %v1026
    %v1067 = vunpack.c.l.b16 %v1027
    %v1068 = vunpack.c.l.b16 %v1028
    %v1069 = vunpack.c.l.b16 %v1029
    %v1070 = vunpack.c.l.b16 %v1030
    %v1071 = vunpack.c.l.b16 %v1031
    %v1072 = vunpack.c.l.b16 %v1032
    %v1073 = vunpack.c.l.b16 %v1033
    %v1074 = vunpack.c.l.b16 %v1034
    %v1075 = vunpack.c.l.b16 %v1035
    %v1076 = vunpack.c.l.b16 %v1036
    %v1077 = vunpack.c.l.b16 %v1037
    %v1078 = vunpack.c.l.b16 %v1038
    %v1079 = vunpack.c.l.b16 %v1039
    %v1080 = vunpack.c.l.b16 %v1040
    %v1081 = vpack.c.b16 %v1066, %v1065
    %v1082 = vpack.c.b16 %v1068, %v1067
    %v1083 = vpack.c.b16 %v1070, %v1069
    %v1084 = vpack.c.b16 %v1072, %v1071
    %v1085 = vpack.c.b16 %v1074, %v1073
    %v1086 = vpack.c.b16 %v1076, %v1075
    %v1087 = vpack.c.b16 %v1078, %v1077
    %v1088 = vpack.c.b16 %v1080, %v1079
    %1097 = vmatprep.subr.bf16.mxu0 0
    %1098 = vmatpush1.bf16.msra.mxu0 %v1088
    %1099 = vmatprep.subr.bf16.mxu0 0
    %1100 = vmatpush1.bf16.msra.mxu0 %v1087
    %1101 = vmatprep.subr.bf16.mxu0 0
    %1102 = vmatpush1.bf16.msra.mxu0 %v1086
    %1103 = vmatprep.subr.bf16.mxu0 0
    %1104 = vmatpush1.bf16.msra.mxu0 %v1085
    %1105 = vmatprep.subr.bf16.mxu0 0
    %1106 = vmatpush1.bf16.msra.mxu0 %v1084
    %1107 = vmatprep.subr.bf16.mxu0 0
    %1108 = vmatpush1.bf16.msra.mxu0 %v1083
    %1109 = vmatprep.subr.bf16.mxu0 0
    %1110 = vmatpush1.bf16.msra.mxu0 %v1082
    %1111 = vmatprep.subr.bf16.mxu0 0
    %1112 = vmatpush1.bf16.msra.mxu0 %v1081
    %1113 = vmatprep.subr.bf16.mxu0 0
    %1114 = vmatpush2.bf16.msra.mxu0 0
    %1115 = vmatprep.subr.bf16.mxu0 0
    %1116 = vmatpush2.bf16.msra.mxu0 0
    %1117 = vmatprep.subr.bf16.mxu0 0
    %1118 = vmatpush2.bf16.msra.mxu0 0
    %1119 = vmatprep.subr.bf16.mxu0 0
    %1120 = vmatpush2.bf16.msra.mxu0 0
    %1121 = vmatprep.subr.bf16.mxu0 0
    %1122 = vmatpush2.bf16.msra.mxu0 0
    %1123 = vmatprep.subr.bf16.mxu0 0
    %1124 = vmatpush2.bf16.msra.mxu0 0
    %1125 = vmatprep.subr.bf16.mxu0 0
    %1126 = vmatpush2.bf16.msra.mxu0 0
    %1127 = vmatprep.subr.bf16.mxu0 0
    %1128 = vmatpush2.bf16.msra.mxu0 0
    %1129 = vmatprep.mubr.bf16.mxu0 0
    %1130 = vmatmul.mubr.bf16.gmra.mxu0 %v1021
    %v1131 = vpop.f32.mrf.mxu0
    %v1132 = vadd.f32 %v1047, %v1131
    %v1133 = vpop.f32.mrf.mxu0
    %v1134 = vpop.f32.mrf.mxu0
    %v1135 = vadd.f32 %v1047, %v1134
    %v1136 = vpop.f32.mrf.mxu0
    %1137 = vmatprep.mubr.bf16.mxu0 0
    %1138 = vmatmul.mubr.bf16.gmra.mxu0 %v1022
    %v1139 = vpop.f32.mrf.mxu0
    %v1140 = vadd.f32 %v1047, %v1139
    %v1141 = vpop.f32.mrf.mxu0
    %v1142 = vpop.f32.mrf.mxu0
    %v1143 = vadd.f32 %v1047, %v1142
    %v1144 = vpop.f32.mrf.mxu0
    %1145 = vmatprep.mubr.bf16.mxu0 0
    %1146 = vmatmul.mubr.bf16.gmra.mxu0 %v1023
    %v1147 = vpop.f32.mrf.mxu0
    %v1148 = vadd.f32 %v1047, %v1147
    %v1149 = vpop.f32.mrf.mxu0
    %v1150 = vpop.f32.mrf.mxu0
    %v1151 = vadd.f32 %v1047, %v1150
    %v1152 = vpop.f32.mrf.mxu0
    %1153 = vdwg.mxu0
    %v1154 = vmax.f32 %v1132, 0.0
    %v1155 = vmax.f32 %v1135, 0.0
    %v1156 = vmax.f32 %v1140, 0.0
    %v1157 = vmax.f32 %v1143, 0.0
    %v1158 = vmax.f32 %v1148, 0.0
    %v1159 = vmax.f32 %v1151, 0.0
    %vm1160 = vcmp.ge.s32.totalorder %v250, 2
    %vm1161 = vcmp.ge.s32.totalorder %v251, 2
    %vm1162 = vcmp.ge.s32.totalorder %v252, 2
    %vm1163 = vcmp.ge.s32.totalorder %v253, 2
    %vm1164 = vcmp.ge.s32.totalorder %v254, 2
    %vm1165 = vcmp.ge.s32.totalorder %v255, 2
    %v1166 = vrot.slane %v1154, 6
    %v1167 = vrot.slane %v1155, 6
    %v1168 = vrot.slane %v1156, 6
    %v1169 = vrot.slane %v1157, 6
    %v1170 = vrot.slane %v1158, 6
    %v1171 = vrot.slane %v1159, 6
    %vm1172 = vcmp.lt.s32.totalorder %v164, 2
    %v1173 = vsel %vm1172, %v1170, %v1171
    %v1174 = vsel %vm1172, %v1169, %v1170
    %v1175 = vsel %vm1172, %v1168, %v1169
    %v1176 = vsel %vm1172, %v1167, %v1168
    %v1177 = vsel %vm1172, %v1166, %v1167
    %v1178 = vsel %vm1172, %v1171, %v1166
    %v1179 = vsel %vm1160, 1, 0
    %v1180 = vsel %vm1161, 1, 0
    %v1181 = vsel %vm1162, 1, 0
    %v1182 = vsel %vm1163, 1, 0
    %v1183 = vsel %vm1164, 1, 0
    %v1184 = vsel %vm1165, 1, 0
    %vm1185 = vcmp.eq.s32.totalorder %v1179, 1
    %vm1186 = vcmp.eq.s32.totalorder %v1180, 1
    %vm1187 = vcmp.eq.s32.totalorder %v1181, 1
    %vm1188 = vcmp.eq.s32.totalorder %v1182, 1
    %vm1189 = vcmp.eq.s32.totalorder %v1183, 1
    %vm1190 = vcmp.eq.s32.totalorder %v1184, 1
    %v1191 = vsel %vm1185, %v1178, 0.0
    %v1192 = vsel %vm1186, %v1177, 0.0
    %v1193 = vsel %vm1187, %v1176, 0.0
    %v1194 = vsel %vm1188, %v1175, 0.0
    %v1195 = vsel %vm1189, %v1174, 0.0
    %v1196 = vsel %vm1190, %v1173, 0.0
    %vm1197 = vcmp.lt.s32.totalorder %v250, 14
    %vm1198 = vcmp.lt.s32.totalorder %v251, 14
    %vm1199 = vcmp.lt.s32.totalorder %v252, 14
    %vm1200 = vcmp.lt.s32.totalorder %v253, 14
    %vm1201 = vcmp.lt.s32.totalorder %v254, 14
    %vm1202 = vcmp.lt.s32.totalorder %v255, 14
    %v1203 = vrot.slane %v1154, 2
    %v1204 = vrot.slane %v1155, 2
    %v1205 = vrot.slane %v1156, 2
    %v1206 = vrot.slane %v1157, 2
    %v1207 = vrot.slane %v1158, 2
    %v1208 = vrot.slane %v1159, 2
    %vm1209 = vcmp.lt.s32.totalorder %v164, 6
    %v1210 = vsel %vm1209, %v1207, %v1208
    %v1211 = vsel %vm1209, %v1206, %v1207
    %v1212 = vsel %vm1209, %v1205, %v1206
    %v1213 = vsel %vm1209, %v1204, %v1205
    %v1214 = vsel %vm1209, %v1203, %v1204
    %v1215 = vsel %vm1209, %v1208, %v1203
    %v1216 = vsel %vm1197, 1, 0
    %v1217 = vsel %vm1198, 1, 0
    %v1218 = vsel %vm1199, 1, 0
    %v1219 = vsel %vm1200, 1, 0
    %v1220 = vsel %vm1201, 1, 0
    %v1221 = vsel %vm1202, 1, 0
    %vm1222 = vcmp.eq.s32.totalorder %v1216, 1
    %vm1223 = vcmp.eq.s32.totalorder %v1217, 1
    %vm1224 = vcmp.eq.s32.totalorder %v1218, 1
    %vm1225 = vcmp.eq.s32.totalorder %v1219, 1
    %vm1226 = vcmp.eq.s32.totalorder %v1220, 1
    %vm1227 = vcmp.eq.s32.totalorder %v1221, 1
    %v1228 = vsel %vm1222, %v1214, 0.0
    %v1229 = vsel %vm1223, %v1213, 0.0
    %v1230 = vsel %vm1224, %v1212, 0.0
    %v1231 = vsel %vm1225, %v1211, 0.0
    %v1232 = vsel %vm1226, %v1210, 0.0
    %v1233 = vsel %vm1227, %v1215, 0.0
    %v1234 = vpack.c.bf16 %v1155, %v1154
    %v1235 = vpack.c.bf16 %v1157, %v1156
    %v1236 = vpack.c.bf16 %v1159, %v1158
    %s1237 = scalar_lea.vmem [#allocation5], 256
    %v1238 = vld [vmem:[%s1237] sm:$0xf]
    %v1239 = vld [vmem:[%s1237 + $0x4] sm:$0xf]
    %v1240 = vld [vmem:[%s1237 + $0x8] sm:$0xf]
    %v1241 = vld [vmem:[%s1237 + $0xc] sm:$0xf]
    %v1242 = vld [vmem:[%s1237 + $0x10] sm:$0xf]
    %v1243 = vld [vmem:[%s1237 + $0x14] sm:$0xf]
    %v1244 = vld [vmem:[%s1237 + $0x18] sm:$0xf]
    %v1245 = vld [vmem:[%s1237 + $0x1c] sm:$0xf]
    %v1246 = vld [vmem:[%s1237 + $0x20] sm:$0xf]
    %v1247 = vld [vmem:[%s1237 + $0x24] sm:$0xf]
    %v1248 = vld [vmem:[%s1237 + $0x28] sm:$0xf]
    %v1249 = vld [vmem:[%s1237 + $0x2c] sm:$0xf]
    %v1250 = vld [vmem:[%s1237 + $0x30] sm:$0xf]
    %v1251 = vld [vmem:[%s1237 + $0x34] sm:$0xf]
    %v1252 = vld [vmem:[%s1237 + $0x38] sm:$0xf]
    %v1253 = vld [vmem:[%s1237 + $0x3c] sm:$0xf]
    %v1254 = vpack.c.bf16 %v1192, %v1191
    %v1255 = vpack.c.bf16 %v1194, %v1193
    %v1256 = vpack.c.bf16 %v1196, %v1195
    %s1257 = scalar_lea.vmem [#allocation5], 192
    %v1258 = vld [vmem:[%s1257] sm:$0xf]
    %v1259 = vld [vmem:[%s1257 + $0x4] sm:$0xf]
    %v1260 = vld [vmem:[%s1257 + $0x8] sm:$0xf]
    %v1261 = vld [vmem:[%s1257 + $0xc] sm:$0xf]
    %v1262 = vld [vmem:[%s1257 + $0x10] sm:$0xf]
    %v1263 = vld [vmem:[%s1257 + $0x14] sm:$0xf]
    %v1264 = vld [vmem:[%s1257 + $0x18] sm:$0xf]
    %v1265 = vld [vmem:[%s1257 + $0x1c] sm:$0xf]
    %v1266 = vld [vmem:[%s1257 + $0x20] sm:$0xf]
    %v1267 = vld [vmem:[%s1257 + $0x24] sm:$0xf]
    %v1268 = vld [vmem:[%s1257 + $0x28] sm:$0xf]
    %v1269 = vld [vmem:[%s1257 + $0x2c] sm:$0xf]
    %v1270 = vld [vmem:[%s1257 + $0x30] sm:$0xf]
    %v1271 = vld [vmem:[%s1257 + $0x34] sm:$0xf]
    %v1272 = vld [vmem:[%s1257 + $0x38] sm:$0xf]
    %v1273 = vld [vmem:[%s1257 + $0x3c] sm:$0xf]
    %v1290 = vunpack.c.l.b16 %v1258
    %v1291 = vunpack.c.l.b16 %v1259
    %v1292 = vunpack.c.l.b16 %v1260
    %v1293 = vunpack.c.l.b16 %v1261
    %v1294 = vunpack.c.l.b16 %v1262
    %v1295 = vunpack.c.l.b16 %v1263
    %v1296 = vunpack.c.l.b16 %v1264
    %v1297 = vunpack.c.l.b16 %v1265
    %v1298 = vunpack.c.l.b16 %v1266
    %v1299 = vunpack.c.l.b16 %v1267
    %v1300 = vunpack.c.l.b16 %v1268
    %v1301 = vunpack.c.l.b16 %v1269
    %v1302 = vunpack.c.l.b16 %v1270
    %v1303 = vunpack.c.l.b16 %v1271
    %v1304 = vunpack.c.l.b16 %v1272
    %v1305 = vunpack.c.l.b16 %v1273
    %v1306 = vpack.c.b16 %v1291, %v1290
    %v1307 = vpack.c.b16 %v1293, %v1292
    %v1308 = vpack.c.b16 %v1295, %v1294
    %v1309 = vpack.c.b16 %v1297, %v1296
    %v1310 = vpack.c.b16 %v1299, %v1298
    %v1311 = vpack.c.b16 %v1301, %v1300
    %v1312 = vpack.c.b16 %v1303, %v1302
    %v1313 = vpack.c.b16 %v1305, %v1304
    %1322 = vmatprep.subr.bf16.mxu0 0
    %1323 = vmatpush1.bf16.msra.mxu0 %v1313
    %1324 = vmatprep.subr.bf16.mxu0 0
    %1325 = vmatpush1.bf16.msra.mxu0 %v1312
    %1326 = vmatprep.subr.bf16.mxu0 0
    %1327 = vmatpush1.bf16.msra.mxu0 %v1311
    %1328 = vmatprep.subr.bf16.mxu0 0
    %1329 = vmatpush1.bf16.msra.mxu0 %v1310
    %1330 = vmatprep.subr.bf16.mxu0 0
    %1331 = vmatpush1.bf16.msra.mxu0 %v1309
    %1332 = vmatprep.subr.bf16.mxu0 0
    %1333 = vmatpush1.bf16.msra.mxu0 %v1308
    %1334 = vmatprep.subr.bf16.mxu0 0
    %1335 = vmatpush1.bf16.msra.mxu0 %v1307
    %1336 = vmatprep.subr.bf16.mxu0 0
    %1337 = vmatpush1.bf16.msra.mxu0 %v1306
    %1338 = vmatprep.subr.bf16.mxu0 0
    %1339 = vmatpush2.bf16.msra.mxu0 0
    %1340 = vmatprep.subr.bf16.mxu0 0
    %1341 = vmatpush2.bf16.msra.mxu0 0
    %1342 = vmatprep.subr.bf16.mxu0 0
    %1343 = vmatpush2.bf16.msra.mxu0 0
    %1344 = vmatprep.subr.bf16.mxu0 0
    %1345 = vmatpush2.bf16.msra.mxu0 0
    %1346 = vmatprep.subr.bf16.mxu0 0
    %1347 = vmatpush2.bf16.msra.mxu0 0
    %1348 = vmatprep.subr.bf16.mxu0 0
    %1349 = vmatpush2.bf16.msra.mxu0 0
    %1350 = vmatprep.subr.bf16.mxu0 0
    %1351 = vmatpush2.bf16.msra.mxu0 0
    %1352 = vmatprep.subr.bf16.mxu0 0
    %1353 = vmatpush2.bf16.msra.mxu0 0
    %1354 = vmatprep.mubr.bf16.mxu0 0
    %1355 = vmatmul.mubr.bf16.gmra.mxu0 %v1254
    %v1356 = vpop.f32.mrf.mxu0
    %v1357 = vadd.f32 0.0, %v1356
    %v1358 = vpop.f32.mrf.mxu0
    %v1359 = vpop.f32.mrf.mxu0
    %v1360 = vadd.f32 0.0, %v1359
    %v1361 = vpop.f32.mrf.mxu0
    %1362 = vmatprep.mubr.bf16.mxu0 0
    %1363 = vmatmul.mubr.bf16.gmra.mxu0 %v1255
    %v1364 = vpop.f32.mrf.mxu0
    %v1365 = vadd.f32 0.0, %v1364
    %v1366 = vpop.f32.mrf.mxu0
    %v1367 = vpop.f32.mrf.mxu0
    %v1368 = vadd.f32 0.0, %v1367
    %v1369 = vpop.f32.mrf.mxu0
    %1370 = vmatprep.mubr.bf16.mxu0 0
    %1371 = vmatmul.mubr.bf16.gmra.mxu0 %v1256
    %v1372 = vpop.f32.mrf.mxu0
    %v1373 = vadd.f32 0.0, %v1372
    %v1374 = vpop.f32.mrf.mxu0
    %v1375 = vpop.f32.mrf.mxu0
    %v1376 = vadd.f32 0.0, %v1375
    %v1377 = vpop.f32.mrf.mxu0
    %1378 = vdwg.mxu0
    %v1395 = vunpack.c.l.b16 %v1238
    %v1396 = vunpack.c.l.b16 %v1239
    %v1397 = vunpack.c.l.b16 %v1240
    %v1398 = vunpack.c.l.b16 %v1241
    %v1399 = vunpack.c.l.b16 %v1242
    %v1400 = vunpack.c.l.b16 %v1243
    %v1401 = vunpack.c.l.b16 %v1244
    %v1402 = vunpack.c.l.b16 %v1245
    %v1403 = vunpack.c.l.b16 %v1246
    %v1404 = vunpack.c.l.b16 %v1247
    %v1405 = vunpack.c.l.b16 %v1248
    %v1406 = vunpack.c.l.b16 %v1249
    %v1407 = vunpack.c.l.b16 %v1250
    %v1408 = vunpack.c.l.b16 %v1251
    %v1409 = vunpack.c.l.b16 %v1252
    %v1410 = vunpack.c.l.b16 %v1253
    %v1411 = vpack.c.b16 %v1396, %v1395
    %v1412 = vpack.c.b16 %v1398, %v1397
    %v1413 = vpack.c.b16 %v1400, %v1399
    %v1414 = vpack.c.b16 %v1402, %v1401
    %v1415 = vpack.c.b16 %v1404, %v1403
    %v1416 = vpack.c.b16 %v1406, %v1405
    %v1417 = vpack.c.b16 %v1408, %v1407
    %v1418 = vpack.c.b16 %v1410, %v1409
    %1427 = vmatprep.subr.bf16.mxu0 0
    %1428 = vmatpush1.bf16.msra.mxu0 %v1418
    %1429 = vmatprep.subr.bf16.mxu0 0
    %1430 = vmatpush1.bf16.msra.mxu0 %v1417
    %1431 = vmatprep.subr.bf16.mxu0 0
    %1432 = vmatpush1.bf16.msra.mxu0 %v1416
    %1433 = vmatprep.subr.bf16.mxu0 0
    %1434 = vmatpush1.bf16.msra.mxu0 %v1415
    %1435 = vmatprep.subr.bf16.mxu0 0
    %1436 = vmatpush1.bf16.msra.mxu0 %v1414
    %1437 = vmatprep.subr.bf16.mxu0 0
    %1438 = vmatpush1.bf16.msra.mxu0 %v1413
    %1439 = vmatprep.subr.bf16.mxu0 0
    %1440 = vmatpush1.bf16.msra.mxu0 %v1412
    %1441 = vmatprep.subr.bf16.mxu0 0
    %1442 = vmatpush1.bf16.msra.mxu0 %v1411
    %1443 = vmatprep.subr.bf16.mxu0 0
    %1444 = vmatpush2.bf16.msra.mxu0 0
    %1445 = vmatprep.subr.bf16.mxu0 0
    %1446 = vmatpush2.bf16.msra.mxu0 0
    %1447 = vmatprep.subr.bf16.mxu0 0
    %1448 = vmatpush2.bf16.msra.mxu0 0
    %1449 = vmatprep.subr.bf16.mxu0 0
    %1450 = vmatpush2.bf16.msra.mxu0 0
    %1451 = vmatprep.subr.bf16.mxu0 0
    %1452 = vmatpush2.bf16.msra.mxu0 0
    %1453 = vmatprep.subr.bf16.mxu0 0
    %1454 = vmatpush2.bf16.msra.mxu0 0
    %1455 = vmatprep.subr.bf16.mxu0 0
    %1456 = vmatpush2.bf16.msra.mxu0 0
    %1457 = vmatprep.subr.bf16.mxu0 0
    %1458 = vmatpush2.bf16.msra.mxu0 0
    %1459 = vmatprep.mubr.bf16.mxu0 0
    %1460 = vmatmul.mubr.bf16.gmra.mxu0 %v1234
    %v1461 = vpop.f32.mrf.mxu0
    %v1462 = vadd.f32 %v1357, %v1461
    %v1463 = vpop.f32.mrf.mxu0
    %v1464 = vpop.f32.mrf.mxu0
    %v1465 = vadd.f32 %v1360, %v1464
    %v1466 = vpop.f32.mrf.mxu0
    %1467 = vmatprep.mubr.bf16.mxu0 0
    %1468 = vmatmul.mubr.bf16.gmra.mxu0 %v1235
    %v1469 = vpop.f32.mrf.mxu0
    %v1470 = vadd.f32 %v1365, %v1469
    %v1471 = vpop.f32.mrf.mxu0
    %v1472 = vpop.f32.mrf.mxu0
    %v1473 = vadd.f32 %v1368, %v1472
    %v1474 = vpop.f32.mrf.mxu0
    %1475 = vmatprep.mubr.bf16.mxu0 0
    %1476 = vmatmul.mubr.bf16.gmra.mxu0 %v1236
    %v1477 = vpop.f32.mrf.mxu0
    %v1478 = vadd.f32 %v1373, %v1477
    %v1479 = vpop.f32.mrf.mxu0
    %v1480 = vpop.f32.mrf.mxu0
    %v1481 = vadd.f32 %v1376, %v1480
    %v1482 = vpop.f32.mrf.mxu0
    %1483 = vdwg.mxu0
    %v1484 = vpack.c.bf16 %v1229, %v1228
    %v1485 = vpack.c.bf16 %v1231, %v1230
    %v1486 = vpack.c.bf16 %v1233, %v1232
    %s1487 = scalar_lea.vmem [#allocation5], 320
    %v1488 = vld [vmem:[%s1487] sm:$0xf]
    %v1489 = vld [vmem:[%s1487 + $0x4] sm:$0xf]
    %v1490 = vld [vmem:[%s1487 + $0x8] sm:$0xf]
    %v1491 = vld [vmem:[%s1487 + $0xc] sm:$0xf]
    %v1492 = vld [vmem:[%s1487 + $0x10] sm:$0xf]
    %v1493 = vld [vmem:[%s1487 + $0x14] sm:$0xf]
    %v1494 = vld [vmem:[%s1487 + $0x18] sm:$0xf]
    %v1495 = vld [vmem:[%s1487 + $0x1c] sm:$0xf]
    %v1496 = vld [vmem:[%s1487 + $0x20] sm:$0xf]
    %v1497 = vld [vmem:[%s1487 + $0x24] sm:$0xf]
    %v1498 = vld [vmem:[%s1487 + $0x28] sm:$0xf]
    %v1499 = vld [vmem:[%s1487 + $0x2c] sm:$0xf]
    %v1500 = vld [vmem:[%s1487 + $0x30] sm:$0xf]
    %v1501 = vld [vmem:[%s1487 + $0x34] sm:$0xf]
    %v1502 = vld [vmem:[%s1487 + $0x38] sm:$0xf]
    %v1503 = vld [vmem:[%s1487 + $0x3c] sm:$0xf]
    %v1520 = vunpack.c.l.b16 %v1488
    %v1521 = vunpack.c.l.b16 %v1489
    %v1522 = vunpack.c.l.b16 %v1490
    %v1523 = vunpack.c.l.b16 %v1491
    %v1524 = vunpack.c.l.b16 %v1492
    %v1525 = vunpack.c.l.b16 %v1493
    %v1526 = vunpack.c.l.b16 %v1494
    %v1527 = vunpack.c.l.b16 %v1495
    %v1528 = vunpack.c.l.b16 %v1496
    %v1529 = vunpack.c.l.b16 %v1497
    %v1530 = vunpack.c.l.b16 %v1498
    %v1531 = vunpack.c.l.b16 %v1499
    %v1532 = vunpack.c.l.b16 %v1500
    %v1533 = vunpack.c.l.b16 %v1501
    %v1534 = vunpack.c.l.b16 %v1502
    %v1535 = vunpack.c.l.b16 %v1503
    %v1536 = vpack.c.b16 %v1521, %v1520
    %v1537 = vpack.c.b16 %v1523, %v1522
    %v1538 = vpack.c.b16 %v1525, %v1524
    %v1539 = vpack.c.b16 %v1527, %v1526
    %v1540 = vpack.c.b16 %v1529, %v1528
    %v1541 = vpack.c.b16 %v1531, %v1530
    %v1542 = vpack.c.b16 %v1533, %v1532
    %v1543 = vpack.c.b16 %v1535, %v1534
    %1552 = vmatprep.subr.bf16.mxu0 0
    %1553 = vmatpush1.bf16.msra.mxu0 %v1543
    %1554 = vmatprep.subr.bf16.mxu0 0
    %1555 = vmatpush1.bf16.msra.mxu0 %v1542
    %1556 = vmatprep.subr.bf16.mxu0 0
    %1557 = vmatpush1.bf16.msra.mxu0 %v1541
    %1558 = vmatprep.subr.bf16.mxu0 0
    %1559 = vmatpush1.bf16.msra.mxu0 %v1540
    %1560 = vmatprep.subr.bf16.mxu0 0
    %1561 = vmatpush1.bf16.msra.mxu0 %v1539
    %1562 = vmatprep.subr.bf16.mxu0 0
    %1563 = vmatpush1.bf16.msra.mxu0 %v1538
    %1564 = vmatprep.subr.bf16.mxu0 0
    %1565 = vmatpush1.bf16.msra.mxu0 %v1537
    %1566 = vmatprep.subr.bf16.mxu0 0
    %1567 = vmatpush1.bf16.msra.mxu0 %v1536
    %1568 = vmatprep.subr.bf16.mxu0 0
    %1569 = vmatpush2.bf16.msra.mxu0 0
    %1570 = vmatprep.subr.bf16.mxu0 0
    %1571 = vmatpush2.bf16.msra.mxu0 0
    %1572 = vmatprep.subr.bf16.mxu0 0
    %1573 = vmatpush2.bf16.msra.mxu0 0
    %1574 = vmatprep.subr.bf16.mxu0 0
    %1575 = vmatpush2.bf16.msra.mxu0 0
    %1576 = vmatprep.subr.bf16.mxu0 0
    %1577 = vmatpush2.bf16.msra.mxu0 0
    %1578 = vmatprep.subr.bf16.mxu0 0
    %1579 = vmatpush2.bf16.msra.mxu0 0
    %1580 = vmatprep.subr.bf16.mxu0 0
    %1581 = vmatpush2.bf16.msra.mxu0 0
    %1582 = vmatprep.subr.bf16.mxu0 0
    %1583 = vmatpush2.bf16.msra.mxu0 0
    %1584 = vmatprep.mubr.bf16.mxu0 0
    %1585 = vmatmul.mubr.bf16.gmra.mxu0 %v1484
    %v1586 = vpop.f32.mrf.mxu0
    %v1587 = vadd.f32 0.0, %v1586
    %v1588 = vpop.f32.mrf.mxu0
    %v1589 = vpop.f32.mrf.mxu0
    %v1590 = vadd.f32 0.0, %v1589
    %v1591 = vpop.f32.mrf.mxu0
    %1592 = vmatprep.mubr.bf16.mxu0 0
    %1593 = vmatmul.mubr.bf16.gmra.mxu0 %v1485
    %v1594 = vpop.f32.mrf.mxu0
    %v1595 = vadd.f32 0.0, %v1594
    %v1596 = vpop.f32.mrf.mxu0
    %v1597 = vpop.f32.mrf.mxu0
    %v1598 = vadd.f32 0.0, %v1597
    %v1599 = vpop.f32.mrf.mxu0
    %1600 = vmatprep.mubr.bf16.mxu0 0
    %1601 = vmatmul.mubr.bf16.gmra.mxu0 %v1486
    %v1602 = vpop.f32.mrf.mxu0
    %v1603 = vadd.f32 0.0, %v1602
    %v1604 = vpop.f32.mrf.mxu0
    %v1605 = vpop.f32.mrf.mxu0
    %v1606 = vadd.f32 0.0, %v1605
    %v1607 = vpop.f32.mrf.mxu0
    %1608 = vdwg.mxu0
    %v1609 = vadd.f32 %v1462, %v1587
    %v1610 = vadd.f32 %v1465, %v1590
    %v1611 = vadd.f32 %v1470, %v1595
    %v1612 = vadd.f32 %v1473, %v1598
    %v1613 = vadd.f32 %v1478, %v1603
    %v1614 = vadd.f32 %v1481, %v1606
    %s1615 = scalar_lea.vmem %s6, 1
    %v1616 = vld [vmem:[%s1615] sm:$0x1]
    %v1618 = vlaneseq
    %v1619 = vshrl.u32 %v1618, 7
    %v1620 = vsub.s32 0, %v1619
    %v1621 = vrot.slane %v1616, %v1620
    %v1623 = vadd.f32 %v1609, %v1621
    %v1624 = vadd.f32 %v1610, %v1621
    %v1625 = vadd.f32 %v1611, %v1621
    %v1626 = vadd.f32 %v1612, %v1621
    %v1627 = vadd.f32 %v1613, %v1621
    %v1628 = vadd.f32 %v1614, %v1621
    %v1629 = vmax.f32 %v1623, 0.0
    %v1630 = vmax.f32 %v1624, 0.0
    %v1631 = vmax.f32 %v1625, 0.0
    %v1632 = vmax.f32 %v1626, 0.0
    %v1633 = vmax.f32 %v1627, 0.0
    %v1634 = vmax.f32 %v1628, 0.0
    %v1635 = vpack.c.bf16 %v1630, %v1629
    %v1636 = vpack.c.bf16 %v1632, %v1631
    %v1637 = vpack.c.bf16 %v1634, %v1633
    %s1638 = scalar_lea.vmem [#allocation7], 64
    %v1639 = vld [vmem:[%s1638] sm:$0xf]
    %v1640 = vld [vmem:[%s1638 + $0x4] sm:$0xf]
    %v1641 = vld [vmem:[%s1638 + $0x8] sm:$0xf]
    %v1642 = vld [vmem:[%s1638 + $0xc] sm:$0xf]
    %v1643 = vld [vmem:[%s1638 + $0x10] sm:$0xf]
    %v1644 = vld [vmem:[%s1638 + $0x14] sm:$0xf]
    %v1645 = vld [vmem:[%s1638 + $0x18] sm:$0xf]
    %v1646 = vld [vmem:[%s1638 + $0x1c] sm:$0xf]
    %v1647 = vld [vmem:[%s1638 + $0x20] sm:$0xf]
    %v1648 = vld [vmem:[%s1638 + $0x24] sm:$0xf]
    %v1649 = vld [vmem:[%s1638 + $0x28] sm:$0xf]
    %v1650 = vld [vmem:[%s1638 + $0x2c] sm:$0xf]
    %v1651 = vld [vmem:[%s1638 + $0x30] sm:$0xf]
    %v1652 = vld [vmem:[%s1638 + $0x34] sm:$0xf]
    %v1653 = vld [vmem:[%s1638 + $0x38] sm:$0xf]
    %v1654 = vld [vmem:[%s1638 + $0x3c] sm:$0xf]
    %v1671 = vunpack.c.l.b16 %v1639
    %v1672 = vunpack.c.l.b16 %v1640
    %v1673 = vunpack.c.l.b16 %v1641
    %v1674 = vunpack.c.l.b16 %v1642
    %v1675 = vunpack.c.l.b16 %v1643
    %v1676 = vunpack.c.l.b16 %v1644
    %v1677 = vunpack.c.l.b16 %v1645
    %v1678 = vunpack.c.l.b16 %v1646
    %v1679 = vunpack.c.l.b16 %v1647
    %v1680 = vunpack.c.l.b16 %v1648
    %v1681 = vunpack.c.l.b16 %v1649
    %v1682 = vunpack.c.l.b16 %v1650
    %v1683 = vunpack.c.l.b16 %v1651
    %v1684 = vunpack.c.l.b16 %v1652
    %v1685 = vunpack.c.l.b16 %v1653
    %v1686 = vunpack.c.l.b16 %v1654
    %v1687 = vpack.c.b16 %v1672, %v1671
    %v1688 = vpack.c.b16 %v1674, %v1673
    %v1689 = vpack.c.b16 %v1676, %v1675
    %v1690 = vpack.c.b16 %v1678, %v1677
    %v1691 = vpack.c.b16 %v1680, %v1679
    %v1692 = vpack.c.b16 %v1682, %v1681
    %v1693 = vpack.c.b16 %v1684, %v1683
    %v1694 = vpack.c.b16 %v1686, %v1685
    %1703 = vmatprep.subr.bf16.mxu0 0
    %1704 = vmatpush1.bf16.msra.mxu0 %v1694
    %1705 = vmatprep.subr.bf16.mxu0 0
    %1706 = vmatpush1.bf16.msra.mxu0 %v1693
    %1707 = vmatprep.subr.bf16.mxu0 0
    %1708 = vmatpush1.bf16.msra.mxu0 %v1692
    %1709 = vmatprep.subr.bf16.mxu0 0
    %1710 = vmatpush1.bf16.msra.mxu0 %v1691
    %1711 = vmatprep.subr.bf16.mxu0 0
    %1712 = vmatpush1.bf16.msra.mxu0 %v1690
    %1713 = vmatprep.subr.bf16.mxu0 0
    %1714 = vmatpush1.bf16.msra.mxu0 %v1689
    %1715 = vmatprep.subr.bf16.mxu0 0
    %1716 = vmatpush1.bf16.msra.mxu0 %v1688
    %1717 = vmatprep.subr.bf16.mxu0 0
    %1718 = vmatpush1.bf16.msra.mxu0 %v1687
    %1719 = vmatprep.subr.bf16.mxu0 0
    %1720 = vmatpush2.bf16.msra.mxu0 0
    %1721 = vmatprep.subr.bf16.mxu0 0
    %1722 = vmatpush2.bf16.msra.mxu0 0
    %1723 = vmatprep.subr.bf16.mxu0 0
    %1724 = vmatpush2.bf16.msra.mxu0 0
    %1725 = vmatprep.subr.bf16.mxu0 0
    %1726 = vmatpush2.bf16.msra.mxu0 0
    %1727 = vmatprep.subr.bf16.mxu0 0
    %1728 = vmatpush2.bf16.msra.mxu0 0
    %1729 = vmatprep.subr.bf16.mxu0 0
    %1730 = vmatpush2.bf16.msra.mxu0 0
    %1731 = vmatprep.subr.bf16.mxu0 0
    %1732 = vmatpush2.bf16.msra.mxu0 0
    %1733 = vmatprep.subr.bf16.mxu0 0
    %1734 = vmatpush2.bf16.msra.mxu0 0
    %1735 = vmatprep.mubr.bf16.mxu0 0
    %1736 = vmatmul.mubr.bf16.gmra.mxu0 %v1635
    %v1737 = vpop.f32.mrf.mxu0
    %v1738 = vadd.f32 0.0, %v1737
    %v1739 = vpop.f32.mrf.mxu0
    %v1740 = vpop.f32.mrf.mxu0
    %v1741 = vadd.f32 0.0, %v1740
    %v1742 = vpop.f32.mrf.mxu0
    %1743 = vmatprep.mubr.bf16.mxu0 0
    %1744 = vmatmul.mubr.bf16.gmra.mxu0 %v1636
    %v1745 = vpop.f32.mrf.mxu0
    %v1746 = vadd.f32 0.0, %v1745
    %v1747 = vpop.f32.mrf.mxu0
    %v1748 = vpop.f32.mrf.mxu0
    %v1749 = vadd.f32 0.0, %v1748
    %v1750 = vpop.f32.mrf.mxu0
    %1751 = vmatprep.mubr.bf16.mxu0 0
    %1752 = vmatmul.mubr.bf16.gmra.mxu0 %v1637
    %v1753 = vpop.f32.mrf.mxu0
    %v1754 = vadd.f32 0.0, %v1753
    %v1755 = vpop.f32.mrf.mxu0
    %v1756 = vpop.f32.mrf.mxu0
    %v1757 = vadd.f32 0.0, %v1756
    %v1758 = vpop.f32.mrf.mxu0
    %1759 = vdwg.mxu0
    %v1760 = vadd.f32 %v1009, %v1738
    %v1761 = vadd.f32 %v1010, %v1741
    %v1762 = vadd.f32 %v1011, %v1746
    %v1763 = vadd.f32 %v1012, %v1749
    %v1764 = vadd.f32 %v1013, %v1754
    %v1765 = vadd.f32 %v1014, %v1757
    %s1766 = scalar_lea.vmem %s8, 1
    %v1767 = vld [vmem:[%s1766] sm:$0x1]
    %v1769 = vlaneseq
    %v1770 = vshrl.u32 %v1769, 7
    %v1771 = vsub.s32 0, %v1770
    %v1772 = vrot.slane %v1767, %v1771
    %v1774 = vadd.f32 %v1760, %v1772
    %v1775 = vadd.f32 %v1761, %v1772
    %v1776 = vadd.f32 %v1762, %v1772
    %v1777 = vadd.f32 %v1763, %v1772
    %v1778 = vadd.f32 %v1764, %v1772
    %v1779 = vadd.f32 %v1765, %v1772
    %v1780 = vmax.f32 %v1774, 0.0
    %v1781 = vmax.f32 %v1775, 0.0
    %v1782 = vmax.f32 %v1776, 0.0
    %v1783 = vmax.f32 %v1777, 0.0
    %v1784 = vmax.f32 %v1778, 0.0
    %v1785 = vmax.f32 %v1779, 0.0
    %v1786 = vpack.c.bf16 %v1781, %v1780
    %v1787 = vpack.c.bf16 %v1783, %v1782
    %v1788 = vpack.c.bf16 %v1785, %v1784
    %s1789 = scalar_lea.vmem [#allocation2], 128
    %v1790 = vld [vmem:[%s1789] sm:$0xf]
    %v1791 = vld [vmem:[%s1789 + $0x4] sm:$0xf]
    %v1792 = vld [vmem:[%s1789 + $0x8] sm:$0xf]
    %v1793 = vld [vmem:[%s1789 + $0xc] sm:$0xf]
    %v1794 = vld [vmem:[%s1789 + $0x10] sm:$0xf]
    %v1795 = vld [vmem:[%s1789 + $0x14] sm:$0xf]
    %v1796 = vld [vmem:[%s1789 + $0x18] sm:$0xf]
    %v1797 = vld [vmem:[%s1789 + $0x1c] sm:$0xf]
    %v1798 = vld [vmem:[%s1789 + $0x20] sm:$0xf]
    %v1799 = vld [vmem:[%s1789 + $0x24] sm:$0xf]
    %v1800 = vld [vmem:[%s1789 + $0x28] sm:$0xf]
    %v1801 = vld [vmem:[%s1789 + $0x2c] sm:$0xf]
    %v1802 = vld [vmem:[%s1789 + $0x30] sm:$0xf]
    %v1803 = vld [vmem:[%s1789 + $0x34] sm:$0xf]
    %v1804 = vld [vmem:[%s1789 + $0x38] sm:$0xf]
    %v1805 = vld [vmem:[%s1789 + $0x3c] sm:$0xf]
    %s1806 = scalar_lea.vmem %s4, 2
    %v1807 = vld [vmem:[%s1806] sm:$0x1]
    %v1809 = vlaneseq
    %v1810 = vshrl.u32 %v1809, 7
    %v1811 = vsub.s32 0, %v1810
    %v1812 = vrot.slane %v1807, %v1811
    %v1830 = vunpack.c.l.b16 %v1790
    %v1831 = vunpack.c.l.b16 %v1791
    %v1832 = vunpack.c.l.b16 %v1792
    %v1833 = vunpack.c.l.b16 %v1793
    %v1834 = vunpack.c.l.b16 %v1794
    %v1835 = vunpack.c.l.b16 %v1795
    %v1836 = vunpack.c.l.b16 %v1796
    %v1837 = vunpack.c.l.b16 %v1797
    %v1838 = vunpack.c.l.b16 %v1798
    %v1839 = vunpack.c.l.b16 %v1799
    %v1840 = vunpack.c.l.b16 %v1800
    %v1841 = vunpack.c.l.b16 %v1801
    %v1842 = vunpack.c.l.b16 %v1802
    %v1843 = vunpack.c.l.b16 %v1803
    %v1844 = vunpack.c.l.b16 %v1804
    %v1845 = vunpack.c.l.b16 %v1805
    %v1846 = vpack.c.b16 %v1831, %v1830
    %v1847 = vpack.c.b16 %v1833, %v1832
    %v1848 = vpack.c.b16 %v1835, %v1834
    %v1849 = vpack.c.b16 %v1837, %v1836
    %v1850 = vpack.c.b16 %v1839, %v1838
    %v1851 = vpack.c.b16 %v1841, %v1840
    %v1852 = vpack.c.b16 %v1843, %v1842
    %v1853 = vpack.c.b16 %v1845, %v1844
    %1862 = vmatprep.subr.bf16.mxu0 0
    %1863 = vmatpush1.bf16.msra.mxu0 %v1853
    %1864 = vmatprep.subr.bf16.mxu0 0
    %1865 = vmatpush1.bf16.msra.mxu0 %v1852
    %1866 = vmatprep.subr.bf16.mxu0 0
    %1867 = vmatpush1.bf16.msra.mxu0 %v1851
    %1868 = vmatprep.subr.bf16.mxu0 0
    %1869 = vmatpush1.bf16.msra.mxu0 %v1850
    %1870 = vmatprep.subr.bf16.mxu0 0
    %1871 = vmatpush1.bf16.msra.mxu0 %v1849
    %1872 = vmatprep.subr.bf16.mxu0 0
    %1873 = vmatpush1.bf16.msra.mxu0 %v1848
    %1874 = vmatprep.subr.bf16.mxu0 0
    %1875 = vmatpush1.bf16.msra.mxu0 %v1847
    %1876 = vmatprep.subr.bf16.mxu0 0
    %1877 = vmatpush1.bf16.msra.mxu0 %v1846
    %1878 = vmatprep.subr.bf16.mxu0 0
    %1879 = vmatpush2.bf16.msra.mxu0 0
    %1880 = vmatprep.subr.bf16.mxu0 0
    %1881 = vmatpush2.bf16.msra.mxu0 0
    %1882 = vmatprep.subr.bf16.mxu0 0
    %1883 = vmatpush2.bf16.msra.mxu0 0
    %1884 = vmatprep.subr.bf16.mxu0 0
    %1885 = vmatpush2.bf16.msra.mxu0 0
    %1886 = vmatprep.subr.bf16.mxu0 0
    %1887 = vmatpush2.bf16.msra.mxu0 0
    %1888 = vmatprep.subr.bf16.mxu0 0
    %1889 = vmatpush2.bf16.msra.mxu0 0
    %1890 = vmatprep.subr.bf16.mxu0 0
    %1891 = vmatpush2.bf16.msra.mxu0 0
    %1892 = vmatprep.subr.bf16.mxu0 0
    %1893 = vmatpush2.bf16.msra.mxu0 0
    %1894 = vmatprep.mubr.bf16.mxu0 0
    %1895 = vmatmul.mubr.bf16.gmra.mxu0 %v1786
    %v1896 = vpop.f32.mrf.mxu0
    %v1897 = vadd.f32 %v1812, %v1896
    %v1898 = vpop.f32.mrf.mxu0
    %v1899 = vpop.f32.mrf.mxu0
    %v1900 = vadd.f32 %v1812, %v1899
    %v1901 = vpop.f32.mrf.mxu0
    %1902 = vmatprep.mubr.bf16.mxu0 0
    %1903 = vmatmul.mubr.bf16.gmra.mxu0 %v1787
    %v1904 = vpop.f32.mrf.mxu0
    %v1905 = vadd.f32 %v1812, %v1904
    %v1906 = vpop.f32.mrf.mxu0
    %v1907 = vpop.f32.mrf.mxu0
    %v1908 = vadd.f32 %v1812, %v1907
    %v1909 = vpop.f32.mrf.mxu0
    %1910 = vmatprep.mubr.bf16.mxu0 0
    %1911 = vmatmul.mubr.bf16.gmra.mxu0 %v1788
    %v1912 = vpop.f32.mrf.mxu0
    %v1913 = vadd.f32 %v1812, %v1912
    %v1914 = vpop.f32.mrf.mxu0
    %v1915 = vpop.f32.mrf.mxu0
    %v1916 = vadd.f32 %v1812, %v1915
    %v1917 = vpop.f32.mrf.mxu0
    %1918 = vdwg.mxu0
    %v1919 = vmax.f32 %v1897, 0.0
    %v1920 = vmax.f32 %v1900, 0.0
    %v1921 = vmax.f32 %v1905, 0.0
    %v1922 = vmax.f32 %v1908, 0.0
    %v1923 = vmax.f32 %v1913, 0.0
    %v1924 = vmax.f32 %v1916, 0.0
    %vm1925 = vcmp.ge.s32.totalorder %v250, 4
    %vm1926 = vcmp.ge.s32.totalorder %v251, 4
    %vm1927 = vcmp.ge.s32.totalorder %v252, 4
    %vm1928 = vcmp.ge.s32.totalorder %v253, 4
    %vm1929 = vcmp.ge.s32.totalorder %v254, 4
    %vm1930 = vcmp.ge.s32.totalorder %v255, 4
    %v1931 = vrot.slane %v1919, 4
    %v1932 = vrot.slane %v1920, 4
    %v1933 = vrot.slane %v1921, 4
    %v1934 = vrot.slane %v1922, 4
    %v1935 = vrot.slane %v1923, 4
    %v1936 = vrot.slane %v1924, 4
    %vm1937 = vcmp.lt.s32.totalorder %v164, 4
    %v1938 = vsel %vm1937, %v1935, %v1936
    %v1939 = vsel %vm1937, %v1934, %v1935
    %v1940 = vsel %vm1937, %v1933, %v1934
    %v1941 = vsel %vm1937, %v1932, %v1933
    %v1942 = vsel %vm1937, %v1931, %v1932
    %v1943 = vsel %vm1937, %v1936, %v1931
    %v1944 = vsel %vm1925, 1, 0
    %v1945 = vsel %vm1926, 1, 0
    %v1946 = vsel %vm1927, 1, 0
    %v1947 = vsel %vm1928, 1, 0
    %v1948 = vsel %vm1929, 1, 0
    %v1949 = vsel %vm1930, 1, 0
    %vm1950 = vcmp.eq.s32.totalorder %v1944, 1
    %vm1951 = vcmp.eq.s32.totalorder %v1945, 1
    %vm1952 = vcmp.eq.s32.totalorder %v1946, 1
    %vm1953 = vcmp.eq.s32.totalorder %v1947, 1
    %vm1954 = vcmp.eq.s32.totalorder %v1948, 1
    %vm1955 = vcmp.eq.s32.totalorder %v1949, 1
    %v1956 = vsel %vm1950, %v1943, 0.0
    %v1957 = vsel %vm1951, %v1942, 0.0
    %v1958 = vsel %vm1952, %v1941, 0.0
    %v1959 = vsel %vm1953, %v1940, 0.0
    %v1960 = vsel %vm1954, %v1939, 0.0
    %v1961 = vsel %vm1955, %v1938, 0.0
    %vm1962 = vcmp.lt.s32.totalorder %v250, 12
    %vm1963 = vcmp.lt.s32.totalorder %v251, 12
    %vm1964 = vcmp.lt.s32.totalorder %v252, 12
    %vm1965 = vcmp.lt.s32.totalorder %v253, 12
    %vm1966 = vcmp.lt.s32.totalorder %v254, 12
    %vm1967 = vcmp.lt.s32.totalorder %v255, 12
    %v1968 = vsel %vm1962, 1, 0
    %v1969 = vsel %vm1963, 1, 0
    %v1970 = vsel %vm1964, 1, 0
    %v1971 = vsel %vm1965, 1, 0
    %v1972 = vsel %vm1966, 1, 0
    %v1973 = vsel %vm1967, 1, 0
    %vm1974 = vcmp.eq.s32.totalorder %v1968, 1
    %vm1975 = vcmp.eq.s32.totalorder %v1969, 1
    %vm1976 = vcmp.eq.s32.totalorder %v1970, 1
    %vm1977 = vcmp.eq.s32.totalorder %v1971, 1
    %vm1978 = vcmp.eq.s32.totalorder %v1972, 1
    %vm1979 = vcmp.eq.s32.totalorder %v1973, 1
    %v1980 = vsel %vm1974, %v1942, 0.0
    %v1981 = vsel %vm1975, %v1941, 0.0
    %v1982 = vsel %vm1976, %v1940, 0.0
    %v1983 = vsel %vm1977, %v1939, 0.0
    %v1984 = vsel %vm1978, %v1938, 0.0
    %v1985 = vsel %vm1979, %v1943, 0.0
    %v1986 = vpack.c.bf16 %v1920, %v1919
    %v1987 = vpack.c.bf16 %v1922, %v1921
    %v1988 = vpack.c.bf16 %v1924, %v1923
    %s1989 = scalar_lea.vmem [#allocation5], 448
    %v1990 = vld [vmem:[%s1989] sm:$0xf]
    %v1991 = vld [vmem:[%s1989 + $0x4] sm:$0xf]
    %v1992 = vld [vmem:[%s1989 + $0x8] sm:$0xf]
    %v1993 = vld [vmem:[%s1989 + $0xc] sm:$0xf]
    %v1994 = vld [vmem:[%s1989 + $0x10] sm:$0xf]
    %v1995 = vld [vmem:[%s1989 + $0x14] sm:$0xf]
    %v1996 = vld [vmem:[%s1989 + $0x18] sm:$0xf]
    %v1997 = vld [vmem:[%s1989 + $0x1c] sm:$0xf]
    %v1998 = vld [vmem:[%s1989 + $0x20] sm:$0xf]
    %v1999 = vld [vmem:[%s1989 + $0x24] sm:$0xf]
    %v2000 = vld [vmem:[%s1989 + $0x28] sm:$0xf]
    %v2001 = vld [vmem:[%s1989 + $0x2c] sm:$0xf]
    %v2002 = vld [vmem:[%s1989 + $0x30] sm:$0xf]
    %v2003 = vld [vmem:[%s1989 + $0x34] sm:$0xf]
    %v2004 = vld [vmem:[%s1989 + $0x38] sm:$0xf]
    %v2005 = vld [vmem:[%s1989 + $0x3c] sm:$0xf]
    %v2006 = vpack.c.bf16 %v1957, %v1956
    %v2007 = vpack.c.bf16 %v1959, %v1958
    %v2008 = vpack.c.bf16 %v1961, %v1960
    %s2009 = scalar_lea.vmem [#allocation5], 384
    %v2010 = vld [vmem:[%s2009] sm:$0xf]
    %v2011 = vld [vmem:[%s2009 + $0x4] sm:$0xf]
    %v2012 = vld [vmem:[%s2009 + $0x8] sm:$0xf]
    %v2013 = vld [vmem:[%s2009 + $0xc] sm:$0xf]
    %v2014 = vld [vmem:[%s2009 + $0x10] sm:$0xf]
    %v2015 = vld [vmem:[%s2009 + $0x14] sm:$0xf]
    %v2016 = vld [vmem:[%s2009 + $0x18] sm:$0xf]
    %v2017 = vld [vmem:[%s2009 + $0x1c] sm:$0xf]
    %v2018 = vld [vmem:[%s2009 + $0x20] sm:$0xf]
    %v2019 = vld [vmem:[%s2009 + $0x24] sm:$0xf]
    %v2020 = vld [vmem:[%s2009 + $0x28] sm:$0xf]
    %v2021 = vld [vmem:[%s2009 + $0x2c] sm:$0xf]
    %v2022 = vld [vmem:[%s2009 + $0x30] sm:$0xf]
    %v2023 = vld [vmem:[%s2009 + $0x34] sm:$0xf]
    %v2024 = vld [vmem:[%s2009 + $0x38] sm:$0xf]
    %v2025 = vld [vmem:[%s2009 + $0x3c] sm:$0xf]
    %v2042 = vunpack.c.l.b16 %v2010
    %v2043 = vunpack.c.l.b16 %v2011
    %v2044 = vunpack.c.l.b16 %v2012
    %v2045 = vunpack.c.l.b16 %v2013
    %v2046 = vunpack.c.l.b16 %v2014
    %v2047 = vunpack.c.l.b16 %v2015
    %v2048 = vunpack.c.l.b16 %v2016
    %v2049 = vunpack.c.l.b16 %v2017
    %v2050 = vunpack.c.l.b16 %v2018
    %v2051 = vunpack.c.l.b16 %v2019
    %v2052 = vunpack.c.l.b16 %v2020
    %v2053 = vunpack.c.l.b16 %v2021
    %v2054 = vunpack.c.l.b16 %v2022
    %v2055 = vunpack.c.l.b16 %v2023
    %v2056 = vunpack.c.l.b16 %v2024
    %v2057 = vunpack.c.l.b16 %v2025
    %v2058 = vpack.c.b16 %v2043, %v2042
    %v2059 = vpack.c.b16 %v2045, %v2044
    %v2060 = vpack.c.b16 %v2047, %v2046
    %v2061 = vpack.c.b16 %v2049, %v2048
    %v2062 = vpack.c.b16 %v2051, %v2050
    %v2063 = vpack.c.b16 %v2053, %v2052
    %v2064 = vpack.c.b16 %v2055, %v2054
    %v2065 = vpack.c.b16 %v2057, %v2056
    %2074 = vmatprep.subr.bf16.mxu0 0
    %2075 = vmatpush1.bf16.msra.mxu0 %v2065
    %2076 = vmatprep.subr.bf16.mxu0 0
    %2077 = vmatpush1.bf16.msra.mxu0 %v2064
    %2078 = vmatprep.subr.bf16.mxu0 0
    %2079 = vmatpush1.bf16.msra.mxu0 %v2063
    %2080 = vmatprep.subr.bf16.mxu0 0
    %2081 = vmatpush1.bf16.msra.mxu0 %v2062
    %2082 = vmatprep.subr.bf16.mxu0 0
    %2083 = vmatpush1.bf16.msra.mxu0 %v2061
    %2084 = vmatprep.subr.bf16.mxu0 0
    %2085 = vmatpush1.bf16.msra.mxu0 %v2060
    %2086 = vmatprep.subr.bf16.mxu0 0
    %2087 = vmatpush1.bf16.msra.mxu0 %v2059
    %2088 = vmatprep.subr.bf16.mxu0 0
    %2089 = vmatpush1.bf16.msra.mxu0 %v2058
    %2090 = vmatprep.subr.bf16.mxu0 0
    %2091 = vmatpush2.bf16.msra.mxu0 0
    %2092 = vmatprep.subr.bf16.mxu0 0
    %2093 = vmatpush2.bf16.msra.mxu0 0
    %2094 = vmatprep.subr.bf16.mxu0 0
    %2095 = vmatpush2.bf16.msra.mxu0 0
    %2096 = vmatprep.subr.bf16.mxu0 0
    %2097 = vmatpush2.bf16.msra.mxu0 0
    %2098 = vmatprep.subr.bf16.mxu0 0
    %2099 = vmatpush2.bf16.msra.mxu0 0
    %2100 = vmatprep.subr.bf16.mxu0 0
    %2101 = vmatpush2.bf16.msra.mxu0 0
    %2102 = vmatprep.subr.bf16.mxu0 0
    %2103 = vmatpush2.bf16.msra.mxu0 0
    %2104 = vmatprep.subr.bf16.mxu0 0
    %2105 = vmatpush2.bf16.msra.mxu0 0
    %2106 = vmatprep.mubr.bf16.mxu0 0
    %2107 = vmatmul.mubr.bf16.gmra.mxu0 %v2006
    %v2108 = vpop.f32.mrf.mxu0
    %v2109 = vadd.f32 0.0, %v2108
    %v2110 = vpop.f32.mrf.mxu0
    %v2111 = vpop.f32.mrf.mxu0
    %v2112 = vadd.f32 0.0, %v2111
    %v2113 = vpop.f32.mrf.mxu0
    %2114 = vmatprep.mubr.bf16.mxu0 0
    %2115 = vmatmul.mubr.bf16.gmra.mxu0 %v2007
    %v2116 = vpop.f32.mrf.mxu0
    %v2117 = vadd.f32 0.0, %v2116
    %v2118 = vpop.f32.mrf.mxu0
    %v2119 = vpop.f32.mrf.mxu0
    %v2120 = vadd.f32 0.0, %v2119
    %v2121 = vpop.f32.mrf.mxu0
    %2122 = vmatprep.mubr.bf16.mxu0 0
    %2123 = vmatmul.mubr.bf16.gmra.mxu0 %v2008
    %v2124 = vpop.f32.mrf.mxu0
    %v2125 = vadd.f32 0.0, %v2124
    %v2126 = vpop.f32.mrf.mxu0
    %v2127 = vpop.f32.mrf.mxu0
    %v2128 = vadd.f32 0.0, %v2127
    %v2129 = vpop.f32.mrf.mxu0
    %2130 = vdwg.mxu0
    %v2147 = vunpack.c.l.b16 %v1990
    %v2148 = vunpack.c.l.b16 %v1991
    %v2149 = vunpack.c.l.b16 %v1992
    %v2150 = vunpack.c.l.b16 %v1993
    %v2151 = vunpack.c.l.b16 %v1994
    %v2152 = vunpack.c.l.b16 %v1995
    %v2153 = vunpack.c.l.b16 %v1996
    %v2154 = vunpack.c.l.b16 %v1997
    %v2155 = vunpack.c.l.b16 %v1998
    %v2156 = vunpack.c.l.b16 %v1999
    %v2157 = vunpack.c.l.b16 %v2000
    %v2158 = vunpack.c.l.b16 %v2001
    %v2159 = vunpack.c.l.b16 %v2002
    %v2160 = vunpack.c.l.b16 %v2003
    %v2161 = vunpack.c.l.b16 %v2004
    %v2162 = vunpack.c.l.b16 %v2005
    %v2163 = vpack.c.b16 %v2148, %v2147
    %v2164 = vpack.c.b16 %v2150, %v2149
    %v2165 = vpack.c.b16 %v2152, %v2151
    %v2166 = vpack.c.b16 %v2154, %v2153
    %v2167 = vpack.c.b16 %v2156, %v2155
    %v2168 = vpack.c.b16 %v2158, %v2157
    %v2169 = vpack.c.b16 %v2160, %v2159
    %v2170 = vpack.c.b16 %v2162, %v2161
    %2179 = vmatprep.subr.bf16.mxu0 0
    %2180 = vmatpush1.bf16.msra.mxu0 %v2170
    %2181 = vmatprep.subr.bf16.mxu0 0
    %2182 = vmatpush1.bf16.msra.mxu0 %v2169
    %2183 = vmatprep.subr.bf16.mxu0 0
    %2184 = vmatpush1.bf16.msra.mxu0 %v2168
    %2185 = vmatprep.subr.bf16.mxu0 0
    %2186 = vmatpush1.bf16.msra.mxu0 %v2167
    %2187 = vmatprep.subr.bf16.mxu0 0
    %2188 = vmatpush1.bf16.msra.mxu0 %v2166
    %2189 = vmatprep.subr.bf16.mxu0 0
    %2190 = vmatpush1.bf16.msra.mxu0 %v2165
    %2191 = vmatprep.subr.bf16.mxu0 0
    %2192 = vmatpush1.bf16.msra.mxu0 %v2164
    %2193 = vmatprep.subr.bf16.mxu0 0
    %2194 = vmatpush1.bf16.msra.mxu0 %v2163
    %2195 = vmatprep.subr.bf16.mxu0 0
    %2196 = vmatpush2.bf16.msra.mxu0 0
    %2197 = vmatprep.subr.bf16.mxu0 0
    %2198 = vmatpush2.bf16.msra.mxu0 0
    %2199 = vmatprep.subr.bf16.mxu0 0
    %2200 = vmatpush2.bf16.msra.mxu0 0
    %2201 = vmatprep.subr.bf16.mxu0 0
    %2202 = vmatpush2.bf16.msra.mxu0 0
    %2203 = vmatprep.subr.bf16.mxu0 0
    %2204 = vmatpush2.bf16.msra.mxu0 0
    %2205 = vmatprep.subr.bf16.mxu0 0
    %2206 = vmatpush2.bf16.msra.mxu0 0
    %2207 = vmatprep.subr.bf16.mxu0 0
    %2208 = vmatpush2.bf16.msra.mxu0 0
    %2209 = vmatprep.subr.bf16.mxu0 0
    %2210 = vmatpush2.bf16.msra.mxu0 0
    %2211 = vmatprep.mubr.bf16.mxu0 0
    %2212 = vmatmul.mubr.bf16.gmra.mxu0 %v1986
    %v2213 = vpop.f32.mrf.mxu0
    %v2214 = vadd.f32 %v2109, %v2213
    %v2215 = vpop.f32.mrf.mxu0
    %v2216 = vpop.f32.mrf.mxu0
    %v2217 = vadd.f32 %v2112, %v2216
    %v2218 = vpop.f32.mrf.mxu0
    %2219 = vmatprep.mubr.bf16.mxu0 0
    %2220 = vmatmul.mubr.bf16.gmra.mxu0 %v1987
    %v2221 = vpop.f32.mrf.mxu0
    %v2222 = vadd.f32 %v2117, %v2221
    %v2223 = vpop.f32.mrf.mxu0
    %v2224 = vpop.f32.mrf.mxu0
    %v2225 = vadd.f32 %v2120, %v2224
    %v2226 = vpop.f32.mrf.mxu0
    %2227 = vmatprep.mubr.bf16.mxu0 0
    %2228 = vmatmul.mubr.bf16.gmra.mxu0 %v1988
    %v2229 = vpop.f32.mrf.mxu0
    %v2230 = vadd.f32 %v2125, %v2229
    %v2231 = vpop.f32.mrf.mxu0
    %v2232 = vpop.f32.mrf.mxu0
    %v2233 = vadd.f32 %v2128, %v2232
    %v2234 = vpop.f32.mrf.mxu0
    %2235 = vdwg.mxu0
    %v2236 = vpack.c.bf16 %v1981, %v1980
    %v2237 = vpack.c.bf16 %v1983, %v1982
    %v2238 = vpack.c.bf16 %v1985, %v1984
    %s2239 = scalar_lea.vmem [#allocation5], 512
    %v2240 = vld [vmem:[%s2239] sm:$0xf]
    %v2241 = vld [vmem:[%s2239 + $0x4] sm:$0xf]
    %v2242 = vld [vmem:[%s2239 + $0x8] sm:$0xf]
    %v2243 = vld [vmem:[%s2239 + $0xc] sm:$0xf]
    %v2244 = vld [vmem:[%s2239 + $0x10] sm:$0xf]
    %v2245 = vld [vmem:[%s2239 + $0x14] sm:$0xf]
    %v2246 = vld [vmem:[%s2239 + $0x18] sm:$0xf]
    %v2247 = vld [vmem:[%s2239 + $0x1c] sm:$0xf]
    %v2248 = vld [vmem:[%s2239 + $0x20] sm:$0xf]
    %v2249 = vld [vmem:[%s2239 + $0x24] sm:$0xf]
    %v2250 = vld [vmem:[%s2239 + $0x28] sm:$0xf]
    %v2251 = vld [vmem:[%s2239 + $0x2c] sm:$0xf]
    %v2252 = vld [vmem:[%s2239 + $0x30] sm:$0xf]
    %v2253 = vld [vmem:[%s2239 + $0x34] sm:$0xf]
    %v2254 = vld [vmem:[%s2239 + $0x38] sm:$0xf]
    %v2255 = vld [vmem:[%s2239 + $0x3c] sm:$0xf]
    %v2272 = vunpack.c.l.b16 %v2240
    %v2273 = vunpack.c.l.b16 %v2241
    %v2274 = vunpack.c.l.b16 %v2242
    %v2275 = vunpack.c.l.b16 %v2243
    %v2276 = vunpack.c.l.b16 %v2244
    %v2277 = vunpack.c.l.b16 %v2245
    %v2278 = vunpack.c.l.b16 %v2246
    %v2279 = vunpack.c.l.b16 %v2247
    %v2280 = vunpack.c.l.b16 %v2248
    %v2281 = vunpack.c.l.b16 %v2249
    %v2282 = vunpack.c.l.b16 %v2250
    %v2283 = vunpack.c.l.b16 %v2251
    %v2284 = vunpack.c.l.b16 %v2252
    %v2285 = vunpack.c.l.b16 %v2253
    %v2286 = vunpack.c.l.b16 %v2254
    %v2287 = vunpack.c.l.b16 %v2255
    %v2288 = vpack.c.b16 %v2273, %v2272
    %v2289 = vpack.c.b16 %v2275, %v2274
    %v2290 = vpack.c.b16 %v2277, %v2276
    %v2291 = vpack.c.b16 %v2279, %v2278
    %v2292 = vpack.c.b16 %v2281, %v2280
    %v2293 = vpack.c.b16 %v2283, %v2282
    %v2294 = vpack.c.b16 %v2285, %v2284
    %v2295 = vpack.c.b16 %v2287, %v2286
    %2304 = vmatprep.subr.bf16.mxu0 0
    %2305 = vmatpush1.bf16.msra.mxu0 %v2295
    %2306 = vmatprep.subr.bf16.mxu0 0
    %2307 = vmatpush1.bf16.msra.mxu0 %v2294
    %2308 = vmatprep.subr.bf16.mxu0 0
    %2309 = vmatpush1.bf16.msra.mxu0 %v2293
    %2310 = vmatprep.subr.bf16.mxu0 0
    %2311 = vmatpush1.bf16.msra.mxu0 %v2292
    %2312 = vmatprep.subr.bf16.mxu0 0
    %2313 = vmatpush1.bf16.msra.mxu0 %v2291
    %2314 = vmatprep.subr.bf16.mxu0 0
    %2315 = vmatpush1.bf16.msra.mxu0 %v2290
    %2316 = vmatprep.subr.bf16.mxu0 0
    %2317 = vmatpush1.bf16.msra.mxu0 %v2289
    %2318 = vmatprep.subr.bf16.mxu0 0
    %2319 = vmatpush1.bf16.msra.mxu0 %v2288
    %2320 = vmatprep.subr.bf16.mxu0 0
    %2321 = vmatpush2.bf16.msra.mxu0 0
    %2322 = vmatprep.subr.bf16.mxu0 0
    %2323 = vmatpush2.bf16.msra.mxu0 0
    %2324 = vmatprep.subr.bf16.mxu0 0
    %2325 = vmatpush2.bf16.msra.mxu0 0
    %2326 = vmatprep.subr.bf16.mxu0 0
    %2327 = vmatpush2.bf16.msra.mxu0 0
    %2328 = vmatprep.subr.bf16.mxu0 0
    %2329 = vmatpush2.bf16.msra.mxu0 0
    %2330 = vmatprep.subr.bf16.mxu0 0
    %2331 = vmatpush2.bf16.msra.mxu0 0
    %2332 = vmatprep.subr.bf16.mxu0 0
    %2333 = vmatpush2.bf16.msra.mxu0 0
    %2334 = vmatprep.subr.bf16.mxu0 0
    %2335 = vmatpush2.bf16.msra.mxu0 0
    %2336 = vmatprep.mubr.bf16.mxu0 0
    %2337 = vmatmul.mubr.bf16.gmra.mxu0 %v2236
    %v2338 = vpop.f32.mrf.mxu0
    %v2339 = vadd.f32 0.0, %v2338
    %v2340 = vpop.f32.mrf.mxu0
    %v2341 = vpop.f32.mrf.mxu0
    %v2342 = vadd.f32 0.0, %v2341
    %v2343 = vpop.f32.mrf.mxu0
    %2344 = vmatprep.mubr.bf16.mxu0 0
    %2345 = vmatmul.mubr.bf16.gmra.mxu0 %v2237
    %v2346 = vpop.f32.mrf.mxu0
    %v2347 = vadd.f32 0.0, %v2346
    %v2348 = vpop.f32.mrf.mxu0
    %v2349 = vpop.f32.mrf.mxu0
    %v2350 = vadd.f32 0.0, %v2349
    %v2351 = vpop.f32.mrf.mxu0
    %2352 = vmatprep.mubr.bf16.mxu0 0
    %2353 = vmatmul.mubr.bf16.gmra.mxu0 %v2238
    %v2354 = vpop.f32.mrf.mxu0
    %v2355 = vadd.f32 0.0, %v2354
    %v2356 = vpop.f32.mrf.mxu0
    %v2357 = vpop.f32.mrf.mxu0
    %v2358 = vadd.f32 0.0, %v2357
    %v2359 = vpop.f32.mrf.mxu0
    %2360 = vdwg.mxu0
    %v2361 = vadd.f32 %v2214, %v2339
    %v2362 = vadd.f32 %v2217, %v2342
    %v2363 = vadd.f32 %v2222, %v2347
    %v2364 = vadd.f32 %v2225, %v2350
    %v2365 = vadd.f32 %v2230, %v2355
    %v2366 = vadd.f32 %v2233, %v2358
    %s2367 = scalar_lea.vmem %s6, 2
    %v2368 = vld [vmem:[%s2367] sm:$0x1]
    %v2370 = vlaneseq
    %v2371 = vshrl.u32 %v2370, 7
    %v2372 = vsub.s32 0, %v2371
    %v2373 = vrot.slane %v2368, %v2372
    %v2375 = vadd.f32 %v2361, %v2373
    %v2376 = vadd.f32 %v2362, %v2373
    %v2377 = vadd.f32 %v2363, %v2373
    %v2378 = vadd.f32 %v2364, %v2373
    %v2379 = vadd.f32 %v2365, %v2373
    %v2380 = vadd.f32 %v2366, %v2373
    %v2381 = vmax.f32 %v2375, 0.0
    %v2382 = vmax.f32 %v2376, 0.0
    %v2383 = vmax.f32 %v2377, 0.0
    %v2384 = vmax.f32 %v2378, 0.0
    %v2385 = vmax.f32 %v2379, 0.0
    %v2386 = vmax.f32 %v2380, 0.0
    %v2387 = vpack.c.bf16 %v2382, %v2381
    %v2388 = vpack.c.bf16 %v2384, %v2383
    %v2389 = vpack.c.bf16 %v2386, %v2385
    %s2390 = scalar_lea.vmem [#allocation7], 128
    %v2391 = vld [vmem:[%s2390] sm:$0xf]
    %v2392 = vld [vmem:[%s2390 + $0x4] sm:$0xf]
    %v2393 = vld [vmem:[%s2390 + $0x8] sm:$0xf]
    %v2394 = vld [vmem:[%s2390 + $0xc] sm:$0xf]
    %v2395 = vld [vmem:[%s2390 + $0x10] sm:$0xf]
    %v2396 = vld [vmem:[%s2390 + $0x14] sm:$0xf]
    %v2397 = vld [vmem:[%s2390 + $0x18] sm:$0xf]
    %v2398 = vld [vmem:[%s2390 + $0x1c] sm:$0xf]
    %v2399 = vld [vmem:[%s2390 + $0x20] sm:$0xf]
    %v2400 = vld [vmem:[%s2390 + $0x24] sm:$0xf]
    %v2401 = vld [vmem:[%s2390 + $0x28] sm:$0xf]
    %v2402 = vld [vmem:[%s2390 + $0x2c] sm:$0xf]
    %v2403 = vld [vmem:[%s2390 + $0x30] sm:$0xf]
    %v2404 = vld [vmem:[%s2390 + $0x34] sm:$0xf]
    %v2405 = vld [vmem:[%s2390 + $0x38] sm:$0xf]
    %v2406 = vld [vmem:[%s2390 + $0x3c] sm:$0xf]
    %v2423 = vunpack.c.l.b16 %v2391
    %v2424 = vunpack.c.l.b16 %v2392
    %v2425 = vunpack.c.l.b16 %v2393
    %v2426 = vunpack.c.l.b16 %v2394
    %v2427 = vunpack.c.l.b16 %v2395
    %v2428 = vunpack.c.l.b16 %v2396
    %v2429 = vunpack.c.l.b16 %v2397
    %v2430 = vunpack.c.l.b16 %v2398
    %v2431 = vunpack.c.l.b16 %v2399
    %v2432 = vunpack.c.l.b16 %v2400
    %v2433 = vunpack.c.l.b16 %v2401
    %v2434 = vunpack.c.l.b16 %v2402
    %v2435 = vunpack.c.l.b16 %v2403
    %v2436 = vunpack.c.l.b16 %v2404
    %v2437 = vunpack.c.l.b16 %v2405
    %v2438 = vunpack.c.l.b16 %v2406
    %v2439 = vpack.c.b16 %v2424, %v2423
    %v2440 = vpack.c.b16 %v2426, %v2425
    %v2441 = vpack.c.b16 %v2428, %v2427
    %v2442 = vpack.c.b16 %v2430, %v2429
    %v2443 = vpack.c.b16 %v2432, %v2431
    %v2444 = vpack.c.b16 %v2434, %v2433
    %v2445 = vpack.c.b16 %v2436, %v2435
    %v2446 = vpack.c.b16 %v2438, %v2437
    %2455 = vmatprep.subr.bf16.mxu0 0
    %2456 = vmatpush1.bf16.msra.mxu0 %v2446
    %2457 = vmatprep.subr.bf16.mxu0 0
    %2458 = vmatpush1.bf16.msra.mxu0 %v2445
    %2459 = vmatprep.subr.bf16.mxu0 0
    %2460 = vmatpush1.bf16.msra.mxu0 %v2444
    %2461 = vmatprep.subr.bf16.mxu0 0
    %2462 = vmatpush1.bf16.msra.mxu0 %v2443
    %2463 = vmatprep.subr.bf16.mxu0 0
    %2464 = vmatpush1.bf16.msra.mxu0 %v2442
    %2465 = vmatprep.subr.bf16.mxu0 0
    %2466 = vmatpush1.bf16.msra.mxu0 %v2441
    %2467 = vmatprep.subr.bf16.mxu0 0
    %2468 = vmatpush1.bf16.msra.mxu0 %v2440
    %2469 = vmatprep.subr.bf16.mxu0 0
    %2470 = vmatpush1.bf16.msra.mxu0 %v2439
    %2471 = vmatprep.subr.bf16.mxu0 0
    %2472 = vmatpush2.bf16.msra.mxu0 0
    %2473 = vmatprep.subr.bf16.mxu0 0
    %2474 = vmatpush2.bf16.msra.mxu0 0
    %2475 = vmatprep.subr.bf16.mxu0 0
    %2476 = vmatpush2.bf16.msra.mxu0 0
    %2477 = vmatprep.subr.bf16.mxu0 0
    %2478 = vmatpush2.bf16.msra.mxu0 0
    %2479 = vmatprep.subr.bf16.mxu0 0
    %2480 = vmatpush2.bf16.msra.mxu0 0
    %2481 = vmatprep.subr.bf16.mxu0 0
    %2482 = vmatpush2.bf16.msra.mxu0 0
    %2483 = vmatprep.subr.bf16.mxu0 0
    %2484 = vmatpush2.bf16.msra.mxu0 0
    %2485 = vmatprep.subr.bf16.mxu0 0
    %2486 = vmatpush2.bf16.msra.mxu0 0
    %2487 = vmatprep.mubr.bf16.mxu0 0
    %2488 = vmatmul.mubr.bf16.gmra.mxu0 %v2387
    %v2489 = vpop.f32.mrf.mxu0
    %v2490 = vpop.f32.mrf.mxu0
    %v2491 = vpop.f32.mrf.mxu0
    %v2492 = vadd.f32 0.0, %v2491
    %v2493 = vpop.f32.mrf.mxu0
    %2494 = vmatprep.mubr.bf16.mxu0 0
    %2495 = vmatmul.mubr.bf16.gmra.mxu0 %v2388
    %v2496 = vpop.f32.mrf.mxu0
    %v2497 = vadd.f32 0.0, %v2496
    %v2498 = vpop.f32.mrf.mxu0
    %v2499 = vpop.f32.mrf.mxu0
    %v2500 = vadd.f32 0.0, %v2499
    %v2501 = vpop.f32.mrf.mxu0
    %2502 = vmatprep.mubr.bf16.mxu0 0
    %2503 = vmatmul.mubr.bf16.gmra.mxu0 %v2389
    %v2504 = vpop.f32.mrf.mxu0
    %v2505 = vadd.f32 0.0, %v2504
    %v2506 = vpop.f32.mrf.mxu0
    %v2507 = vpop.f32.mrf.mxu0
    %v2508 = vpop.f32.mrf.mxu0
    %2509 = vdwg.mxu0
    %v2510 = vadd.f32 %v1775, %v2492
    %v2511 = vadd.f32 %v1776, %v2497
    %v2512 = vadd.f32 %v1777, %v2500
    %v2513 = vadd.f32 %v1778, %v2505
    %s2514 = scalar_lea.vmem %s8, 2
    %v2515 = vld [vmem:[%s2514] sm:$0x1]
    %v2517 = vlaneseq
    %v2518 = vshrl.u32 %v2517, 7
    %v2519 = vsub.s32 0, %v2518
    %v2520 = vrot.slane %v2515, %v2519
    %v2522 = vadd.f32 %v2510, %v2520
    %v2523 = vadd.f32 %v2511, %v2520
    %v2524 = vadd.f32 %v2512, %v2520
    %v2525 = vadd.f32 %v2513, %v2520
    %2526 = vst [vmem:[#allocation8] sm:$0xff] %v2522
    %2527 = vst [vmem:[#allocation8 + $0x8] sm:$0xff] %v2523
    %2528 = vst [vmem:[#allocation8 + $0x10] sm:$0xff] %v2524
    %2529 = vst [vmem:[#allocation8 + $0x18] sm:$0xff] %v2525
    // Predicated region
    $region50: #{tpu_custom_call.1} parent=1 // pred_check
      _
    $region51: #{tpu_custom_call.1} parent=1 // pred_check_branch
      %2531 = sbr.rel (0) target = $region53
    $region52: #{tpu_custom_call.1} parent=1 // pred_region
      %s2533 = ssub.s32 512, 512
      %2534 = vsyncadd [#allocation4], %s2533
      %s2535 = sshll.u32 [#allocation8], 4
      %s2536 = int_to_ptr.vmem [resolvable:$true] %s2535
      %2541 = dma.vmem_to_hbm [thread:$0]  %s2536, 512, %s9, [#allocation4], 128, 128, 8
    $region53: #{tpu_custom_call.1} parent=1 // pred_fallthru
      _
    // Predicated region
    $region54: #{tpu_custom_call.1} parent=1 // pred_check
      _
    $region55: #{tpu_custom_call.1} parent=1 // pred_check_branch
      %2543 = sbr.rel (0) target = $region57
    $region56: #{tpu_custom_call.1} parent=1 // pred_region
      %2544 = dma.done [#allocation4], 512
    $region57: #{tpu_custom_call.1} parent=1 // pred_fallthru
      _
    %2545 = vsyncpa [#allocation3], 1
    %2546 = vsyncpa [#allocation6], 1
    %2547 = vsyncpa [#allocation4], 1

// kernel: tpu_custom_call.1
$region0: #{tpu_custom_call.1}
  #allocation0 [shape = 'u32[]', space=smem, size = 0x4, offset = 0x4, fixed_abs, tag = 'smem constant byte address 0x4 - core index']
  #allocation1 [shape = 'u32[144,128]{1,0:T(1,128)}', space=vmem, size = 0x12000, scoped, tag = 'internal scratch']
  %s0 = inlined_call_operand.vmem [shape: f32[1,48,8], index: 0, kind: input, shape index: {}]
  %s1 = inlined_call_operand.vmem [shape: bf16[8,128], index: 1, kind: input, shape index: {}]
  %s2 = inlined_call_operand.vmem [shape: f32[1,128], index: 2, kind: input, shape index: {}]
  %s3 = inlined_call_operand.hbm [shape: bf16[3,128,128], index: 3, kind: input, shape index: {}]
  %s4 = inlined_call_operand.vmem [shape: f32[3,1,128], index: 4, kind: input, shape index: {}]
  %s5 = inlined_call_operand.hbm [shape: bf16[9,128,128], index: 5, kind: input, shape index: {}]
  %s6 = inlined_call_operand.vmem [shape: f32[3,1,128], index: 6, kind: input, shape index: {}]
  %s7 = inlined_call_operand.hbm [shape: bf16[3,128,128], index: 7, kind: input, shape index: {}]
  %s8 = inlined_call_operand.vmem [shape: f32[3,1,128], index: 8, kind: input, shape index: {}]
  %s9 = inlined_call_operand.hbm [shape: f32[1,32,128], index: 9, kind: output, shape index: {}]
  %s10 = sld [smem:[#allocation0]]
  $region58: #{tpu_custom_call.1} parent=0
    _
  %s12 = ssub.s32 1, %s10
  %s13 = scalar_select 0, %s12, %s10
  $region1: #{tpu_custom_call.1} parent=0
    #allocation2 [shape = 'u8[98304]{0}', space=vmem, size = 0x18000, scoped, tag = 'input window, operand 3, single buffered']
    #allocation3 [shape = 's32[1]{0}', space=sflag, size = 0x4, scoped, tag = 'scoped memory for tpu_custom_call.1']
    #allocation4 [shape = 's32[1]{0}', space=sflag, size = 0x4, scoped, tag = 'scoped memory for tpu_custom_call.1']
    #allocation5 [shape = 'u8[294912]{0}', space=vmem, size = 0x48000, scoped, tag = 'input window, operand 5, single buffered']
    #allocation6 [shape = 's32[1]{0}', space=sflag, size = 0x4, scoped, tag = 'scoped memory for tpu_custom_call.1']
    #allocation7 [shape = 'u8[98304]{0}', space=vmem, size = 0x18000, scoped, tag = 'input window, operand 7, single buffered']
    #allocation8 [shape = 'u8[16384]{0}', space=vmem, size = 0x4000, scoped, tag = 'output window, operand 0, single buffered']
    %14 = vsyncpa [#allocation3], 0
    %15 = vsyncpa [#allocation6], 0
    %16 = vsyncpa [#allocation4], 0
    // Predicated region
    $region2: #{tpu_custom_call.1} parent=1 // pred_check
      _
    $region3: #{tpu_custom_call.1} parent=1 // pred_check_branch
      %18 = sbr.rel (0) target = $region5
    $region4: #{tpu_custom_call.1} parent=1 // pred_region
      _
    $region5: #{tpu_custom_call.1} parent=1 // pred_fallthru
      _
    // Predicated region
    $region6: #{tpu_custom_call.1} parent=1 // pred_check
      _
    $region7: #{tpu_custom_call.1} parent=1 // pred_check_branch
      %20 = sbr.rel (0) target = $region9
    $region8: #{tpu_custom_call.1} parent=1 // pred_region
      _
    $region9: #{tpu_custom_call.1} parent=1 // pred_fallthru
      _
    // Predicated region
    $region10: #{tpu_custom_call.1} parent=1 // pred_check
      _
    $region11: #{tpu_custom_call.1} parent=1 // pred_check_branch
      %22 = sbr.rel (0) target = $region13
    $region12: #{tpu_custom_call.1} parent=1 // pred_region
      _
    $region13: #{tpu_custom_call.1} parent=1 // pred_fallthru
      _
    // Predicated region
    $region14: #{tpu_custom_call.1} parent=1 // pred_check
      _
    $region15: #{tpu_custom_call.1} parent=1 // pred_check_branch
      %24 = sbr.rel (0) target = $region17
    $region16: #{tpu_custom_call.1} parent=1 // pred_region
      %s26 = ssub.s32 3072, 3072
      %27 = vsyncadd [#allocation3], %s26
      %s28 = sshll.u32 [#allocation2], 4
      %s29 = int_to_ptr.vmem [resolvable:$true] %s28
      %34 = dma.hbm_to_vmem [thread:$0]  %s3, 3072, %s29, [#allocation3], 64, 64, 4
    $region17: #{tpu_custom_call.1} parent=1 // pred_fallthru
      _
    // Predicated region
    $region18: #{tpu_custom_call.1} parent=1 // pred_check
      _
    $region19: #{tpu_custom_call.1} parent=1 // pred_check_branch
      %36 = sbr.rel (0) target = $region21
    $region20: #{tpu_custom_call.1} parent=1 // pred_region
      _
    $region21: #{tpu_custom_call.1} parent=1 // pred_fallthru
      _
    // Predicated region
    $region22: #{tpu_custom_call.1} parent=1 // pred_check
      _
    $region23: #{tpu_custom_call.1} parent=1 // pred_check_branch
      %38 = sbr.rel (0) target = $region25
    $region24: #{tpu_custom_call.1} parent=1 // pred_region
      %s40 = ssub.s32 9216, 9216
      %41 = vsyncadd [#allocation6], %s40
      %s42 = sshll.u32 [#allocation5], 4
      %s43 = int_to_ptr.vmem [resolvable:$true] %s42
      %48 = dma.hbm_to_vmem [thread:$0]  %s5, 9216, %s43, [#allocation6], 64, 64, 4
    $region25: #{tpu_custom_call.1} parent=1 // pred_fallthru
      _
    // Predicated region
    $region26: #{tpu_custom_call.1} parent=1 // pred_check
      _
    $region27: #{tpu_custom_call.1} parent=1 // pred_check_branch
      %50 = sbr.rel (0) target = $region29
    $region28: #{tpu_custom_call.1} parent=1 // pred_region
      _
    $region29: #{tpu_custom_call.1} parent=1 // pred_fallthru
      _
    // Predicated region
    $region30: #{tpu_custom_call.1} parent=1 // pred_check
      _
    $region31: #{tpu_custom_call.1} parent=1 // pred_check_branch
      %52 = sbr.rel (0) target = $region33
    $region32: #{tpu_custom_call.1} parent=1 // pred_region
      %s54 = ssub.s32 3072, 3072
      %55 = vsyncadd [#allocation6], %s54
      %s56 = sshll.u32 [#allocation7], 4
      %s57 = int_to_ptr.vmem [resolvable:$true] %s56
      %62 = dma.hbm_to_vmem [thread:$0]  %s7, 3072, %s57, [#allocation6], 64, 64, 4
    $region33: #{tpu_custom_call.1} parent=1 // pred_fallthru
      _
    // Predicated region
    $region34: #{tpu_custom_call.1} parent=1 // pred_check
      _
    $region35: #{tpu_custom_call.1} parent=1 // pred_check_branch
      %64 = sbr.rel (0) target = $region37
    $region36: #{tpu_custom_call.1} parent=1 // pred_region
      _
    $region37: #{tpu_custom_call.1} parent=1 // pred_fallthru
      _
    // Predicated region
    $region38: #{tpu_custom_call.1} parent=1 // pred_check
      _
    $region39: #{tpu_custom_call.1} parent=1 // pred_check_branch
      %66 = sbr.rel (0) target = $region41
    $region40: #{tpu_custom_call.1} parent=1 // pred_region
      %67 = dma.done [#allocation3], 3072
    $region41: #{tpu_custom_call.1} parent=1 // pred_fallthru
      _
    // Predicated region
    $region42: #{tpu_custom_call.1} parent=1 // pred_check
      _
    $region43: #{tpu_custom_call.1} parent=1 // pred_check_branch
      %69 = sbr.rel (0) target = $region45
    $region44: #{tpu_custom_call.1} parent=1 // pred_region
      %70 = dma.done [#allocation6], 9216
    $region45: #{tpu_custom_call.1} parent=1 // pred_fallthru
      _
    // Predicated region
    $region46: #{tpu_custom_call.1} parent=1 // pred_check
      _
    $region47: #{tpu_custom_call.1} parent=1 // pred_check_branch
      %72 = sbr.rel (0) target = $region49
    $region48: #{tpu_custom_call.1} parent=1 // pred_region
      %73 = dma.done [#allocation6], 3072
    $region49: #{tpu_custom_call.1} parent=1 // pred_fallthru
      _
    %v75 = vld [vmem:[%s0] sm:$0xff]
    %v76 = vld [vmem:[%s0 + $0x8] sm:$0xff]
    %v77 = vld [vmem:[%s0 + $0x10] sm:$0xff]
    %v78 = vld [vmem:[%s0 + $0x18] sm:$0xff]
    %v79 = vld [vmem:[%s0 + $0x20] sm:$0xff]
    %v80 = vld [vmem:[%s0 + $0x28] sm:$0xff]
    %v81 = vpack.c.bf16 %v76, %v75
    %v82 = vpack.c.bf16 %v78, %v77
    %v83 = vpack.c.bf16 %v80, %v79
    %v84 = vld [vmem:[%s1] sm:$0xf]
    %v85 = vld [vmem:[%s2] sm:$0x1]
    %v87 = vlaneseq
    %v88 = vshrl.u32 %v87, 7
    %v89 = vsub.s32 0, %v88
    %v90 = vrot.slane %v85, %v89
    %vm92 = vcmask 64512
    %v94 = vsel %vm92, %v81, 0
    %v97 = vsel %vm92, %v82, 0
    %v100 = vsel %vm92, %v83, 0
    %vm102 = vcmask 1043456
    %v104 = vsel %vm102, %v84, 0
    %106 = vmatprep.subr.bf16.mxu0 0
    %107 = vmatpush1.bf16.msra.mxu0 0
    %108 = vmatprep.subr.bf16.mxu0 0
    %109 = vmatpush1.bf16.msra.mxu0 0
    %110 = vmatprep.subr.bf16.mxu0 0
    %111 = vmatpush1.bf16.msra.mxu0 0
    %112 = vmatprep.subr.bf16.mxu0 0
    %113 = vmatpush1.bf16.msra.mxu0 0
    %114 = vmatprep.subr.bf16.mxu0 0
    %115 = vmatpush1.bf16.msra.mxu0 0
    %116 = vmatprep.subr.bf16.mxu0 0
    %117 = vmatpush1.bf16.msra.mxu0 0
    %118 = vmatprep.subr.bf16.mxu0 0
    %119 = vmatpush1.bf16.msra.mxu0 0
    %120 = vmatprep.subr.bf16.mxu0 0
    %121 = vmatpush1.bf16.msra.mxu0 %v104
    %122 = vmatprep.subr.bf16.mxu0 0
    %123 = vmatpush2.bf16.msra.mxu0 0
    %124 = vmatprep.subr.bf16.mxu0 0
    %125 = vmatpush2.bf16.msra.mxu0 0
    %126 = vmatprep.subr.bf16.mxu0 0
    %127 = vmatpush2.bf16.msra.mxu0 0
    %128 = vmatprep.subr.bf16.mxu0 0
    %129 = vmatpush2.bf16.msra.mxu0 0
    %130 = vmatprep.subr.bf16.mxu0 0
    %131 = vmatpush2.bf16.msra.mxu0 0
    %132 = vmatprep.subr.bf16.mxu0 0
    %133 = vmatpush2.bf16.msra.mxu0 0
    %134 = vmatprep.subr.bf16.mxu0 0
    %135 = vmatpush2.bf16.msra.mxu0 0
    %136 = vmatprep.subr.bf16.mxu0 0
    %137 = vmatpush2.bf16.msra.mxu0 0
    %138 = vmatprep.mubr.bf16.mxu0 0
    %139 = vmatmul.mubr.bf16.gmra.mxu0 %v94
    %v140 = vpop.f32.mrf.mxu0
    %v141 = vadd.f32 %v90, %v140
    %v142 = vpop.f32.mrf.mxu0
    %v143 = vpop.f32.mrf.mxu0
    %v144 = vadd.f32 %v90, %v143
    %v145 = vpop.f32.mrf.mxu0
    %146 = vmatprep.mubr.bf16.mxu0 0
    %147 = vmatmul.mubr.bf16.gmra.mxu0 %v97
    %v148 = vpop.f32.mrf.mxu0
    %v149 = vadd.f32 %v90, %v148
    %v150 = vpop.f32.mrf.mxu0
    %v151 = vpop.f32.mrf.mxu0
    %v152 = vadd.f32 %v90, %v151
    %v153 = vpop.f32.mrf.mxu0
    %154 = vmatprep.mubr.bf16.mxu0 0
    %155 = vmatmul.mubr.bf16.gmra.mxu0 %v100
    %v156 = vpop.f32.mrf.mxu0
    %v157 = vadd.f32 %v90, %v156
    %v158 = vpop.f32.mrf.mxu0
    %v159 = vpop.f32.mrf.mxu0
    %v160 = vadd.f32 %v90, %v159
    %v161 = vpop.f32.mrf.mxu0
    %162 = vdwg.mxu0
    %v163 = vlaneseq
    %v164 = vshrl.u32 %v163, 7
    %v165 = vadd.s32 %v164, 8
    %v166 = vadd.s32 %v164, 16
    %v167 = vadd.s32 %v164, 24
    %v168 = vadd.s32 %v164, 32
    %v169 = vadd.s32 %v164, 40
    %s170 = smul.u32 0, 32
    %v171 = vstv %s170
    %v172 = vadd.s32 %v171, %v164
    %v173 = vadd.s32 %v171, %v165
    %v174 = vadd.s32 %v171, %v166
    %v175 = vadd.s32 %v171, %v167
    %v176 = vadd.s32 %v171, %v168
    %v177 = vadd.s32 %v171, %v169
    %v178 = vadd.s32 %v172, 8
    %v179 = vadd.s32 %v173, 8
    %v180 = vadd.s32 %v174, 8
    %v181 = vadd.s32 %v175, 8
    %v182 = vadd.s32 %v176, 8
    %v183 = vadd.s32 %v177, 8
    %vm184 = vcmp.lt.s32.totalorder %v178, 0
    %v185 = vsub.s32 0, %v178
    %v186 = vsel %vm184, %v185, %v178
    %v187 = vshrl.u32 %v186, 4
    %v188 = vand.u32 %v186, 15
    %v189 = vsub.s32 0, %v188
    %v190 = vsel %vm184, %v189, %v188
    %vm191 = vcmp.lt.s32.totalorder %v179, 0
    %v192 = vsub.s32 0, %v179
    %v193 = vsel %vm191, %v192, %v179
    %v194 = vshrl.u32 %v193, 4
    %v195 = vand.u32 %v193, 15
    %v196 = vsub.s32 0, %v195
    %v197 = vsel %vm191, %v196, %v195
    %vm198 = vcmp.lt.s32.totalorder %v180, 0
    %v199 = vsub.s32 0, %v180
    %v200 = vsel %vm198, %v199, %v180
    %v201 = vshrl.u32 %v200, 4
    %v202 = vand.u32 %v200, 15
    %v203 = vsub.s32 0, %v202
    %v204 = vsel %vm198, %v203, %v202
    %vm205 = vcmp.lt.s32.totalorder %v181, 0
    %v206 = vsub.s32 0, %v181
    %v207 = vsel %vm205, %v206, %v181
    %v208 = vshrl.u32 %v207, 4
    %v209 = vand.u32 %v207, 15
    %v210 = vsub.s32 0, %v209
    %v211 = vsel %vm205, %v210, %v209
    %vm212 = vcmp.lt.s32.totalorder %v182, 0
    %v213 = vsub.s32 0, %v182
    %v214 = vsel %vm212, %v213, %v182
    %v215 = vshrl.u32 %v214, 4
    %v216 = vand.u32 %v214, 15
    %v217 = vsub.s32 0, %v216
    %v218 = vsel %vm212, %v217, %v216
    %vm219 = vcmp.lt.s32.totalorder %v183, 0
    %v220 = vsub.s32 0, %v183
    %v221 = vsel %vm219, %v220, %v183
    %v222 = vshrl.u32 %v221, 4
    %v223 = vand.u32 %v221, 15
    %v224 = vsub.s32 0, %v223
    %v225 = vsel %vm219, %v224, %v223
    %vm226 = vcmp.ne.s32.totalorder %v190, 0
    %vm227 = vcmp.ne.s32.totalorder %v197, 0
    %vm228 = vcmp.ne.s32.totalorder %v204, 0
    %vm229 = vcmp.ne.s32.totalorder %v211, 0
    %vm230 = vcmp.ne.s32.totalorder %v218, 0
    %vm231 = vcmp.ne.s32.totalorder %v225, 0
    %vm232 = vcmp.lt.s32.totalorder %v190, 0
    %vm233 = vcmp.lt.s32.totalorder %v197, 0
    %vm234 = vcmp.lt.s32.totalorder %v204, 0
    %vm235 = vcmp.lt.s32.totalorder %v211, 0
    %vm236 = vcmp.lt.s32.totalorder %v218, 0
    %vm237 = vcmp.lt.s32.totalorder %v225, 0
    %vm238 = vmand %vm232, %vm226
    %vm239 = vmand %vm233, %vm227
    %vm240 = vmand %vm234, %vm228
    %vm241 = vmand %vm235, %vm229
    %vm242 = vmand %vm236, %vm230
    %vm243 = vmand %vm237, %vm231
    %v244 = vadd.s32 %v190, 16
    %v245 = vadd.s32 %v197, 16
    %v246 = vadd.s32 %v204, 16
    %v247 = vadd.s32 %v211, 16
    %v248 = vadd.s32 %v218, 16
    %v249 = vadd.s32 %v225, 16
    %v250 = vsel %vm238, %v244, %v190
    %v251 = vsel %vm239, %v245, %v197
    %v252 = vsel %vm240, %v246, %v204
    %v253 = vsel %vm241, %v247, %v211
    %v254 = vsel %vm242, %v248, %v218
    %v255 = vsel %vm243, %v249, %v225
    %v256 = vmax.f32 %v141, 0.0
    %v257 = vmax.f32 %v144, 0.0
    %v258 = vmax.f32 %v149, 0.0
    %v259 = vmax.f32 %v152, 0.0
    %v260 = vmax.f32 %v157, 0.0
    %v261 = vmax.f32 %v160, 0.0
    %v262 = vpack.c.bf16 %v257, %v256
    %v263 = vpack.c.bf16 %v259, %v258
    %v264 = vpack.c.bf16 %v261, %v260
    %v265 = vld [vmem:[#allocation2] sm:$0xf]
    %v266 = vld [vmem:[#allocation2 + $0x4] sm:$0xf]
    %v267 = vld [vmem:[#allocation2 + $0x8] sm:$0xf]
    %v268 = vld [vmem:[#allocation2 + $0xc] sm:$0xf]
    %v269 = vld [vmem:[#allocation2 + $0x10] sm:$0xf]
    %v270 = vld [vmem:[#allocation2 + $0x14] sm:$0xf]
    %v271 = vld [vmem:[#allocation2 + $0x18] sm:$0xf]
    %v272 = vld [vmem:[#allocation2 + $0x1c] sm:$0xf]
    %v273 = vld [vmem:[#allocation2 + $0x20] sm:$0xf]
    %v274 = vld [vmem:[#allocation2 + $0x24] sm:$0xf]
    %v275 = vld [vmem:[#allocation2 + $0x28] sm:$0xf]
    %v276 = vld [vmem:[#allocation2 + $0x2c] sm:$0xf]
    %v277 = vld [vmem:[#allocation2 + $0x30] sm:$0xf]
    %v278 = vld [vmem:[#allocation2 + $0x34] sm:$0xf]
    %v279 = vld [vmem:[#allocation2 + $0x38] sm:$0xf]
    %v280 = vld [vmem:[#allocation2 + $0x3c] sm:$0xf]
    %v281 = vld [vmem:[%s4] sm:$0x1]
    %v283 = vlaneseq
    %v284 = vshrl.u32 %v283, 7
    %v285 = vsub.s32 0, %v284
    %v286 = vrot.slane %v281, %v285
    %v304 = vunpack.c.l.b16 %v265
    %v305 = vunpack.c.l.b16 %v266
    %v306 = vunpack.c.l.b16 %v267
    %v307 = vunpack.c.l.b16 %v268
    %v308 = vunpack.c.l.b16 %v269
    %v309 = vunpack.c.l.b16 %v270
    %v310 = vunpack.c.l.b16 %v271
    %v311 = vunpack.c.l.b16 %v272
    %v312 = vunpack.c.l.b16 %v273
    %v313 = vunpack.c.l.b16 %v274
    %v314 = vunpack.c.l.b16 %v275
    %v315 = vunpack.c.l.b16 %v276
    %v316 = vunpack.c.l.b16 %v277
    %v317 = vunpack.c.l.b16 %v278
    %v318 = vunpack.c.l.b16 %v279
    %v319 = vunpack.c.l.b16 %v280
    %v320 = vpack.c.b16 %v305, %v304
    %v321 = vpack.c.b16 %v307, %v306
    %v322 = vpack.c.b16 %v309, %v308
    %v323 = vpack.c.b16 %v311, %v310
    %v324 = vpack.c.b16 %v313, %v312
    %v325 = vpack.c.b16 %v315, %v314
    %v326 = vpack.c.b16 %v317, %v316
    %v327 = vpack.c.b16 %v319, %v318
    %336 = vmatprep.subr.bf16.mxu0 0
    %337 = vmatpush1.bf16.msra.mxu0 %v327
    %338 = vmatprep.subr.bf16.mxu0 0
    %339 = vmatpush1.bf16.msra.mxu0 %v326
    %340 = vmatprep.subr.bf16.mxu0 0
    %341 = vmatpush1.bf16.msra.mxu0 %v325
    %342 = vmatprep.subr.bf16.mxu0 0
    %343 = vmatpush1.bf16.msra.mxu0 %v324
    %344 = vmatprep.subr.bf16.mxu0 0
    %345 = vmatpush1.bf16.msra.mxu0 %v323
    %346 = vmatprep.subr.bf16.mxu0 0
    %347 = vmatpush1.bf16.msra.mxu0 %v322
    %348 = vmatprep.subr.bf16.mxu0 0
    %349 = vmatpush1.bf16.msra.mxu0 %v321
    %350 = vmatprep.subr.bf16.mxu0 0
    %351 = vmatpush1.bf16.msra.mxu0 %v320
    %352 = vmatprep.subr.bf16.mxu0 0
    %353 = vmatpush2.bf16.msra.mxu0 0
    %354 = vmatprep.subr.bf16.mxu0 0
    %355 = vmatpush2.bf16.msra.mxu0 0
    %356 = vmatprep.subr.bf16.mxu0 0
    %357 = vmatpush2.bf16.msra.mxu0 0
    %358 = vmatprep.subr.bf16.mxu0 0
    %359 = vmatpush2.bf16.msra.mxu0 0
    %360 = vmatprep.subr.bf16.mxu0 0
    %361 = vmatpush2.bf16.msra.mxu0 0
    %362 = vmatprep.subr.bf16.mxu0 0
    %363 = vmatpush2.bf16.msra.mxu0 0
    %364 = vmatprep.subr.bf16.mxu0 0
    %365 = vmatpush2.bf16.msra.mxu0 0
    %366 = vmatprep.subr.bf16.mxu0 0
    %367 = vmatpush2.bf16.msra.mxu0 0
    %368 = vmatprep.mubr.bf16.mxu0 0
    %369 = vmatmul.mubr.bf16.gmra.mxu0 %v262
    %v370 = vpop.f32.mrf.mxu0
    %v371 = vadd.f32 %v286, %v370
    %v372 = vpop.f32.mrf.mxu0
    %v373 = vpop.f32.mrf.mxu0
    %v374 = vadd.f32 %v286, %v373
    %v375 = vpop.f32.mrf.mxu0
    %376 = vmatprep.mubr.bf16.mxu0 0
    %377 = vmatmul.mubr.bf16.gmra.mxu0 %v263
    %v378 = vpop.f32.mrf.mxu0
    %v379 = vadd.f32 %v286, %v378
    %v380 = vpop.f32.mrf.mxu0
    %v381 = vpop.f32.mrf.mxu0
    %v382 = vadd.f32 %v286, %v381
    %v383 = vpop.f32.mrf.mxu0
    %384 = vmatprep.mubr.bf16.mxu0 0
    %385 = vmatmul.mubr.bf16.gmra.mxu0 %v264
    %v386 = vpop.f32.mrf.mxu0
    %v387 = vadd.f32 %v286, %v386
    %v388 = vpop.f32.mrf.mxu0
    %v389 = vpop.f32.mrf.mxu0
    %v390 = vadd.f32 %v286, %v389
    %v391 = vpop.f32.mrf.mxu0
    %392 = vdwg.mxu0
    %v393 = vmax.f32 %v371, 0.0
    %v394 = vmax.f32 %v374, 0.0
    %v395 = vmax.f32 %v379, 0.0
    %v396 = vmax.f32 %v382, 0.0
    %v397 = vmax.f32 %v387, 0.0
    %v398 = vmax.f32 %v390, 0.0
    %vm399 = vcmp.ge.s32.totalorder %v250, 1
    %vm400 = vcmp.ge.s32.totalorder %v251, 1
    %vm401 = vcmp.ge.s32.totalorder %v252, 1
    %vm402 = vcmp.ge.s32.totalorder %v253, 1
    %vm403 = vcmp.ge.s32.totalorder %v254, 1
    %vm404 = vcmp.ge.s32.totalorder %v255, 1
    %v405 = vrot.slane %v393, 7
    %v406 = vrot.slane %v394, 7
    %v407 = vrot.slane %v395, 7
    %v408 = vrot.slane %v396, 7
    %v409 = vrot.slane %v397, 7
    %v410 = vrot.slane %v398, 7
    %vm411 = vcmp.lt.s32.totalorder %v164, 1
    %v412 = vsel %vm411, %v409, %v410
    %v413 = vsel %vm411, %v408, %v409
    %v414 = vsel %vm411, %v407, %v408
    %v415 = vsel %vm411, %v406, %v407
    %v416 = vsel %vm411, %v405, %v406
    %v417 = vsel %vm411, %v410, %v405
    %v418 = vsel %vm399, 1, 0
    %v419 = vsel %vm400, 1, 0
    %v420 = vsel %vm401, 1, 0
    %v421 = vsel %vm402, 1, 0
    %v422 = vsel %vm403, 1, 0
    %v423 = vsel %vm404, 1, 0
    %vm424 = vcmp.eq.s32.totalorder %v418, 1
    %vm425 = vcmp.eq.s32.totalorder %v419, 1
    %vm426 = vcmp.eq.s32.totalorder %v420, 1
    %vm427 = vcmp.eq.s32.totalorder %v421, 1
    %vm428 = vcmp.eq.s32.totalorder %v422, 1
    %vm429 = vcmp.eq.s32.totalorder %v423, 1
    %v430 = vsel %vm424, %v417, 0.0
    %v431 = vsel %vm425, %v416, 0.0
    %v432 = vsel %vm426, %v415, 0.0
    %v433 = vsel %vm427, %v414, 0.0
    %v434 = vsel %vm428, %v413, 0.0
    %v435 = vsel %vm429, %v412, 0.0
    %vm436 = vcmp.lt.s32.totalorder %v250, 15
    %vm437 = vcmp.lt.s32.totalorder %v251, 15
    %vm438 = vcmp.lt.s32.totalorder %v252, 15
    %vm439 = vcmp.lt.s32.totalorder %v253, 15
    %vm440 = vcmp.lt.s32.totalorder %v254, 15
    %vm441 = vcmp.lt.s32.totalorder %v255, 15
    %v442 = vrot.slane %v393, 1
    %v443 = vrot.slane %v394, 1
    %v444 = vrot.slane %v395, 1
    %v445 = vrot.slane %v396, 1
    %v446 = vrot.slane %v397, 1
    %v447 = vrot.slane %v398, 1
    %vm448 = vcmp.lt.s32.totalorder %v164, 7
    %v449 = vsel %vm448, %v446, %v447
    %v450 = vsel %vm448, %v445, %v446
    %v451 = vsel %vm448, %v444, %v445
    %v452 = vsel %vm448, %v443, %v444
    %v453 = vsel %vm448, %v442, %v443
    %v454 = vsel %vm448, %v447, %v442
    %v455 = vsel %vm436, 1, 0
    %v456 = vsel %vm437, 1, 0
    %v457 = vsel %vm438, 1, 0
    %v458 = vsel %vm439, 1, 0
    %v459 = vsel %vm440, 1, 0
    %v460 = vsel %vm441, 1, 0
    %vm461 = vcmp.eq.s32.totalorder %v455, 1
    %vm462 = vcmp.eq.s32.totalorder %v456, 1
    %vm463 = vcmp.eq.s32.totalorder %v457, 1
    %vm464 = vcmp.eq.s32.totalorder %v458, 1
    %vm465 = vcmp.eq.s32.totalorder %v459, 1
    %vm466 = vcmp.eq.s32.totalorder %v460, 1
    %v467 = vsel %vm461, %v453, 0.0
    %v468 = vsel %vm462, %v452, 0.0
    %v469 = vsel %vm463, %v451, 0.0
    %v470 = vsel %vm464, %v450, 0.0
    %v471 = vsel %vm465, %v449, 0.0
    %v472 = vsel %vm466, %v454, 0.0
    %v473 = vpack.c.bf16 %v394, %v393
    %v474 = vpack.c.bf16 %v396, %v395
    %v475 = vpack.c.bf16 %v398, %v397
    %s476 = scalar_lea.vmem [#allocation5], 64
    %v477 = vld [vmem:[%s476] sm:$0xf]
    %v478 = vld [vmem:[%s476 + $0x4] sm:$0xf]
    %v479 = vld [vmem:[%s476 + $0x8] sm:$0xf]
    %v480 = vld [vmem:[%s476 + $0xc] sm:$0xf]
    %v481 = vld [vmem:[%s476 + $0x10] sm:$0xf]
    %v482 = vld [vmem:[%s476 + $0x14] sm:$0xf]
    %v483 = vld [vmem:[%s476 + $0x18] sm:$0xf]
    %v484 = vld [vmem:[%s476 + $0x1c] sm:$0xf]
    %v485 = vld [vmem:[%s476 + $0x20] sm:$0xf]
    %v486 = vld [vmem:[%s476 + $0x24] sm:$0xf]
    %v487 = vld [vmem:[%s476 + $0x28] sm:$0xf]
    %v488 = vld [vmem:[%s476 + $0x2c] sm:$0xf]
    %v489 = vld [vmem:[%s476 + $0x30] sm:$0xf]
    %v490 = vld [vmem:[%s476 + $0x34] sm:$0xf]
    %v491 = vld [vmem:[%s476 + $0x38] sm:$0xf]
    %v492 = vld [vmem:[%s476 + $0x3c] sm:$0xf]
    %v493 = vpack.c.bf16 %v431, %v430
    %v494 = vpack.c.bf16 %v433, %v432
    %v495 = vpack.c.bf16 %v435, %v434
    %v496 = vld [vmem:[#allocation5] sm:$0xf]
    %v497 = vld [vmem:[#allocation5 + $0x4] sm:$0xf]
    %v498 = vld [vmem:[#allocation5 + $0x8] sm:$0xf]
    %v499 = vld [vmem:[#allocation5 + $0xc] sm:$0xf]
    %v500 = vld [vmem:[#allocation5 + $0x10] sm:$0xf]
    %v501 = vld [vmem:[#allocation5 + $0x14] sm:$0xf]
    %v502 = vld [vmem:[#allocation5 + $0x18] sm:$0xf]
    %v503 = vld [vmem:[#allocation5 + $0x1c] sm:$0xf]
    %v504 = vld [vmem:[#allocation5 + $0x20] sm:$0xf]
    %v505 = vld [vmem:[#allocation5 + $0x24] sm:$0xf]
    %v506 = vld [vmem:[#allocation5 + $0x28] sm:$0xf]
    %v507 = vld [vmem:[#allocation5 + $0x2c] sm:$0xf]
    %v508 = vld [vmem:[#allocation5 + $0x30] sm:$0xf]
    %v509 = vld [vmem:[#allocation5 + $0x34] sm:$0xf]
    %v510 = vld [vmem:[#allocation5 + $0x38] sm:$0xf]
    %v511 = vld [vmem:[#allocation5 + $0x3c] sm:$0xf]
    %v528 = vunpack.c.l.b16 %v496
    %v529 = vunpack.c.l.b16 %v497
    %v530 = vunpack.c.l.b16 %v498
    %v531 = vunpack.c.l.b16 %v499
    %v532 = vunpack.c.l.b16 %v500
    %v533 = vunpack.c.l.b16 %v501
    %v534 = vunpack.c.l.b16 %v502
    %v535 = vunpack.c.l.b16 %v503
    %v536 = vunpack.c.l.b16 %v504
    %v537 = vunpack.c.l.b16 %v505
    %v538 = vunpack.c.l.b16 %v506
    %v539 = vunpack.c.l.b16 %v507
    %v540 = vunpack.c.l.b16 %v508
    %v541 = vunpack.c.l.b16 %v509
    %v542 = vunpack.c.l.b16 %v510
    %v543 = vunpack.c.l.b16 %v511
    %v544 = vpack.c.b16 %v529, %v528
    %v545 = vpack.c.b16 %v531, %v530
    %v546 = vpack.c.b16 %v533, %v532
    %v547 = vpack.c.b16 %v535, %v534
    %v548 = vpack.c.b16 %v537, %v536
    %v549 = vpack.c.b16 %v539, %v538
    %v550 = vpack.c.b16 %v541, %v540
    %v551 = vpack.c.b16 %v543, %v542
    %560 = vmatprep.subr.bf16.mxu0 0
    %561 = vmatpush1.bf16.msra.mxu0 %v551
    %562 = vmatprep.subr.bf16.mxu0 0
    %563 = vmatpush1.bf16.msra.mxu0 %v550
    %564 = vmatprep.subr.bf16.mxu0 0
    %565 = vmatpush1.bf16.msra.mxu0 %v549
    %566 = vmatprep.subr.bf16.mxu0 0
    %567 = vmatpush1.bf16.msra.mxu0 %v548
    %568 = vmatprep.subr.bf16.mxu0 0
    %569 = vmatpush1.bf16.msra.mxu0 %v547
    %570 = vmatprep.subr.bf16.mxu0 0
    %571 = vmatpush1.bf16.msra.mxu0 %v546
    %572 = vmatprep.subr.bf16.mxu0 0
    %573 = vmatpush1.bf16.msra.mxu0 %v545
    %574 = vmatprep.subr.bf16.mxu0 0
    %575 = vmatpush1.bf16.msra.mxu0 %v544
    %576 = vmatprep.subr.bf16.mxu0 0
    %577 = vmatpush2.bf16.msra.mxu0 0
    %578 = vmatprep.subr.bf16.mxu0 0
    %579 = vmatpush2.bf16.msra.mxu0 0
    %580 = vmatprep.subr.bf16.mxu0 0
    %581 = vmatpush2.bf16.msra.mxu0 0
    %582 = vmatprep.subr.bf16.mxu0 0
    %583 = vmatpush2.bf16.msra.mxu0 0
    %584 = vmatprep.subr.bf16.mxu0 0
    %585 = vmatpush2.bf16.msra.mxu0 0
    %586 = vmatprep.subr.bf16.mxu0 0
    %587 = vmatpush2.bf16.msra.mxu0 0
    %588 = vmatprep.subr.bf16.mxu0 0
    %589 = vmatpush2.bf16.msra.mxu0 0
    %590 = vmatprep.subr.bf16.mxu0 0
    %591 = vmatpush2.bf16.msra.mxu0 0
    %592 = vmatprep.mubr.bf16.mxu0 0
    %593 = vmatmul.mubr.bf16.gmra.mxu0 %v493
    %v594 = vpop.f32.mrf.mxu0
    %v595 = vadd.f32 0.0, %v594
    %v596 = vpop.f32.mrf.mxu0
    %v597 = vpop.f32.mrf.mxu0
    %v598 = vadd.f32 0.0, %v597
    %v599 = vpop.f32.mrf.mxu0
    %600 = vmatprep.mubr.bf16.mxu0 0
    %601 = vmatmul.mubr.bf16.gmra.mxu0 %v494
    %v602 = vpop.f32.mrf.mxu0
    %v603 = vadd.f32 0.0, %v602
    %v604 = vpop.f32.mrf.mxu0
    %v605 = vpop.f32.mrf.mxu0
    %v606 = vadd.f32 0.0, %v605
    %v607 = vpop.f32.mrf.mxu0
    %608 = vmatprep.mubr.bf16.mxu0 0
    %609 = vmatmul.mubr.bf16.gmra.mxu0 %v495
    %v610 = vpop.f32.mrf.mxu0
    %v611 = vadd.f32 0.0, %v610
    %v612 = vpop.f32.mrf.mxu0
    %v613 = vpop.f32.mrf.mxu0
    %v614 = vadd.f32 0.0, %v613
    %v615 = vpop.f32.mrf.mxu0
    %616 = vdwg.mxu0
    %v633 = vunpack.c.l.b16 %v477
    %v634 = vunpack.c.l.b16 %v478
    %v635 = vunpack.c.l.b16 %v479
    %v636 = vunpack.c.l.b16 %v480
    %v637 = vunpack.c.l.b16 %v481
    %v638 = vunpack.c.l.b16 %v482
    %v639 = vunpack.c.l.b16 %v483
    %v640 = vunpack.c.l.b16 %v484
    %v641 = vunpack.c.l.b16 %v485
    %v642 = vunpack.c.l.b16 %v486
    %v643 = vunpack.c.l.b16 %v487
    %v644 = vunpack.c.l.b16 %v488
    %v645 = vunpack.c.l.b16 %v489
    %v646 = vunpack.c.l.b16 %v490
    %v647 = vunpack.c.l.b16 %v491
    %v648 = vunpack.c.l.b16 %v492
    %v649 = vpack.c.b16 %v634, %v633
    %v650 = vpack.c.b16 %v636, %v635
    %v651 = vpack.c.b16 %v638, %v637
    %v652 = vpack.c.b16 %v640, %v639
    %v653 = vpack.c.b16 %v642, %v641
    %v654 = vpack.c.b16 %v644, %v643
    %v655 = vpack.c.b16 %v646, %v645
    %v656 = vpack.c.b16 %v648, %v647
    %665 = vmatprep.subr.bf16.mxu0 0
    %666 = vmatpush1.bf16.msra.mxu0 %v656
    %667 = vmatprep.subr.bf16.mxu0 0
    %668 = vmatpush1.bf16.msra.mxu0 %v655
    %669 = vmatprep.subr.bf16.mxu0 0
    %670 = vmatpush1.bf16.msra.mxu0 %v654
    %671 = vmatprep.subr.bf16.mxu0 0
    %672 = vmatpush1.bf16.msra.mxu0 %v653
    %673 = vmatprep.subr.bf16.mxu0 0
    %674 = vmatpush1.bf16.msra.mxu0 %v652
    %675 = vmatprep.subr.bf16.mxu0 0
    %676 = vmatpush1.bf16.msra.mxu0 %v651
    %677 = vmatprep.subr.bf16.mxu0 0
    %678 = vmatpush1.bf16.msra.mxu0 %v650
    %679 = vmatprep.subr.bf16.mxu0 0
    %680 = vmatpush1.bf16.msra.mxu0 %v649
    %681 = vmatprep.subr.bf16.mxu0 0
    %682 = vmatpush2.bf16.msra.mxu0 0
    %683 = vmatprep.subr.bf16.mxu0 0
    %684 = vmatpush2.bf16.msra.mxu0 0
    %685 = vmatprep.subr.bf16.mxu0 0
    %686 = vmatpush2.bf16.msra.mxu0 0
    %687 = vmatprep.subr.bf16.mxu0 0
    %688 = vmatpush2.bf16.msra.mxu0 0
    %689 = vmatprep.subr.bf16.mxu0 0
    %690 = vmatpush2.bf16.msra.mxu0 0
    %691 = vmatprep.subr.bf16.mxu0 0
    %692 = vmatpush2.bf16.msra.mxu0 0
    %693 = vmatprep.subr.bf16.mxu0 0
    %694 = vmatpush2.bf16.msra.mxu0 0
    %695 = vmatprep.subr.bf16.mxu0 0
    %696 = vmatpush2.bf16.msra.mxu0 0
    %697 = vmatprep.mubr.bf16.mxu0 0
    %698 = vmatmul.mubr.bf16.gmra.mxu0 %v473
    %v699 = vpop.f32.mrf.mxu0
    %v700 = vadd.f32 %v595, %v699
    %v701 = vpop.f32.mrf.mxu0
    %v702 = vpop.f32.mrf.mxu0
    %v703 = vadd.f32 %v598, %v702
    %v704 = vpop.f32.mrf.mxu0
    %705 = vmatprep.mubr.bf16.mxu0 0
    %706 = vmatmul.mubr.bf16.gmra.mxu0 %v474
    %v707 = vpop.f32.mrf.mxu0
    %v708 = vadd.f32 %v603, %v707
    %v709 = vpop.f32.mrf.mxu0
    %v710 = vpop.f32.mrf.mxu0
    %v711 = vadd.f32 %v606, %v710
    %v712 = vpop.f32.mrf.mxu0
    %713 = vmatprep.mubr.bf16.mxu0 0
    %714 = vmatmul.mubr.bf16.gmra.mxu0 %v475
    %v715 = vpop.f32.mrf.mxu0
    %v716 = vadd.f32 %v611, %v715
    %v717 = vpop.f32.mrf.mxu0
    %v718 = vpop.f32.mrf.mxu0
    %v719 = vadd.f32 %v614, %v718
    %v720 = vpop.f32.mrf.mxu0
    %721 = vdwg.mxu0
    %v722 = vpack.c.bf16 %v468, %v467
    %v723 = vpack.c.bf16 %v470, %v469
    %v724 = vpack.c.bf16 %v472, %v471
    %s725 = scalar_lea.vmem [#allocation5], 128
    %v726 = vld [vmem:[%s725] sm:$0xf]
    %v727 = vld [vmem:[%s725 + $0x4] sm:$0xf]
    %v728 = vld [vmem:[%s725 + $0x8] sm:$0xf]
    %v729 = vld [vmem:[%s725 + $0xc] sm:$0xf]
    %v730 = vld [vmem:[%s725 + $0x10] sm:$0xf]
    %v731 = vld [vmem:[%s725 + $0x14] sm:$0xf]
    %v732 = vld [vmem:[%s725 + $0x18] sm:$0xf]
    %v733 = vld [vmem:[%s725 + $0x1c] sm:$0xf]
    %v734 = vld [vmem:[%s725 + $0x20] sm:$0xf]
    %v735 = vld [vmem:[%s725 + $0x24] sm:$0xf]
    %v736 = vld [vmem:[%s725 + $0x28] sm:$0xf]
    %v737 = vld [vmem:[%s725 + $0x2c] sm:$0xf]
    %v738 = vld [vmem:[%s725 + $0x30] sm:$0xf]
    %v739 = vld [vmem:[%s725 + $0x34] sm:$0xf]
    %v740 = vld [vmem:[%s725 + $0x38] sm:$0xf]
    %v741 = vld [vmem:[%s725 + $0x3c] sm:$0xf]
    %v758 = vunpack.c.l.b16 %v726
    %v759 = vunpack.c.l.b16 %v727
    %v760 = vunpack.c.l.b16 %v728
    %v761 = vunpack.c.l.b16 %v729
    %v762 = vunpack.c.l.b16 %v730
    %v763 = vunpack.c.l.b16 %v731
    %v764 = vunpack.c.l.b16 %v732
    %v765 = vunpack.c.l.b16 %v733
    %v766 = vunpack.c.l.b16 %v734
    %v767 = vunpack.c.l.b16 %v735
    %v768 = vunpack.c.l.b16 %v736
    %v769 = vunpack.c.l.b16 %v737
    %v770 = vunpack.c.l.b16 %v738
    %v771 = vunpack.c.l.b16 %v739
    %v772 = vunpack.c.l.b16 %v740
    %v773 = vunpack.c.l.b16 %v741
    %v774 = vpack.c.b16 %v759, %v758
    %v775 = vpack.c.b16 %v761, %v760
    %v776 = vpack.c.b16 %v763, %v762
    %v777 = vpack.c.b16 %v765, %v764
    %v778 = vpack.c.b16 %v767, %v766
    %v779 = vpack.c.b16 %v769, %v768
    %v780 = vpack.c.b16 %v771, %v770
    %v781 = vpack.c.b16 %v773, %v772
    %790 = vmatprep.subr.bf16.mxu0 0
    %791 = vmatpush1.bf16.msra.mxu0 %v781
    %792 = vmatprep.subr.bf16.mxu0 0
    %793 = vmatpush1.bf16.msra.mxu0 %v780
    %794 = vmatprep.subr.bf16.mxu0 0
    %795 = vmatpush1.bf16.msra.mxu0 %v779
    %796 = vmatprep.subr.bf16.mxu0 0
    %797 = vmatpush1.bf16.msra.mxu0 %v778
    %798 = vmatprep.subr.bf16.mxu0 0
    %799 = vmatpush1.bf16.msra.mxu0 %v777
    %800 = vmatprep.subr.bf16.mxu0 0
    %801 = vmatpush1.bf16.msra.mxu0 %v776
    %802 = vmatprep.subr.bf16.mxu0 0
    %803 = vmatpush1.bf16.msra.mxu0 %v775
    %804 = vmatprep.subr.bf16.mxu0 0
    %805 = vmatpush1.bf16.msra.mxu0 %v774
    %806 = vmatprep.subr.bf16.mxu0 0
    %807 = vmatpush2.bf16.msra.mxu0 0
    %808 = vmatprep.subr.bf16.mxu0 0
    %809 = vmatpush2.bf16.msra.mxu0 0
    %810 = vmatprep.subr.bf16.mxu0 0
    %811 = vmatpush2.bf16.msra.mxu0 0
    %812 = vmatprep.subr.bf16.mxu0 0
    %813 = vmatpush2.bf16.msra.mxu0 0
    %814 = vmatprep.subr.bf16.mxu0 0
    %815 = vmatpush2.bf16.msra.mxu0 0
    %816 = vmatprep.subr.bf16.mxu0 0
    %817 = vmatpush2.bf16.msra.mxu0 0
    %818 = vmatprep.subr.bf16.mxu0 0
    %819 = vmatpush2.bf16.msra.mxu0 0
    %820 = vmatprep.subr.bf16.mxu0 0
    %821 = vmatpush2.bf16.msra.mxu0 0
    %822 = vmatprep.mubr.bf16.mxu0 0
    %823 = vmatmul.mubr.bf16.gmra.mxu0 %v722
    %v824 = vpop.f32.mrf.mxu0
    %v825 = vadd.f32 0.0, %v824
    %v826 = vpop.f32.mrf.mxu0
    %v827 = vpop.f32.mrf.mxu0
    %v828 = vadd.f32 0.0, %v827
    %v829 = vpop.f32.mrf.mxu0
    %830 = vmatprep.mubr.bf16.mxu0 0
    %831 = vmatmul.mubr.bf16.gmra.mxu0 %v723
    %v832 = vpop.f32.mrf.mxu0
    %v833 = vadd.f32 0.0, %v832
    %v834 = vpop.f32.mrf.mxu0
    %v835 = vpop.f32.mrf.mxu0
    %v836 = vadd.f32 0.0, %v835
    %v837 = vpop.f32.mrf.mxu0
    %838 = vmatprep.mubr.bf16.mxu0 0
    %839 = vmatmul.mubr.bf16.gmra.mxu0 %v724
    %v840 = vpop.f32.mrf.mxu0
    %v841 = vadd.f32 0.0, %v840
    %v842 = vpop.f32.mrf.mxu0
    %v843 = vpop.f32.mrf.mxu0
    %v844 = vadd.f32 0.0, %v843
    %v845 = vpop.f32.mrf.mxu0
    %846 = vdwg.mxu0
    %v847 = vadd.f32 %v700, %v825
    %v848 = vadd.f32 %v703, %v828
    %v849 = vadd.f32 %v708, %v833
    %v850 = vadd.f32 %v711, %v836
    %v851 = vadd.f32 %v716, %v841
    %v852 = vadd.f32 %v719, %v844
    %v853 = vld [vmem:[%s6] sm:$0x1]
    %v855 = vlaneseq
    %v856 = vshrl.u32 %v855, 7
    %v857 = vsub.s32 0, %v856
    %v858 = vrot.slane %v853, %v857
    %v860 = vadd.f32 %v847, %v858
    %v861 = vadd.f32 %v848, %v858
    %v862 = vadd.f32 %v849, %v858
    %v863 = vadd.f32 %v850, %v858
    %v864 = vadd.f32 %v851, %v858
    %v865 = vadd.f32 %v852, %v858
    %v866 = vmax.f32 %v860, 0.0
    %v867 = vmax.f32 %v861, 0.0
    %v868 = vmax.f32 %v862, 0.0
    %v869 = vmax.f32 %v863, 0.0
    %v870 = vmax.f32 %v864, 0.0
    %v871 = vmax.f32 %v865, 0.0
    %v872 = vpack.c.bf16 %v867, %v866
    %v873 = vpack.c.bf16 %v869, %v868
    %v874 = vpack.c.bf16 %v871, %v870
    %v875 = vld [vmem:[#allocation7] sm:$0xf]
    %v876 = vld [vmem:[#allocation7 + $0x4] sm:$0xf]
    %v877 = vld [vmem:[#allocation7 + $0x8] sm:$0xf]
    %v878 = vld [vmem:[#allocation7 + $0xc] sm:$0xf]
    %v879 = vld [vmem:[#allocation7 + $0x10] sm:$0xf]
    %v880 = vld [vmem:[#allocation7 + $0x14] sm:$0xf]
    %v881 = vld [vmem:[#allocation7 + $0x18] sm:$0xf]
    %v882 = vld [vmem:[#allocation7 + $0x1c] sm:$0xf]
    %v883 = vld [vmem:[#allocation7 + $0x20] sm:$0xf]
    %v884 = vld [vmem:[#allocation7 + $0x24] sm:$0xf]
    %v885 = vld [vmem:[#allocation7 + $0x28] sm:$0xf]
    %v886 = vld [vmem:[#allocation7 + $0x2c] sm:$0xf]
    %v887 = vld [vmem:[#allocation7 + $0x30] sm:$0xf]
    %v888 = vld [vmem:[#allocation7 + $0x34] sm:$0xf]
    %v889 = vld [vmem:[#allocation7 + $0x38] sm:$0xf]
    %v890 = vld [vmem:[#allocation7 + $0x3c] sm:$0xf]
    %v907 = vunpack.c.l.b16 %v875
    %v908 = vunpack.c.l.b16 %v876
    %v909 = vunpack.c.l.b16 %v877
    %v910 = vunpack.c.l.b16 %v878
    %v911 = vunpack.c.l.b16 %v879
    %v912 = vunpack.c.l.b16 %v880
    %v913 = vunpack.c.l.b16 %v881
    %v914 = vunpack.c.l.b16 %v882
    %v915 = vunpack.c.l.b16 %v883
    %v916 = vunpack.c.l.b16 %v884
    %v917 = vunpack.c.l.b16 %v885
    %v918 = vunpack.c.l.b16 %v886
    %v919 = vunpack.c.l.b16 %v887
    %v920 = vunpack.c.l.b16 %v888
    %v921 = vunpack.c.l.b16 %v889
    %v922 = vunpack.c.l.b16 %v890
    %v923 = vpack.c.b16 %v908, %v907
    %v924 = vpack.c.b16 %v910, %v909
    %v925 = vpack.c.b16 %v912, %v911
    %v926 = vpack.c.b16 %v914, %v913
    %v927 = vpack.c.b16 %v916, %v915
    %v928 = vpack.c.b16 %v918, %v917
    %v929 = vpack.c.b16 %v920, %v919
    %v930 = vpack.c.b16 %v922, %v921
    %939 = vmatprep.subr.bf16.mxu0 0
    %940 = vmatpush1.bf16.msra.mxu0 %v930
    %941 = vmatprep.subr.bf16.mxu0 0
    %942 = vmatpush1.bf16.msra.mxu0 %v929
    %943 = vmatprep.subr.bf16.mxu0 0
    %944 = vmatpush1.bf16.msra.mxu0 %v928
    %945 = vmatprep.subr.bf16.mxu0 0
    %946 = vmatpush1.bf16.msra.mxu0 %v927
    %947 = vmatprep.subr.bf16.mxu0 0
    %948 = vmatpush1.bf16.msra.mxu0 %v926
    %949 = vmatprep.subr.bf16.mxu0 0
    %950 = vmatpush1.bf16.msra.mxu0 %v925
    %951 = vmatprep.subr.bf16.mxu0 0
    %952 = vmatpush1.bf16.msra.mxu0 %v924
    %953 = vmatprep.subr.bf16.mxu0 0
    %954 = vmatpush1.bf16.msra.mxu0 %v923
    %955 = vmatprep.subr.bf16.mxu0 0
    %956 = vmatpush2.bf16.msra.mxu0 0
    %957 = vmatprep.subr.bf16.mxu0 0
    %958 = vmatpush2.bf16.msra.mxu0 0
    %959 = vmatprep.subr.bf16.mxu0 0
    %960 = vmatpush2.bf16.msra.mxu0 0
    %961 = vmatprep.subr.bf16.mxu0 0
    %962 = vmatpush2.bf16.msra.mxu0 0
    %963 = vmatprep.subr.bf16.mxu0 0
    %964 = vmatpush2.bf16.msra.mxu0 0
    %965 = vmatprep.subr.bf16.mxu0 0
    %966 = vmatpush2.bf16.msra.mxu0 0
    %967 = vmatprep.subr.bf16.mxu0 0
    %968 = vmatpush2.bf16.msra.mxu0 0
    %969 = vmatprep.subr.bf16.mxu0 0
    %970 = vmatpush2.bf16.msra.mxu0 0
    %971 = vmatprep.mubr.bf16.mxu0 0
    %972 = vmatmul.mubr.bf16.gmra.mxu0 %v872
    %v973 = vpop.f32.mrf.mxu0
    %v974 = vadd.f32 0.0, %v973
    %v975 = vpop.f32.mrf.mxu0
    %v976 = vpop.f32.mrf.mxu0
    %v977 = vadd.f32 0.0, %v976
    %v978 = vpop.f32.mrf.mxu0
    %979 = vmatprep.mubr.bf16.mxu0 0
    %980 = vmatmul.mubr.bf16.gmra.mxu0 %v873
    %v981 = vpop.f32.mrf.mxu0
    %v982 = vadd.f32 0.0, %v981
    %v983 = vpop.f32.mrf.mxu0
    %v984 = vpop.f32.mrf.mxu0
    %v985 = vadd.f32 0.0, %v984
    %v986 = vpop.f32.mrf.mxu0
    %987 = vmatprep.mubr.bf16.mxu0 0
    %988 = vmatmul.mubr.bf16.gmra.mxu0 %v874
    %v989 = vpop.f32.mrf.mxu0
    %v990 = vadd.f32 0.0, %v989
    %v991 = vpop.f32.mrf.mxu0
    %v992 = vpop.f32.mrf.mxu0
    %v993 = vadd.f32 0.0, %v992
    %v994 = vpop.f32.mrf.mxu0
    %995 = vdwg.mxu0
    %v996 = vadd.f32 %v141, %v974
    %v997 = vadd.f32 %v144, %v977
    %v998 = vadd.f32 %v149, %v982
    %v999 = vadd.f32 %v152, %v985
    %v1000 = vadd.f32 %v157, %v990
    %v1001 = vadd.f32 %v160, %v993
    %v1002 = vld [vmem:[%s8] sm:$0x1]
    %v1004 = vlaneseq
    %v1005 = vshrl.u32 %v1004, 7
    %v1006 = vsub.s32 0, %v1005
    %v1007 = vrot.slane %v1002, %v1006
    %v1009 = vadd.f32 %v996, %v1007
    %v1010 = vadd.f32 %v997, %v1007
    %v1011 = vadd.f32 %v998, %v1007
    %v1012 = vadd.f32 %v999, %v1007
    %v1013 = vadd.f32 %v1000, %v1007
    %v1014 = vadd.f32 %v1001, %v1007
    %v1015 = vmax.f32 %v1009, 0.0
    %v1016 = vmax.f32 %v1010, 0.0
    %v1017 = vmax.f32 %v1011, 0.0
    %v1018 = vmax.f32 %v1012, 0.0
    %v1019 = vmax.f32 %v1013, 0.0
    %v1020 = vmax.f32 %v1014, 0.0
    %v1021 = vpack.c.bf16 %v1016, %v1015
    %v1022 = vpack.c.bf16 %v1018, %v1017
    %v1023 = vpack.c.bf16 %v1020, %v1019
    %s1024 = scalar_lea.vmem [#allocation2], 64
    %v1025 = vld [vmem:[%s1024] sm:$0xf]
    %v1026 = vld [vmem:[%s1024 + $0x4] sm:$0xf]
    %v1027 = vld [vmem:[%s1024 + $0x8] sm:$0xf]
    %v1028 = vld [vmem:[%s1024 + $0xc] sm:$0xf]
    %v1029 = vld [vmem:[%s1024 + $0x10] sm:$0xf]
    %v1030 = vld [vmem:[%s1024 + $0x14] sm:$0xf]
    %v1031 = vld [vmem:[%s1024 + $0x18] sm:$0xf]
    %v1032 = vld [vmem:[%s1024 + $0x1c] sm:$0xf]
    %v1033 = vld [vmem:[%s1024 + $0x20] sm:$0xf]
    %v1034 = vld [vmem:[%s1024 + $0x24] sm:$0xf]
    %v1035 = vld [vmem:[%s1024 + $0x28] sm:$0xf]
    %v1036 = vld [vmem:[%s1024 + $0x2c] sm:$0xf]
    %v1037 = vld [vmem:[%s1024 + $0x30] sm:$0xf]
    %v1038 = vld [vmem:[%s1024 + $0x34] sm:$0xf]
    %v1039 = vld [vmem:[%s1024 + $0x38] sm:$0xf]
    %v1040 = vld [vmem:[%s1024 + $0x3c] sm:$0xf]
    %s1041 = scalar_lea.vmem %s4, 1
    %v1042 = vld [vmem:[%s1041] sm:$0x1]
    %v1044 = vlaneseq
    %v1045 = vshrl.u32 %v1044, 7
    %v1046 = vsub.s32 0, %v1045
    %v1047 = vrot.slane %v1042, %v1046
    %v1065 = vunpack.c.l.b16 %v1025
    %v1066 = vunpack.c.l.b16 %v1026
    %v1067 = vunpack.c.l.b16 %v1027
    %v1068 = vunpack.c.l.b16 %v1028
    %v1069 = vunpack.c.l.b16 %v1029
    %v1070 = vunpack.c.l.b16 %v1030
    %v1071 = vunpack.c.l.b16 %v1031
    %v1072 = vunpack.c.l.b16 %v1032
    %v1073 = vunpack.c.l.b16 %v1033
    %v1074 = vunpack.c.l.b16 %v1034
    %v1075 = vunpack.c.l.b16 %v1035
    %v1076 = vunpack.c.l.b16 %v1036
    %v1077 = vunpack.c.l.b16 %v1037
    %v1078 = vunpack.c.l.b16 %v1038
    %v1079 = vunpack.c.l.b16 %v1039
    %v1080 = vunpack.c.l.b16 %v1040
    %v1081 = vpack.c.b16 %v1066, %v1065
    %v1082 = vpack.c.b16 %v1068, %v1067
    %v1083 = vpack.c.b16 %v1070, %v1069
    %v1084 = vpack.c.b16 %v1072, %v1071
    %v1085 = vpack.c.b16 %v1074, %v1073
    %v1086 = vpack.c.b16 %v1076, %v1075
    %v1087 = vpack.c.b16 %v1078, %v1077
    %v1088 = vpack.c.b16 %v1080, %v1079
    %1097 = vmatprep.subr.bf16.mxu0 0
    %1098 = vmatpush1.bf16.msra.mxu0 %v1088
    %1099 = vmatprep.subr.bf16.mxu0 0
    %1100 = vmatpush1.bf16.msra.mxu0 %v1087
    %1101 = vmatprep.subr.bf16.mxu0 0
    %1102 = vmatpush1.bf16.msra.mxu0 %v1086
    %1103 = vmatprep.subr.bf16.mxu0 0
    %1104 = vmatpush1.bf16.msra.mxu0 %v1085
    %1105 = vmatprep.subr.bf16.mxu0 0
    %1106 = vmatpush1.bf16.msra.mxu0 %v1084
    %1107 = vmatprep.subr.bf16.mxu0 0
    %1108 = vmatpush1.bf16.msra.mxu0 %v1083
    %1109 = vmatprep.subr.bf16.mxu0 0
    %1110 = vmatpush1.bf16.msra.mxu0 %v1082
    %1111 = vmatprep.subr.bf16.mxu0 0
    %1112 = vmatpush1.bf16.msra.mxu0 %v1081
    %1113 = vmatprep.subr.bf16.mxu0 0
    %1114 = vmatpush2.bf16.msra.mxu0 0
    %1115 = vmatprep.subr.bf16.mxu0 0
    %1116 = vmatpush2.bf16.msra.mxu0 0
    %1117 = vmatprep.subr.bf16.mxu0 0
    %1118 = vmatpush2.bf16.msra.mxu0 0
    %1119 = vmatprep.subr.bf16.mxu0 0
    %1120 = vmatpush2.bf16.msra.mxu0 0
    %1121 = vmatprep.subr.bf16.mxu0 0
    %1122 = vmatpush2.bf16.msra.mxu0 0
    %1123 = vmatprep.subr.bf16.mxu0 0
    %1124 = vmatpush2.bf16.msra.mxu0 0
    %1125 = vmatprep.subr.bf16.mxu0 0
    %1126 = vmatpush2.bf16.msra.mxu0 0
    %1127 = vmatprep.subr.bf16.mxu0 0
    %1128 = vmatpush2.bf16.msra.mxu0 0
    %1129 = vmatprep.mubr.bf16.mxu0 0
    %1130 = vmatmul.mubr.bf16.gmra.mxu0 %v1021
    %v1131 = vpop.f32.mrf.mxu0
    %v1132 = vadd.f32 %v1047, %v1131
    %v1133 = vpop.f32.mrf.mxu0
    %v1134 = vpop.f32.mrf.mxu0
    %v1135 = vadd.f32 %v1047, %v1134
    %v1136 = vpop.f32.mrf.mxu0
    %1137 = vmatprep.mubr.bf16.mxu0 0
    %1138 = vmatmul.mubr.bf16.gmra.mxu0 %v1022
    %v1139 = vpop.f32.mrf.mxu0
    %v1140 = vadd.f32 %v1047, %v1139
    %v1141 = vpop.f32.mrf.mxu0
    %v1142 = vpop.f32.mrf.mxu0
    %v1143 = vadd.f32 %v1047, %v1142
    %v1144 = vpop.f32.mrf.mxu0
    %1145 = vmatprep.mubr.bf16.mxu0 0
    %1146 = vmatmul.mubr.bf16.gmra.mxu0 %v1023
    %v1147 = vpop.f32.mrf.mxu0
    %v1148 = vadd.f32 %v1047, %v1147
    %v1149 = vpop.f32.mrf.mxu0
    %v1150 = vpop.f32.mrf.mxu0
    %v1151 = vadd.f32 %v1047, %v1150
    %v1152 = vpop.f32.mrf.mxu0
    %1153 = vdwg.mxu0
    %v1154 = vmax.f32 %v1132, 0.0
    %v1155 = vmax.f32 %v1135, 0.0
    %v1156 = vmax.f32 %v1140, 0.0
    %v1157 = vmax.f32 %v1143, 0.0
    %v1158 = vmax.f32 %v1148, 0.0
    %v1159 = vmax.f32 %v1151, 0.0
    %vm1160 = vcmp.ge.s32.totalorder %v250, 2
    %vm1161 = vcmp.ge.s32.totalorder %v251, 2
    %vm1162 = vcmp.ge.s32.totalorder %v252, 2
    %vm1163 = vcmp.ge.s32.totalorder %v253, 2
    %vm1164 = vcmp.ge.s32.totalorder %v254, 2
    %vm1165 = vcmp.ge.s32.totalorder %v255, 2
    %v1166 = vrot.slane %v1154, 6
    %v1167 = vrot.slane %v1155, 6
    %v1168 = vrot.slane %v1156, 6
    %v1169 = vrot.slane %v1157, 6
    %v1170 = vrot.slane %v1158, 6
    %v1171 = vrot.slane %v1159, 6
    %vm1172 = vcmp.lt.s32.totalorder %v164, 2
    %v1173 = vsel %vm1172, %v1170, %v1171
    %v1174 = vsel %vm1172, %v1169, %v1170
    %v1175 = vsel %vm1172, %v1168, %v1169
    %v1176 = vsel %vm1172, %v1167, %v1168
    %v1177 = vsel %vm1172, %v1166, %v1167
    %v1178 = vsel %vm1172, %v1171, %v1166
    %v1179 = vsel %vm1160, 1, 0
    %v1180 = vsel %vm1161, 1, 0
    %v1181 = vsel %vm1162, 1, 0
    %v1182 = vsel %vm1163, 1, 0
    %v1183 = vsel %vm1164, 1, 0
    %v1184 = vsel %vm1165, 1, 0
    %vm1185 = vcmp.eq.s32.totalorder %v1179, 1
    %vm1186 = vcmp.eq.s32.totalorder %v1180, 1
    %vm1187 = vcmp.eq.s32.totalorder %v1181, 1
    %vm1188 = vcmp.eq.s32.totalorder %v1182, 1
    %vm1189 = vcmp.eq.s32.totalorder %v1183, 1
    %vm1190 = vcmp.eq.s32.totalorder %v1184, 1
    %v1191 = vsel %vm1185, %v1178, 0.0
    %v1192 = vsel %vm1186, %v1177, 0.0
    %v1193 = vsel %vm1187, %v1176, 0.0
    %v1194 = vsel %vm1188, %v1175, 0.0
    %v1195 = vsel %vm1189, %v1174, 0.0
    %v1196 = vsel %vm1190, %v1173, 0.0
    %vm1197 = vcmp.lt.s32.totalorder %v250, 14
    %vm1198 = vcmp.lt.s32.totalorder %v251, 14
    %vm1199 = vcmp.lt.s32.totalorder %v252, 14
    %vm1200 = vcmp.lt.s32.totalorder %v253, 14
    %vm1201 = vcmp.lt.s32.totalorder %v254, 14
    %vm1202 = vcmp.lt.s32.totalorder %v255, 14
    %v1203 = vrot.slane %v1154, 2
    %v1204 = vrot.slane %v1155, 2
    %v1205 = vrot.slane %v1156, 2
    %v1206 = vrot.slane %v1157, 2
    %v1207 = vrot.slane %v1158, 2
    %v1208 = vrot.slane %v1159, 2
    %vm1209 = vcmp.lt.s32.totalorder %v164, 6
    %v1210 = vsel %vm1209, %v1207, %v1208
    %v1211 = vsel %vm1209, %v1206, %v1207
    %v1212 = vsel %vm1209, %v1205, %v1206
    %v1213 = vsel %vm1209, %v1204, %v1205
    %v1214 = vsel %vm1209, %v1203, %v1204
    %v1215 = vsel %vm1209, %v1208, %v1203
    %v1216 = vsel %vm1197, 1, 0
    %v1217 = vsel %vm1198, 1, 0
    %v1218 = vsel %vm1199, 1, 0
    %v1219 = vsel %vm1200, 1, 0
    %v1220 = vsel %vm1201, 1, 0
    %v1221 = vsel %vm1202, 1, 0
    %vm1222 = vcmp.eq.s32.totalorder %v1216, 1
    %vm1223 = vcmp.eq.s32.totalorder %v1217, 1
    %vm1224 = vcmp.eq.s32.totalorder %v1218, 1
    %vm1225 = vcmp.eq.s32.totalorder %v1219, 1
    %vm1226 = vcmp.eq.s32.totalorder %v1220, 1
    %vm1227 = vcmp.eq.s32.totalorder %v1221, 1
    %v1228 = vsel %vm1222, %v1214, 0.0
    %v1229 = vsel %vm1223, %v1213, 0.0
    %v1230 = vsel %vm1224, %v1212, 0.0
    %v1231 = vsel %vm1225, %v1211, 0.0
    %v1232 = vsel %vm1226, %v1210, 0.0
    %v1233 = vsel %vm1227, %v1215, 0.0
    %v1234 = vpack.c.bf16 %v1155, %v1154
    %v1235 = vpack.c.bf16 %v1157, %v1156
    %v1236 = vpack.c.bf16 %v1159, %v1158
    %s1237 = scalar_lea.vmem [#allocation5], 256
    %v1238 = vld [vmem:[%s1237] sm:$0xf]
    %v1239 = vld [vmem:[%s1237 + $0x4] sm:$0xf]
    %v1240 = vld [vmem:[%s1237 + $0x8] sm:$0xf]
    %v1241 = vld [vmem:[%s1237 + $0xc] sm:$0xf]
    %v1242 = vld [vmem:[%s1237 + $0x10] sm:$0xf]
    %v1243 = vld [vmem:[%s1237 + $0x14] sm:$0xf]
    %v1244 = vld [vmem:[%s1237 + $0x18] sm:$0xf]
    %v1245 = vld [vmem:[%s1237 + $0x1c] sm:$0xf]
    %v1246 = vld [vmem:[%s1237 + $0x20] sm:$0xf]
    %v1247 = vld [vmem:[%s1237 + $0x24] sm:$0xf]
    %v1248 = vld [vmem:[%s1237 + $0x28] sm:$0xf]
    %v1249 = vld [vmem:[%s1237 + $0x2c] sm:$0xf]
    %v1250 = vld [vmem:[%s1237 + $0x30] sm:$0xf]
    %v1251 = vld [vmem:[%s1237 + $0x34] sm:$0xf]
    %v1252 = vld [vmem:[%s1237 + $0x38] sm:$0xf]
    %v1253 = vld [vmem:[%s1237 + $0x3c] sm:$0xf]
    %v1254 = vpack.c.bf16 %v1192, %v1191
    %v1255 = vpack.c.bf16 %v1194, %v1193
    %v1256 = vpack.c.bf16 %v1196, %v1195
    %s1257 = scalar_lea.vmem [#allocation5], 192
    %v1258 = vld [vmem:[%s1257] sm:$0xf]
    %v1259 = vld [vmem:[%s1257 + $0x4] sm:$0xf]
    %v1260 = vld [vmem:[%s1257 + $0x8] sm:$0xf]
    %v1261 = vld [vmem:[%s1257 + $0xc] sm:$0xf]
    %v1262 = vld [vmem:[%s1257 + $0x10] sm:$0xf]
    %v1263 = vld [vmem:[%s1257 + $0x14] sm:$0xf]
    %v1264 = vld [vmem:[%s1257 + $0x18] sm:$0xf]
    %v1265 = vld [vmem:[%s1257 + $0x1c] sm:$0xf]
    %v1266 = vld [vmem:[%s1257 + $0x20] sm:$0xf]
    %v1267 = vld [vmem:[%s1257 + $0x24] sm:$0xf]
    %v1268 = vld [vmem:[%s1257 + $0x28] sm:$0xf]
    %v1269 = vld [vmem:[%s1257 + $0x2c] sm:$0xf]
    %v1270 = vld [vmem:[%s1257 + $0x30] sm:$0xf]
    %v1271 = vld [vmem:[%s1257 + $0x34] sm:$0xf]
    %v1272 = vld [vmem:[%s1257 + $0x38] sm:$0xf]
    %v1273 = vld [vmem:[%s1257 + $0x3c] sm:$0xf]
    %v1290 = vunpack.c.l.b16 %v1258
    %v1291 = vunpack.c.l.b16 %v1259
    %v1292 = vunpack.c.l.b16 %v1260
    %v1293 = vunpack.c.l.b16 %v1261
    %v1294 = vunpack.c.l.b16 %v1262
    %v1295 = vunpack.c.l.b16 %v1263
    %v1296 = vunpack.c.l.b16 %v1264
    %v1297 = vunpack.c.l.b16 %v1265
    %v1298 = vunpack.c.l.b16 %v1266
    %v1299 = vunpack.c.l.b16 %v1267
    %v1300 = vunpack.c.l.b16 %v1268
    %v1301 = vunpack.c.l.b16 %v1269
    %v1302 = vunpack.c.l.b16 %v1270
    %v1303 = vunpack.c.l.b16 %v1271
    %v1304 = vunpack.c.l.b16 %v1272
    %v1305 = vunpack.c.l.b16 %v1273
    %v1306 = vpack.c.b16 %v1291, %v1290
    %v1307 = vpack.c.b16 %v1293, %v1292
    %v1308 = vpack.c.b16 %v1295, %v1294
    %v1309 = vpack.c.b16 %v1297, %v1296
    %v1310 = vpack.c.b16 %v1299, %v1298
    %v1311 = vpack.c.b16 %v1301, %v1300
    %v1312 = vpack.c.b16 %v1303, %v1302
    %v1313 = vpack.c.b16 %v1305, %v1304
    %1322 = vmatprep.subr.bf16.mxu0 0
    %1323 = vmatpush1.bf16.msra.mxu0 %v1313
    %1324 = vmatprep.subr.bf16.mxu0 0
    %1325 = vmatpush1.bf16.msra.mxu0 %v1312
    %1326 = vmatprep.subr.bf16.mxu0 0
    %1327 = vmatpush1.bf16.msra.mxu0 %v1311
    %1328 = vmatprep.subr.bf16.mxu0 0
    %1329 = vmatpush1.bf16.msra.mxu0 %v1310
    %1330 = vmatprep.subr.bf16.mxu0 0
    %1331 = vmatpush1.bf16.msra.mxu0 %v1309
    %1332 = vmatprep.subr.bf16.mxu0 0
    %1333 = vmatpush1.bf16.msra.mxu0 %v1308
    %1334 = vmatprep.subr.bf16.mxu0 0
    %1335 = vmatpush1.bf16.msra.mxu0 %v1307
    %1336 = vmatprep.subr.bf16.mxu0 0
    %1337 = vmatpush1.bf16.msra.mxu0 %v1306
    %1338 = vmatprep.subr.bf16.mxu0 0
    %1339 = vmatpush2.bf16.msra.mxu0 0
    %1340 = vmatprep.subr.bf16.mxu0 0
    %1341 = vmatpush2.bf16.msra.mxu0 0
    %1342 = vmatprep.subr.bf16.mxu0 0
    %1343 = vmatpush2.bf16.msra.mxu0 0
    %1344 = vmatprep.subr.bf16.mxu0 0
    %1345 = vmatpush2.bf16.msra.mxu0 0
    %1346 = vmatprep.subr.bf16.mxu0 0
    %1347 = vmatpush2.bf16.msra.mxu0 0
    %1348 = vmatprep.subr.bf16.mxu0 0
    %1349 = vmatpush2.bf16.msra.mxu0 0
    %1350 = vmatprep.subr.bf16.mxu0 0
    %1351 = vmatpush2.bf16.msra.mxu0 0
    %1352 = vmatprep.subr.bf16.mxu0 0
    %1353 = vmatpush2.bf16.msra.mxu0 0
    %1354 = vmatprep.mubr.bf16.mxu0 0
    %1355 = vmatmul.mubr.bf16.gmra.mxu0 %v1254
    %v1356 = vpop.f32.mrf.mxu0
    %v1357 = vadd.f32 0.0, %v1356
    %v1358 = vpop.f32.mrf.mxu0
    %v1359 = vpop.f32.mrf.mxu0
    %v1360 = vadd.f32 0.0, %v1359
    %v1361 = vpop.f32.mrf.mxu0
    %1362 = vmatprep.mubr.bf16.mxu0 0
    %1363 = vmatmul.mubr.bf16.gmra.mxu0 %v1255
    %v1364 = vpop.f32.mrf.mxu0
    %v1365 = vadd.f32 0.0, %v1364
    %v1366 = vpop.f32.mrf.mxu0
    %v1367 = vpop.f32.mrf.mxu0
    %v1368 = vadd.f32 0.0, %v1367
    %v1369 = vpop.f32.mrf.mxu0
    %1370 = vmatprep.mubr.bf16.mxu0 0
    %1371 = vmatmul.mubr.bf16.gmra.mxu0 %v1256
    %v1372 = vpop.f32.mrf.mxu0
    %v1373 = vadd.f32 0.0, %v1372
    %v1374 = vpop.f32.mrf.mxu0
    %v1375 = vpop.f32.mrf.mxu0
    %v1376 = vadd.f32 0.0, %v1375
    %v1377 = vpop.f32.mrf.mxu0
    %1378 = vdwg.mxu0
    %v1395 = vunpack.c.l.b16 %v1238
    %v1396 = vunpack.c.l.b16 %v1239
    %v1397 = vunpack.c.l.b16 %v1240
    %v1398 = vunpack.c.l.b16 %v1241
    %v1399 = vunpack.c.l.b16 %v1242
    %v1400 = vunpack.c.l.b16 %v1243
    %v1401 = vunpack.c.l.b16 %v1244
    %v1402 = vunpack.c.l.b16 %v1245
    %v1403 = vunpack.c.l.b16 %v1246
    %v1404 = vunpack.c.l.b16 %v1247
    %v1405 = vunpack.c.l.b16 %v1248
    %v1406 = vunpack.c.l.b16 %v1249
    %v1407 = vunpack.c.l.b16 %v1250
    %v1408 = vunpack.c.l.b16 %v1251
    %v1409 = vunpack.c.l.b16 %v1252
    %v1410 = vunpack.c.l.b16 %v1253
    %v1411 = vpack.c.b16 %v1396, %v1395
    %v1412 = vpack.c.b16 %v1398, %v1397
    %v1413 = vpack.c.b16 %v1400, %v1399
    %v1414 = vpack.c.b16 %v1402, %v1401
    %v1415 = vpack.c.b16 %v1404, %v1403
    %v1416 = vpack.c.b16 %v1406, %v1405
    %v1417 = vpack.c.b16 %v1408, %v1407
    %v1418 = vpack.c.b16 %v1410, %v1409
    %1427 = vmatprep.subr.bf16.mxu0 0
    %1428 = vmatpush1.bf16.msra.mxu0 %v1418
    %1429 = vmatprep.subr.bf16.mxu0 0
    %1430 = vmatpush1.bf16.msra.mxu0 %v1417
    %1431 = vmatprep.subr.bf16.mxu0 0
    %1432 = vmatpush1.bf16.msra.mxu0 %v1416
    %1433 = vmatprep.subr.bf16.mxu0 0
    %1434 = vmatpush1.bf16.msra.mxu0 %v1415
    %1435 = vmatprep.subr.bf16.mxu0 0
    %1436 = vmatpush1.bf16.msra.mxu0 %v1414
    %1437 = vmatprep.subr.bf16.mxu0 0
    %1438 = vmatpush1.bf16.msra.mxu0 %v1413
    %1439 = vmatprep.subr.bf16.mxu0 0
    %1440 = vmatpush1.bf16.msra.mxu0 %v1412
    %1441 = vmatprep.subr.bf16.mxu0 0
    %1442 = vmatpush1.bf16.msra.mxu0 %v1411
    %1443 = vmatprep.subr.bf16.mxu0 0
    %1444 = vmatpush2.bf16.msra.mxu0 0
    %1445 = vmatprep.subr.bf16.mxu0 0
    %1446 = vmatpush2.bf16.msra.mxu0 0
    %1447 = vmatprep.subr.bf16.mxu0 0
    %1448 = vmatpush2.bf16.msra.mxu0 0
    %1449 = vmatprep.subr.bf16.mxu0 0
    %1450 = vmatpush2.bf16.msra.mxu0 0
    %1451 = vmatprep.subr.bf16.mxu0 0
    %1452 = vmatpush2.bf16.msra.mxu0 0
    %1453 = vmatprep.subr.bf16.mxu0 0
    %1454 = vmatpush2.bf16.msra.mxu0 0
    %1455 = vmatprep.subr.bf16.mxu0 0
    %1456 = vmatpush2.bf16.msra.mxu0 0
    %1457 = vmatprep.subr.bf16.mxu0 0
    %1458 = vmatpush2.bf16.msra.mxu0 0
    %1459 = vmatprep.mubr.bf16.mxu0 0
    %1460 = vmatmul.mubr.bf16.gmra.mxu0 %v1234
    %v1461 = vpop.f32.mrf.mxu0
    %v1462 = vadd.f32 %v1357, %v1461
    %v1463 = vpop.f32.mrf.mxu0
    %v1464 = vpop.f32.mrf.mxu0
    %v1465 = vadd.f32 %v1360, %v1464
    %v1466 = vpop.f32.mrf.mxu0
    %1467 = vmatprep.mubr.bf16.mxu0 0
    %1468 = vmatmul.mubr.bf16.gmra.mxu0 %v1235
    %v1469 = vpop.f32.mrf.mxu0
    %v1470 = vadd.f32 %v1365, %v1469
    %v1471 = vpop.f32.mrf.mxu0
    %v1472 = vpop.f32.mrf.mxu0
    %v1473 = vadd.f32 %v1368, %v1472
    %v1474 = vpop.f32.mrf.mxu0
    %1475 = vmatprep.mubr.bf16.mxu0 0
    %1476 = vmatmul.mubr.bf16.gmra.mxu0 %v1236
    %v1477 = vpop.f32.mrf.mxu0
    %v1478 = vadd.f32 %v1373, %v1477
    %v1479 = vpop.f32.mrf.mxu0
    %v1480 = vpop.f32.mrf.mxu0
    %v1481 = vadd.f32 %v1376, %v1480
    %v1482 = vpop.f32.mrf.mxu0
    %1483 = vdwg.mxu0
    %v1484 = vpack.c.bf16 %v1229, %v1228
    %v1485 = vpack.c.bf16 %v1231, %v1230
    %v1486 = vpack.c.bf16 %v1233, %v1232
    %s1487 = scalar_lea.vmem [#allocation5], 320
    %v1488 = vld [vmem:[%s1487] sm:$0xf]
    %v1489 = vld [vmem:[%s1487 + $0x4] sm:$0xf]
    %v1490 = vld [vmem:[%s1487 + $0x8] sm:$0xf]
    %v1491 = vld [vmem:[%s1487 + $0xc] sm:$0xf]
    %v1492 = vld [vmem:[%s1487 + $0x10] sm:$0xf]
    %v1493 = vld [vmem:[%s1487 + $0x14] sm:$0xf]
    %v1494 = vld [vmem:[%s1487 + $0x18] sm:$0xf]
    %v1495 = vld [vmem:[%s1487 + $0x1c] sm:$0xf]
    %v1496 = vld [vmem:[%s1487 + $0x20] sm:$0xf]
    %v1497 = vld [vmem:[%s1487 + $0x24] sm:$0xf]
    %v1498 = vld [vmem:[%s1487 + $0x28] sm:$0xf]
    %v1499 = vld [vmem:[%s1487 + $0x2c] sm:$0xf]
    %v1500 = vld [vmem:[%s1487 + $0x30] sm:$0xf]
    %v1501 = vld [vmem:[%s1487 + $0x34] sm:$0xf]
    %v1502 = vld [vmem:[%s1487 + $0x38] sm:$0xf]
    %v1503 = vld [vmem:[%s1487 + $0x3c] sm:$0xf]
    %v1520 = vunpack.c.l.b16 %v1488
    %v1521 = vunpack.c.l.b16 %v1489
    %v1522 = vunpack.c.l.b16 %v1490
    %v1523 = vunpack.c.l.b16 %v1491
    %v1524 = vunpack.c.l.b16 %v1492
    %v1525 = vunpack.c.l.b16 %v1493
    %v1526 = vunpack.c.l.b16 %v1494
    %v1527 = vunpack.c.l.b16 %v1495
    %v1528 = vunpack.c.l.b16 %v1496
    %v1529 = vunpack.c.l.b16 %v1497
    %v1530 = vunpack.c.l.b16 %v1498
    %v1531 = vunpack.c.l.b16 %v1499
    %v1532 = vunpack.c.l.b16 %v1500
    %v1533 = vunpack.c.l.b16 %v1501
    %v1534 = vunpack.c.l.b16 %v1502
    %v1535 = vunpack.c.l.b16 %v1503
    %v1536 = vpack.c.b16 %v1521, %v1520
    %v1537 = vpack.c.b16 %v1523, %v1522
    %v1538 = vpack.c.b16 %v1525, %v1524
    %v1539 = vpack.c.b16 %v1527, %v1526
    %v1540 = vpack.c.b16 %v1529, %v1528
    %v1541 = vpack.c.b16 %v1531, %v1530
    %v1542 = vpack.c.b16 %v1533, %v1532
    %v1543 = vpack.c.b16 %v1535, %v1534
    %1552 = vmatprep.subr.bf16.mxu0 0
    %1553 = vmatpush1.bf16.msra.mxu0 %v1543
    %1554 = vmatprep.subr.bf16.mxu0 0
    %1555 = vmatpush1.bf16.msra.mxu0 %v1542
    %1556 = vmatprep.subr.bf16.mxu0 0
    %1557 = vmatpush1.bf16.msra.mxu0 %v1541
    %1558 = vmatprep.subr.bf16.mxu0 0
    %1559 = vmatpush1.bf16.msra.mxu0 %v1540
    %1560 = vmatprep.subr.bf16.mxu0 0
    %1561 = vmatpush1.bf16.msra.mxu0 %v1539
    %1562 = vmatprep.subr.bf16.mxu0 0
    %1563 = vmatpush1.bf16.msra.mxu0 %v1538
    %1564 = vmatprep.subr.bf16.mxu0 0
    %1565 = vmatpush1.bf16.msra.mxu0 %v1537
    %1566 = vmatprep.subr.bf16.mxu0 0
    %1567 = vmatpush1.bf16.msra.mxu0 %v1536
    %1568 = vmatprep.subr.bf16.mxu0 0
    %1569 = vmatpush2.bf16.msra.mxu0 0
    %1570 = vmatprep.subr.bf16.mxu0 0
    %1571 = vmatpush2.bf16.msra.mxu0 0
    %1572 = vmatprep.subr.bf16.mxu0 0
    %1573 = vmatpush2.bf16.msra.mxu0 0
    %1574 = vmatprep.subr.bf16.mxu0 0
    %1575 = vmatpush2.bf16.msra.mxu0 0
    %1576 = vmatprep.subr.bf16.mxu0 0
    %1577 = vmatpush2.bf16.msra.mxu0 0
    %1578 = vmatprep.subr.bf16.mxu0 0
    %1579 = vmatpush2.bf16.msra.mxu0 0
    %1580 = vmatprep.subr.bf16.mxu0 0
    %1581 = vmatpush2.bf16.msra.mxu0 0
    %1582 = vmatprep.subr.bf16.mxu0 0
    %1583 = vmatpush2.bf16.msra.mxu0 0
    %1584 = vmatprep.mubr.bf16.mxu0 0
    %1585 = vmatmul.mubr.bf16.gmra.mxu0 %v1484
    %v1586 = vpop.f32.mrf.mxu0
    %v1587 = vadd.f32 0.0, %v1586
    %v1588 = vpop.f32.mrf.mxu0
    %v1589 = vpop.f32.mrf.mxu0
    %v1590 = vadd.f32 0.0, %v1589
    %v1591 = vpop.f32.mrf.mxu0
    %1592 = vmatprep.mubr.bf16.mxu0 0
    %1593 = vmatmul.mubr.bf16.gmra.mxu0 %v1485
    %v1594 = vpop.f32.mrf.mxu0
    %v1595 = vadd.f32 0.0, %v1594
    %v1596 = vpop.f32.mrf.mxu0
    %v1597 = vpop.f32.mrf.mxu0
    %v1598 = vadd.f32 0.0, %v1597
    %v1599 = vpop.f32.mrf.mxu0
    %1600 = vmatprep.mubr.bf16.mxu0 0
    %1601 = vmatmul.mubr.bf16.gmra.mxu0 %v1486
    %v1602 = vpop.f32.mrf.mxu0
    %v1603 = vadd.f32 0.0, %v1602
    %v1604 = vpop.f32.mrf.mxu0
    %v1605 = vpop.f32.mrf.mxu0
    %v1606 = vadd.f32 0.0, %v1605
    %v1607 = vpop.f32.mrf.mxu0
    %1608 = vdwg.mxu0
    %v1609 = vadd.f32 %v1462, %v1587
    %v1610 = vadd.f32 %v1465, %v1590
    %v1611 = vadd.f32 %v1470, %v1595
    %v1612 = vadd.f32 %v1473, %v1598
    %v1613 = vadd.f32 %v1478, %v1603
    %v1614 = vadd.f32 %v1481, %v1606
    %s1615 = scalar_lea.vmem %s6, 1
    %v1616 = vld [vmem:[%s1615] sm:$0x1]
    %v1618 = vlaneseq
    %v1619 = vshrl.u32 %v1618, 7
    %v1620 = vsub.s32 0, %v1619
    %v1621 = vrot.slane %v1616, %v1620
    %v1623 = vadd.f32 %v1609, %v1621
    %v1624 = vadd.f32 %v1610, %v1621
    %v1625 = vadd.f32 %v1611, %v1621
    %v1626 = vadd.f32 %v1612, %v1621
    %v1627 = vadd.f32 %v1613, %v1621
    %v1628 = vadd.f32 %v1614, %v1621
    %v1629 = vmax.f32 %v1623, 0.0
    %v1630 = vmax.f32 %v1624, 0.0
    %v1631 = vmax.f32 %v1625, 0.0
    %v1632 = vmax.f32 %v1626, 0.0
    %v1633 = vmax.f32 %v1627, 0.0
    %v1634 = vmax.f32 %v1628, 0.0
    %v1635 = vpack.c.bf16 %v1630, %v1629
    %v1636 = vpack.c.bf16 %v1632, %v1631
    %v1637 = vpack.c.bf16 %v1634, %v1633
    %s1638 = scalar_lea.vmem [#allocation7], 64
    %v1639 = vld [vmem:[%s1638] sm:$0xf]
    %v1640 = vld [vmem:[%s1638 + $0x4] sm:$0xf]
    %v1641 = vld [vmem:[%s1638 + $0x8] sm:$0xf]
    %v1642 = vld [vmem:[%s1638 + $0xc] sm:$0xf]
    %v1643 = vld [vmem:[%s1638 + $0x10] sm:$0xf]
    %v1644 = vld [vmem:[%s1638 + $0x14] sm:$0xf]
    %v1645 = vld [vmem:[%s1638 + $0x18] sm:$0xf]
    %v1646 = vld [vmem:[%s1638 + $0x1c] sm:$0xf]
    %v1647 = vld [vmem:[%s1638 + $0x20] sm:$0xf]
    %v1648 = vld [vmem:[%s1638 + $0x24] sm:$0xf]
    %v1649 = vld [vmem:[%s1638 + $0x28] sm:$0xf]
    %v1650 = vld [vmem:[%s1638 + $0x2c] sm:$0xf]
    %v1651 = vld [vmem:[%s1638 + $0x30] sm:$0xf]
    %v1652 = vld [vmem:[%s1638 + $0x34] sm:$0xf]
    %v1653 = vld [vmem:[%s1638 + $0x38] sm:$0xf]
    %v1654 = vld [vmem:[%s1638 + $0x3c] sm:$0xf]
    %v1671 = vunpack.c.l.b16 %v1639
    %v1672 = vunpack.c.l.b16 %v1640
    %v1673 = vunpack.c.l.b16 %v1641
    %v1674 = vunpack.c.l.b16 %v1642
    %v1675 = vunpack.c.l.b16 %v1643
    %v1676 = vunpack.c.l.b16 %v1644
    %v1677 = vunpack.c.l.b16 %v1645
    %v1678 = vunpack.c.l.b16 %v1646
    %v1679 = vunpack.c.l.b16 %v1647
    %v1680 = vunpack.c.l.b16 %v1648
    %v1681 = vunpack.c.l.b16 %v1649
    %v1682 = vunpack.c.l.b16 %v1650
    %v1683 = vunpack.c.l.b16 %v1651
    %v1684 = vunpack.c.l.b16 %v1652
    %v1685 = vunpack.c.l.b16 %v1653
    %v1686 = vunpack.c.l.b16 %v1654
    %v1687 = vpack.c.b16 %v1672, %v1671
    %v1688 = vpack.c.b16 %v1674, %v1673
    %v1689 = vpack.c.b16 %v1676, %v1675
    %v1690 = vpack.c.b16 %v1678, %v1677
    %v1691 = vpack.c.b16 %v1680, %v1679
    %v1692 = vpack.c.b16 %v1682, %v1681
    %v1693 = vpack.c.b16 %v1684, %v1683
    %v1694 = vpack.c.b16 %v1686, %v1685
    %1703 = vmatprep.subr.bf16.mxu0 0
    %1704 = vmatpush1.bf16.msra.mxu0 %v1694
    %1705 = vmatprep.subr.bf16.mxu0 0
    %1706 = vmatpush1.bf16.msra.mxu0 %v1693
    %1707 = vmatprep.subr.bf16.mxu0 0
    %1708 = vmatpush1.bf16.msra.mxu0 %v1692
    %1709 = vmatprep.subr.bf16.mxu0 0
    %1710 = vmatpush1.bf16.msra.mxu0 %v1691
    %1711 = vmatprep.subr.bf16.mxu0 0
    %1712 = vmatpush1.bf16.msra.mxu0 %v1690
    %1713 = vmatprep.subr.bf16.mxu0 0
    %1714 = vmatpush1.bf16.msra.mxu0 %v1689
    %1715 = vmatprep.subr.bf16.mxu0 0
    %1716 = vmatpush1.bf16.msra.mxu0 %v1688
    %1717 = vmatprep.subr.bf16.mxu0 0
    %1718 = vmatpush1.bf16.msra.mxu0 %v1687
    %1719 = vmatprep.subr.bf16.mxu0 0
    %1720 = vmatpush2.bf16.msra.mxu0 0
    %1721 = vmatprep.subr.bf16.mxu0 0
    %1722 = vmatpush2.bf16.msra.mxu0 0
    %1723 = vmatprep.subr.bf16.mxu0 0
    %1724 = vmatpush2.bf16.msra.mxu0 0
    %1725 = vmatprep.subr.bf16.mxu0 0
    %1726 = vmatpush2.bf16.msra.mxu0 0
    %1727 = vmatprep.subr.bf16.mxu0 0
    %1728 = vmatpush2.bf16.msra.mxu0 0
    %1729 = vmatprep.subr.bf16.mxu0 0
    %1730 = vmatpush2.bf16.msra.mxu0 0
    %1731 = vmatprep.subr.bf16.mxu0 0
    %1732 = vmatpush2.bf16.msra.mxu0 0
    %1733 = vmatprep.subr.bf16.mxu0 0
    %1734 = vmatpush2.bf16.msra.mxu0 0
    %1735 = vmatprep.mubr.bf16.mxu0 0
    %1736 = vmatmul.mubr.bf16.gmra.mxu0 %v1635
    %v1737 = vpop.f32.mrf.mxu0
    %v1738 = vadd.f32 0.0, %v1737
    %v1739 = vpop.f32.mrf.mxu0
    %v1740 = vpop.f32.mrf.mxu0
    %v1741 = vadd.f32 0.0, %v1740
    %v1742 = vpop.f32.mrf.mxu0
    %1743 = vmatprep.mubr.bf16.mxu0 0
    %1744 = vmatmul.mubr.bf16.gmra.mxu0 %v1636
    %v1745 = vpop.f32.mrf.mxu0
    %v1746 = vadd.f32 0.0, %v1745
    %v1747 = vpop.f32.mrf.mxu0
    %v1748 = vpop.f32.mrf.mxu0
    %v1749 = vadd.f32 0.0, %v1748
    %v1750 = vpop.f32.mrf.mxu0
    %1751 = vmatprep.mubr.bf16.mxu0 0
    %1752 = vmatmul.mubr.bf16.gmra.mxu0 %v1637
    %v1753 = vpop.f32.mrf.mxu0
    %v1754 = vadd.f32 0.0, %v1753
    %v1755 = vpop.f32.mrf.mxu0
    %v1756 = vpop.f32.mrf.mxu0
    %v1757 = vadd.f32 0.0, %v1756
    %v1758 = vpop.f32.mrf.mxu0
    %1759 = vdwg.mxu0
    %v1760 = vadd.f32 %v1009, %v1738
    %v1761 = vadd.f32 %v1010, %v1741
    %v1762 = vadd.f32 %v1011, %v1746
    %v1763 = vadd.f32 %v1012, %v1749
    %v1764 = vadd.f32 %v1013, %v1754
    %v1765 = vadd.f32 %v1014, %v1757
    %s1766 = scalar_lea.vmem %s8, 1
    %v1767 = vld [vmem:[%s1766] sm:$0x1]
    %v1769 = vlaneseq
    %v1770 = vshrl.u32 %v1769, 7
    %v1771 = vsub.s32 0, %v1770
    %v1772 = vrot.slane %v1767, %v1771
    %v1774 = vadd.f32 %v1760, %v1772
    %v1775 = vadd.f32 %v1761, %v1772
    %v1776 = vadd.f32 %v1762, %v1772
    %v1777 = vadd.f32 %v1763, %v1772
    %v1778 = vadd.f32 %v1764, %v1772
    %v1779 = vadd.f32 %v1765, %v1772
    %v1780 = vmax.f32 %v1774, 0.0
    %v1781 = vmax.f32 %v1775, 0.0
    %v1782 = vmax.f32 %v1776, 0.0
    %v1783 = vmax.f32 %v1777, 0.0
    %v1784 = vmax.f32 %v1778, 0.0
    %v1785 = vmax.f32 %v1779, 0.0
    %v1786 = vpack.c.bf16 %v1781, %v1780
    %v1787 = vpack.c.bf16 %v1783, %v1782
    %v1788 = vpack.c.bf16 %v1785, %v1784
    %s1789 = scalar_lea.vmem [#allocation2], 128
    %v1790 = vld [vmem:[%s1789] sm:$0xf]
    %v1791 = vld [vmem:[%s1789 + $0x4] sm:$0xf]
    %v1792 = vld [vmem:[%s1789 + $0x8] sm:$0xf]
    %v1793 = vld [vmem:[%s1789 + $0xc] sm:$0xf]
    %v1794 = vld [vmem:[%s1789 + $0x10] sm:$0xf]
    %v1795 = vld [vmem:[%s1789 + $0x14] sm:$0xf]
    %v1796 = vld [vmem:[%s1789 + $0x18] sm:$0xf]
    %v1797 = vld [vmem:[%s1789 + $0x1c] sm:$0xf]
    %v1798 = vld [vmem:[%s1789 + $0x20] sm:$0xf]
    %v1799 = vld [vmem:[%s1789 + $0x24] sm:$0xf]
    %v1800 = vld [vmem:[%s1789 + $0x28] sm:$0xf]
    %v1801 = vld [vmem:[%s1789 + $0x2c] sm:$0xf]
    %v1802 = vld [vmem:[%s1789 + $0x30] sm:$0xf]
    %v1803 = vld [vmem:[%s1789 + $0x34] sm:$0xf]
    %v1804 = vld [vmem:[%s1789 + $0x38] sm:$0xf]
    %v1805 = vld [vmem:[%s1789 + $0x3c] sm:$0xf]
    %s1806 = scalar_lea.vmem %s4, 2
    %v1807 = vld [vmem:[%s1806] sm:$0x1]
    %v1809 = vlaneseq
    %v1810 = vshrl.u32 %v1809, 7
    %v1811 = vsub.s32 0, %v1810
    %v1812 = vrot.slane %v1807, %v1811
    %v1830 = vunpack.c.l.b16 %v1790
    %v1831 = vunpack.c.l.b16 %v1791
    %v1832 = vunpack.c.l.b16 %v1792
    %v1833 = vunpack.c.l.b16 %v1793
    %v1834 = vunpack.c.l.b16 %v1794
    %v1835 = vunpack.c.l.b16 %v1795
    %v1836 = vunpack.c.l.b16 %v1796
    %v1837 = vunpack.c.l.b16 %v1797
    %v1838 = vunpack.c.l.b16 %v1798
    %v1839 = vunpack.c.l.b16 %v1799
    %v1840 = vunpack.c.l.b16 %v1800
    %v1841 = vunpack.c.l.b16 %v1801
    %v1842 = vunpack.c.l.b16 %v1802
    %v1843 = vunpack.c.l.b16 %v1803
    %v1844 = vunpack.c.l.b16 %v1804
    %v1845 = vunpack.c.l.b16 %v1805
    %v1846 = vpack.c.b16 %v1831, %v1830
    %v1847 = vpack.c.b16 %v1833, %v1832
    %v1848 = vpack.c.b16 %v1835, %v1834
    %v1849 = vpack.c.b16 %v1837, %v1836
    %v1850 = vpack.c.b16 %v1839, %v1838
    %v1851 = vpack.c.b16 %v1841, %v1840
    %v1852 = vpack.c.b16 %v1843, %v1842
    %v1853 = vpack.c.b16 %v1845, %v1844
    %1862 = vmatprep.subr.bf16.mxu0 0
    %1863 = vmatpush1.bf16.msra.mxu0 %v1853
    %1864 = vmatprep.subr.bf16.mxu0 0
    %1865 = vmatpush1.bf16.msra.mxu0 %v1852
    %1866 = vmatprep.subr.bf16.mxu0 0
    %1867 = vmatpush1.bf16.msra.mxu0 %v1851
    %1868 = vmatprep.subr.bf16.mxu0 0
    %1869 = vmatpush1.bf16.msra.mxu0 %v1850
    %1870 = vmatprep.subr.bf16.mxu0 0
    %1871 = vmatpush1.bf16.msra.mxu0 %v1849
    %1872 = vmatprep.subr.bf16.mxu0 0
    %1873 = vmatpush1.bf16.msra.mxu0 %v1848
    %1874 = vmatprep.subr.bf16.mxu0 0
    %1875 = vmatpush1.bf16.msra.mxu0 %v1847
    %1876 = vmatprep.subr.bf16.mxu0 0
    %1877 = vmatpush1.bf16.msra.mxu0 %v1846
    %1878 = vmatprep.subr.bf16.mxu0 0
    %1879 = vmatpush2.bf16.msra.mxu0 0
    %1880 = vmatprep.subr.bf16.mxu0 0
    %1881 = vmatpush2.bf16.msra.mxu0 0
    %1882 = vmatprep.subr.bf16.mxu0 0
    %1883 = vmatpush2.bf16.msra.mxu0 0
    %1884 = vmatprep.subr.bf16.mxu0 0
    %1885 = vmatpush2.bf16.msra.mxu0 0
    %1886 = vmatprep.subr.bf16.mxu0 0
    %1887 = vmatpush2.bf16.msra.mxu0 0
    %1888 = vmatprep.subr.bf16.mxu0 0
    %1889 = vmatpush2.bf16.msra.mxu0 0
    %1890 = vmatprep.subr.bf16.mxu0 0
    %1891 = vmatpush2.bf16.msra.mxu0 0
    %1892 = vmatprep.subr.bf16.mxu0 0
    %1893 = vmatpush2.bf16.msra.mxu0 0
    %1894 = vmatprep.mubr.bf16.mxu0 0
    %1895 = vmatmul.mubr.bf16.gmra.mxu0 %v1786
    %v1896 = vpop.f32.mrf.mxu0
    %v1897 = vadd.f32 %v1812, %v1896
    %v1898 = vpop.f32.mrf.mxu0
    %v1899 = vpop.f32.mrf.mxu0
    %v1900 = vadd.f32 %v1812, %v1899
    %v1901 = vpop.f32.mrf.mxu0
    %1902 = vmatprep.mubr.bf16.mxu0 0
    %1903 = vmatmul.mubr.bf16.gmra.mxu0 %v1787
    %v1904 = vpop.f32.mrf.mxu0
    %v1905 = vadd.f32 %v1812, %v1904
    %v1906 = vpop.f32.mrf.mxu0
    %v1907 = vpop.f32.mrf.mxu0
    %v1908 = vadd.f32 %v1812, %v1907
    %v1909 = vpop.f32.mrf.mxu0
    %1910 = vmatprep.mubr.bf16.mxu0 0
    %1911 = vmatmul.mubr.bf16.gmra.mxu0 %v1788
    %v1912 = vpop.f32.mrf.mxu0
    %v1913 = vadd.f32 %v1812, %v1912
    %v1914 = vpop.f32.mrf.mxu0
    %v1915 = vpop.f32.mrf.mxu0
    %v1916 = vadd.f32 %v1812, %v1915
    %v1917 = vpop.f32.mrf.mxu0
    %1918 = vdwg.mxu0
    %v1919 = vmax.f32 %v1897, 0.0
    %v1920 = vmax.f32 %v1900, 0.0
    %v1921 = vmax.f32 %v1905, 0.0
    %v1922 = vmax.f32 %v1908, 0.0
    %v1923 = vmax.f32 %v1913, 0.0
    %v1924 = vmax.f32 %v1916, 0.0
    %vm1925 = vcmp.ge.s32.totalorder %v250, 4
    %vm1926 = vcmp.ge.s32.totalorder %v251, 4
    %vm1927 = vcmp.ge.s32.totalorder %v252, 4
    %vm1928 = vcmp.ge.s32.totalorder %v253, 4
    %vm1929 = vcmp.ge.s32.totalorder %v254, 4
    %vm1930 = vcmp.ge.s32.totalorder %v255, 4
    %v1931 = vrot.slane %v1919, 4
    %v1932 = vrot.slane %v1920, 4
    %v1933 = vrot.slane %v1921, 4
    %v1934 = vrot.slane %v1922, 4
    %v1935 = vrot.slane %v1923, 4
    %v1936 = vrot.slane %v1924, 4
    %vm1937 = vcmp.lt.s32.totalorder %v164, 4
    %v1938 = vsel %vm1937, %v1935, %v1936
    %v1939 = vsel %vm1937, %v1934, %v1935
    %v1940 = vsel %vm1937, %v1933, %v1934
    %v1941 = vsel %vm1937, %v1932, %v1933
    %v1942 = vsel %vm1937, %v1931, %v1932
    %v1943 = vsel %vm1937, %v1936, %v1931
    %v1944 = vsel %vm1925, 1, 0
    %v1945 = vsel %vm1926, 1, 0
    %v1946 = vsel %vm1927, 1, 0
    %v1947 = vsel %vm1928, 1, 0
    %v1948 = vsel %vm1929, 1, 0
    %v1949 = vsel %vm1930, 1, 0
    %vm1950 = vcmp.eq.s32.totalorder %v1944, 1
    %vm1951 = vcmp.eq.s32.totalorder %v1945, 1
    %vm1952 = vcmp.eq.s32.totalorder %v1946, 1
    %vm1953 = vcmp.eq.s32.totalorder %v1947, 1
    %vm1954 = vcmp.eq.s32.totalorder %v1948, 1
    %vm1955 = vcmp.eq.s32.totalorder %v1949, 1
    %v1956 = vsel %vm1950, %v1943, 0.0
    %v1957 = vsel %vm1951, %v1942, 0.0
    %v1958 = vsel %vm1952, %v1941, 0.0
    %v1959 = vsel %vm1953, %v1940, 0.0
    %v1960 = vsel %vm1954, %v1939, 0.0
    %v1961 = vsel %vm1955, %v1938, 0.0
    %vm1962 = vcmp.lt.s32.totalorder %v250, 12
    %vm1963 = vcmp.lt.s32.totalorder %v251, 12
    %vm1964 = vcmp.lt.s32.totalorder %v252, 12
    %vm1965 = vcmp.lt.s32.totalorder %v253, 12
    %vm1966 = vcmp.lt.s32.totalorder %v254, 12
    %vm1967 = vcmp.lt.s32.totalorder %v255, 12
    %v1968 = vsel %vm1962, 1, 0
    %v1969 = vsel %vm1963, 1, 0
    %v1970 = vsel %vm1964, 1, 0
    %v1971 = vsel %vm1965, 1, 0
    %v1972 = vsel %vm1966, 1, 0
    %v1973 = vsel %vm1967, 1, 0
    %vm1974 = vcmp.eq.s32.totalorder %v1968, 1
    %vm1975 = vcmp.eq.s32.totalorder %v1969, 1
    %vm1976 = vcmp.eq.s32.totalorder %v1970, 1
    %vm1977 = vcmp.eq.s32.totalorder %v1971, 1
    %vm1978 = vcmp.eq.s32.totalorder %v1972, 1
    %vm1979 = vcmp.eq.s32.totalorder %v1973, 1
    %v1980 = vsel %vm1974, %v1942, 0.0
    %v1981 = vsel %vm1975, %v1941, 0.0
    %v1982 = vsel %vm1976, %v1940, 0.0
    %v1983 = vsel %vm1977, %v1939, 0.0
    %v1984 = vsel %vm1978, %v1938, 0.0
    %v1985 = vsel %vm1979, %v1943, 0.0
    %v1986 = vpack.c.bf16 %v1920, %v1919
    %v1987 = vpack.c.bf16 %v1922, %v1921
    %v1988 = vpack.c.bf16 %v1924, %v1923
    %s1989 = scalar_lea.vmem [#allocation5], 448
    %v1990 = vld [vmem:[%s1989] sm:$0xf]
    %v1991 = vld [vmem:[%s1989 + $0x4] sm:$0xf]
    %v1992 = vld [vmem:[%s1989 + $0x8] sm:$0xf]
    %v1993 = vld [vmem:[%s1989 + $0xc] sm:$0xf]
    %v1994 = vld [vmem:[%s1989 + $0x10] sm:$0xf]
    %v1995 = vld [vmem:[%s1989 + $0x14] sm:$0xf]
    %v1996 = vld [vmem:[%s1989 + $0x18] sm:$0xf]
    %v1997 = vld [vmem:[%s1989 + $0x1c] sm:$0xf]
    %v1998 = vld [vmem:[%s1989 + $0x20] sm:$0xf]
    %v1999 = vld [vmem:[%s1989 + $0x24] sm:$0xf]
    %v2000 = vld [vmem:[%s1989 + $0x28] sm:$0xf]
    %v2001 = vld [vmem:[%s1989 + $0x2c] sm:$0xf]
    %v2002 = vld [vmem:[%s1989 + $0x30] sm:$0xf]
    %v2003 = vld [vmem:[%s1989 + $0x34] sm:$0xf]
    %v2004 = vld [vmem:[%s1989 + $0x38] sm:$0xf]
    %v2005 = vld [vmem:[%s1989 + $0x3c] sm:$0xf]
    %v2006 = vpack.c.bf16 %v1957, %v1956
    %v2007 = vpack.c.bf16 %v1959, %v1958
    %v2008 = vpack.c.bf16 %v1961, %v1960
    %s2009 = scalar_lea.vmem [#allocation5], 384
    %v2010 = vld [vmem:[%s2009] sm:$0xf]
    %v2011 = vld [vmem:[%s2009 + $0x4] sm:$0xf]
    %v2012 = vld [vmem:[%s2009 + $0x8] sm:$0xf]
    %v2013 = vld [vmem:[%s2009 + $0xc] sm:$0xf]
    %v2014 = vld [vmem:[%s2009 + $0x10] sm:$0xf]
    %v2015 = vld [vmem:[%s2009 + $0x14] sm:$0xf]
    %v2016 = vld [vmem:[%s2009 + $0x18] sm:$0xf]
    %v2017 = vld [vmem:[%s2009 + $0x1c] sm:$0xf]
    %v2018 = vld [vmem:[%s2009 + $0x20] sm:$0xf]
    %v2019 = vld [vmem:[%s2009 + $0x24] sm:$0xf]
    %v2020 = vld [vmem:[%s2009 + $0x28] sm:$0xf]
    %v2021 = vld [vmem:[%s2009 + $0x2c] sm:$0xf]
    %v2022 = vld [vmem:[%s2009 + $0x30] sm:$0xf]
    %v2023 = vld [vmem:[%s2009 + $0x34] sm:$0xf]
    %v2024 = vld [vmem:[%s2009 + $0x38] sm:$0xf]
    %v2025 = vld [vmem:[%s2009 + $0x3c] sm:$0xf]
    %v2042 = vunpack.c.l.b16 %v2010
    %v2043 = vunpack.c.l.b16 %v2011
    %v2044 = vunpack.c.l.b16 %v2012
    %v2045 = vunpack.c.l.b16 %v2013
    %v2046 = vunpack.c.l.b16 %v2014
    %v2047 = vunpack.c.l.b16 %v2015
    %v2048 = vunpack.c.l.b16 %v2016
    %v2049 = vunpack.c.l.b16 %v2017
    %v2050 = vunpack.c.l.b16 %v2018
    %v2051 = vunpack.c.l.b16 %v2019
    %v2052 = vunpack.c.l.b16 %v2020
    %v2053 = vunpack.c.l.b16 %v2021
    %v2054 = vunpack.c.l.b16 %v2022
    %v2055 = vunpack.c.l.b16 %v2023
    %v2056 = vunpack.c.l.b16 %v2024
    %v2057 = vunpack.c.l.b16 %v2025
    %v2058 = vpack.c.b16 %v2043, %v2042
    %v2059 = vpack.c.b16 %v2045, %v2044
    %v2060 = vpack.c.b16 %v2047, %v2046
    %v2061 = vpack.c.b16 %v2049, %v2048
    %v2062 = vpack.c.b16 %v2051, %v2050
    %v2063 = vpack.c.b16 %v2053, %v2052
    %v2064 = vpack.c.b16 %v2055, %v2054
    %v2065 = vpack.c.b16 %v2057, %v2056
    %2074 = vmatprep.subr.bf16.mxu0 0
    %2075 = vmatpush1.bf16.msra.mxu0 %v2065
    %2076 = vmatprep.subr.bf16.mxu0 0
    %2077 = vmatpush1.bf16.msra.mxu0 %v2064
    %2078 = vmatprep.subr.bf16.mxu0 0
    %2079 = vmatpush1.bf16.msra.mxu0 %v2063
    %2080 = vmatprep.subr.bf16.mxu0 0
    %2081 = vmatpush1.bf16.msra.mxu0 %v2062
    %2082 = vmatprep.subr.bf16.mxu0 0
    %2083 = vmatpush1.bf16.msra.mxu0 %v2061
    %2084 = vmatprep.subr.bf16.mxu0 0
    %2085 = vmatpush1.bf16.msra.mxu0 %v2060
    %2086 = vmatprep.subr.bf16.mxu0 0
    %2087 = vmatpush1.bf16.msra.mxu0 %v2059
    %2088 = vmatprep.subr.bf16.mxu0 0
    %2089 = vmatpush1.bf16.msra.mxu0 %v2058
    %2090 = vmatprep.subr.bf16.mxu0 0
    %2091 = vmatpush2.bf16.msra.mxu0 0
    %2092 = vmatprep.subr.bf16.mxu0 0
    %2093 = vmatpush2.bf16.msra.mxu0 0
    %2094 = vmatprep.subr.bf16.mxu0 0
    %2095 = vmatpush2.bf16.msra.mxu0 0
    %2096 = vmatprep.subr.bf16.mxu0 0
    %2097 = vmatpush2.bf16.msra.mxu0 0
    %2098 = vmatprep.subr.bf16.mxu0 0
    %2099 = vmatpush2.bf16.msra.mxu0 0
    %2100 = vmatprep.subr.bf16.mxu0 0
    %2101 = vmatpush2.bf16.msra.mxu0 0
    %2102 = vmatprep.subr.bf16.mxu0 0
    %2103 = vmatpush2.bf16.msra.mxu0 0
    %2104 = vmatprep.subr.bf16.mxu0 0
    %2105 = vmatpush2.bf16.msra.mxu0 0
    %2106 = vmatprep.mubr.bf16.mxu0 0
    %2107 = vmatmul.mubr.bf16.gmra.mxu0 %v2006
    %v2108 = vpop.f32.mrf.mxu0
    %v2109 = vadd.f32 0.0, %v2108
    %v2110 = vpop.f32.mrf.mxu0
    %v2111 = vpop.f32.mrf.mxu0
    %v2112 = vadd.f32 0.0, %v2111
    %v2113 = vpop.f32.mrf.mxu0
    %2114 = vmatprep.mubr.bf16.mxu0 0
    %2115 = vmatmul.mubr.bf16.gmra.mxu0 %v2007
    %v2116 = vpop.f32.mrf.mxu0
    %v2117 = vadd.f32 0.0, %v2116
    %v2118 = vpop.f32.mrf.mxu0
    %v2119 = vpop.f32.mrf.mxu0
    %v2120 = vadd.f32 0.0, %v2119
    %v2121 = vpop.f32.mrf.mxu0
    %2122 = vmatprep.mubr.bf16.mxu0 0
    %2123 = vmatmul.mubr.bf16.gmra.mxu0 %v2008
    %v2124 = vpop.f32.mrf.mxu0
    %v2125 = vadd.f32 0.0, %v2124
    %v2126 = vpop.f32.mrf.mxu0
    %v2127 = vpop.f32.mrf.mxu0
    %v2128 = vadd.f32 0.0, %v2127
    %v2129 = vpop.f32.mrf.mxu0
    %2130 = vdwg.mxu0
    %v2147 = vunpack.c.l.b16 %v1990
    %v2148 = vunpack.c.l.b16 %v1991
    %v2149 = vunpack.c.l.b16 %v1992
    %v2150 = vunpack.c.l.b16 %v1993
    %v2151 = vunpack.c.l.b16 %v1994
    %v2152 = vunpack.c.l.b16 %v1995
    %v2153 = vunpack.c.l.b16 %v1996
    %v2154 = vunpack.c.l.b16 %v1997
    %v2155 = vunpack.c.l.b16 %v1998
    %v2156 = vunpack.c.l.b16 %v1999
    %v2157 = vunpack.c.l.b16 %v2000
    %v2158 = vunpack.c.l.b16 %v2001
    %v2159 = vunpack.c.l.b16 %v2002
    %v2160 = vunpack.c.l.b16 %v2003
    %v2161 = vunpack.c.l.b16 %v2004
    %v2162 = vunpack.c.l.b16 %v2005
    %v2163 = vpack.c.b16 %v2148, %v2147
    %v2164 = vpack.c.b16 %v2150, %v2149
    %v2165 = vpack.c.b16 %v2152, %v2151
    %v2166 = vpack.c.b16 %v2154, %v2153
    %v2167 = vpack.c.b16 %v2156, %v2155
    %v2168 = vpack.c.b16 %v2158, %v2157
    %v2169 = vpack.c.b16 %v2160, %v2159
    %v2170 = vpack.c.b16 %v2162, %v2161
    %2179 = vmatprep.subr.bf16.mxu0 0
    %2180 = vmatpush1.bf16.msra.mxu0 %v2170
    %2181 = vmatprep.subr.bf16.mxu0 0
    %2182 = vmatpush1.bf16.msra.mxu0 %v2169
    %2183 = vmatprep.subr.bf16.mxu0 0
    %2184 = vmatpush1.bf16.msra.mxu0 %v2168
    %2185 = vmatprep.subr.bf16.mxu0 0
    %2186 = vmatpush1.bf16.msra.mxu0 %v2167
    %2187 = vmatprep.subr.bf16.mxu0 0
    %2188 = vmatpush1.bf16.msra.mxu0 %v2166
    %2189 = vmatprep.subr.bf16.mxu0 0
    %2190 = vmatpush1.bf16.msra.mxu0 %v2165
    %2191 = vmatprep.subr.bf16.mxu0 0
    %2192 = vmatpush1.bf16.msra.mxu0 %v2164
    %2193 = vmatprep.subr.bf16.mxu0 0
    %2194 = vmatpush1.bf16.msra.mxu0 %v2163
    %2195 = vmatprep.subr.bf16.mxu0 0
    %2196 = vmatpush2.bf16.msra.mxu0 0
    %2197 = vmatprep.subr.bf16.mxu0 0
    %2198 = vmatpush2.bf16.msra.mxu0 0
    %2199 = vmatprep.subr.bf16.mxu0 0
    %2200 = vmatpush2.bf16.msra.mxu0 0
    %2201 = vmatprep.subr.bf16.mxu0 0
    %2202 = vmatpush2.bf16.msra.mxu0 0
    %2203 = vmatprep.subr.bf16.mxu0 0
    %2204 = vmatpush2.bf16.msra.mxu0 0
    %2205 = vmatprep.subr.bf16.mxu0 0
    %2206 = vmatpush2.bf16.msra.mxu0 0
    %2207 = vmatprep.subr.bf16.mxu0 0
    %2208 = vmatpush2.bf16.msra.mxu0 0
    %2209 = vmatprep.subr.bf16.mxu0 0
    %2210 = vmatpush2.bf16.msra.mxu0 0
    %2211 = vmatprep.mubr.bf16.mxu0 0
    %2212 = vmatmul.mubr.bf16.gmra.mxu0 %v1986
    %v2213 = vpop.f32.mrf.mxu0
    %v2214 = vadd.f32 %v2109, %v2213
    %v2215 = vpop.f32.mrf.mxu0
    %v2216 = vpop.f32.mrf.mxu0
    %v2217 = vadd.f32 %v2112, %v2216
    %v2218 = vpop.f32.mrf.mxu0
    %2219 = vmatprep.mubr.bf16.mxu0 0
    %2220 = vmatmul.mubr.bf16.gmra.mxu0 %v1987
    %v2221 = vpop.f32.mrf.mxu0
    %v2222 = vadd.f32 %v2117, %v2221
    %v2223 = vpop.f32.mrf.mxu0
    %v2224 = vpop.f32.mrf.mxu0
    %v2225 = vadd.f32 %v2120, %v2224
    %v2226 = vpop.f32.mrf.mxu0
    %2227 = vmatprep.mubr.bf16.mxu0 0
    %2228 = vmatmul.mubr.bf16.gmra.mxu0 %v1988
    %v2229 = vpop.f32.mrf.mxu0
    %v2230 = vadd.f32 %v2125, %v2229
    %v2231 = vpop.f32.mrf.mxu0
    %v2232 = vpop.f32.mrf.mxu0
    %v2233 = vadd.f32 %v2128, %v2232
    %v2234 = vpop.f32.mrf.mxu0
    %2235 = vdwg.mxu0
    %v2236 = vpack.c.bf16 %v1981, %v1980
    %v2237 = vpack.c.bf16 %v1983, %v1982
    %v2238 = vpack.c.bf16 %v1985, %v1984
    %s2239 = scalar_lea.vmem [#allocation5], 512
    %v2240 = vld [vmem:[%s2239] sm:$0xf]
    %v2241 = vld [vmem:[%s2239 + $0x4] sm:$0xf]
    %v2242 = vld [vmem:[%s2239 + $0x8] sm:$0xf]
    %v2243 = vld [vmem:[%s2239 + $0xc] sm:$0xf]
    %v2244 = vld [vmem:[%s2239 + $0x10] sm:$0xf]
    %v2245 = vld [vmem:[%s2239 + $0x14] sm:$0xf]
    %v2246 = vld [vmem:[%s2239 + $0x18] sm:$0xf]
    %v2247 = vld [vmem:[%s2239 + $0x1c] sm:$0xf]
    %v2248 = vld [vmem:[%s2239 + $0x20] sm:$0xf]
    %v2249 = vld [vmem:[%s2239 + $0x24] sm:$0xf]
    %v2250 = vld [vmem:[%s2239 + $0x28] sm:$0xf]
    %v2251 = vld [vmem:[%s2239 + $0x2c] sm:$0xf]
    %v2252 = vld [vmem:[%s2239 + $0x30] sm:$0xf]
    %v2253 = vld [vmem:[%s2239 + $0x34] sm:$0xf]
    %v2254 = vld [vmem:[%s2239 + $0x38] sm:$0xf]
    %v2255 = vld [vmem:[%s2239 + $0x3c] sm:$0xf]
    %v2272 = vunpack.c.l.b16 %v2240
    %v2273 = vunpack.c.l.b16 %v2241
    %v2274 = vunpack.c.l.b16 %v2242
    %v2275 = vunpack.c.l.b16 %v2243
    %v2276 = vunpack.c.l.b16 %v2244
    %v2277 = vunpack.c.l.b16 %v2245
    %v2278 = vunpack.c.l.b16 %v2246
    %v2279 = vunpack.c.l.b16 %v2247
    %v2280 = vunpack.c.l.b16 %v2248
    %v2281 = vunpack.c.l.b16 %v2249
    %v2282 = vunpack.c.l.b16 %v2250
    %v2283 = vunpack.c.l.b16 %v2251
    %v2284 = vunpack.c.l.b16 %v2252
    %v2285 = vunpack.c.l.b16 %v2253
    %v2286 = vunpack.c.l.b16 %v2254
    %v2287 = vunpack.c.l.b16 %v2255
    %v2288 = vpack.c.b16 %v2273, %v2272
    %v2289 = vpack.c.b16 %v2275, %v2274
    %v2290 = vpack.c.b16 %v2277, %v2276
    %v2291 = vpack.c.b16 %v2279, %v2278
    %v2292 = vpack.c.b16 %v2281, %v2280
    %v2293 = vpack.c.b16 %v2283, %v2282
    %v2294 = vpack.c.b16 %v2285, %v2284
    %v2295 = vpack.c.b16 %v2287, %v2286
    %2304 = vmatprep.subr.bf16.mxu0 0
    %2305 = vmatpush1.bf16.msra.mxu0 %v2295
    %2306 = vmatprep.subr.bf16.mxu0 0
    %2307 = vmatpush1.bf16.msra.mxu0 %v2294
    %2308 = vmatprep.subr.bf16.mxu0 0
    %2309 = vmatpush1.bf16.msra.mxu0 %v2293
    %2310 = vmatprep.subr.bf16.mxu0 0
    %2311 = vmatpush1.bf16.msra.mxu0 %v2292
    %2312 = vmatprep.subr.bf16.mxu0 0
    %2313 = vmatpush1.bf16.msra.mxu0 %v2291
    %2314 = vmatprep.subr.bf16.mxu0 0
    %2315 = vmatpush1.bf16.msra.mxu0 %v2290
    %2316 = vmatprep.subr.bf16.mxu0 0
    %2317 = vmatpush1.bf16.msra.mxu0 %v2289
    %2318 = vmatprep.subr.bf16.mxu0 0
    %2319 = vmatpush1.bf16.msra.mxu0 %v2288
    %2320 = vmatprep.subr.bf16.mxu0 0
    %2321 = vmatpush2.bf16.msra.mxu0 0
    %2322 = vmatprep.subr.bf16.mxu0 0
    %2323 = vmatpush2.bf16.msra.mxu0 0
    %2324 = vmatprep.subr.bf16.mxu0 0
    %2325 = vmatpush2.bf16.msra.mxu0 0
    %2326 = vmatprep.subr.bf16.mxu0 0
    %2327 = vmatpush2.bf16.msra.mxu0 0
    %2328 = vmatprep.subr.bf16.mxu0 0
    %2329 = vmatpush2.bf16.msra.mxu0 0
    %2330 = vmatprep.subr.bf16.mxu0 0
    %2331 = vmatpush2.bf16.msra.mxu0 0
    %2332 = vmatprep.subr.bf16.mxu0 0
    %2333 = vmatpush2.bf16.msra.mxu0 0
    %2334 = vmatprep.subr.bf16.mxu0 0
    %2335 = vmatpush2.bf16.msra.mxu0 0
    %2336 = vmatprep.mubr.bf16.mxu0 0
    %2337 = vmatmul.mubr.bf16.gmra.mxu0 %v2236
    %v2338 = vpop.f32.mrf.mxu0
    %v2339 = vadd.f32 0.0, %v2338
    %v2340 = vpop.f32.mrf.mxu0
    %v2341 = vpop.f32.mrf.mxu0
    %v2342 = vadd.f32 0.0, %v2341
    %v2343 = vpop.f32.mrf.mxu0
    %2344 = vmatprep.mubr.bf16.mxu0 0
    %2345 = vmatmul.mubr.bf16.gmra.mxu0 %v2237
    %v2346 = vpop.f32.mrf.mxu0
    %v2347 = vadd.f32 0.0, %v2346
    %v2348 = vpop.f32.mrf.mxu0
    %v2349 = vpop.f32.mrf.mxu0
    %v2350 = vadd.f32 0.0, %v2349
    %v2351 = vpop.f32.mrf.mxu0
    %2352 = vmatprep.mubr.bf16.mxu0 0
    %2353 = vmatmul.mubr.bf16.gmra.mxu0 %v2238
    %v2354 = vpop.f32.mrf.mxu0
    %v2355 = vadd.f32 0.0, %v2354
    %v2356 = vpop.f32.mrf.mxu0
    %v2357 = vpop.f32.mrf.mxu0
    %v2358 = vadd.f32 0.0, %v2357
    %v2359 = vpop.f32.mrf.mxu0
    %2360 = vdwg.mxu0
    %v2361 = vadd.f32 %v2214, %v2339
    %v2362 = vadd.f32 %v2217, %v2342
    %v2363 = vadd.f32 %v2222, %v2347
    %v2364 = vadd.f32 %v2225, %v2350
    %v2365 = vadd.f32 %v2230, %v2355
    %v2366 = vadd.f32 %v2233, %v2358
    %s2367 = scalar_lea.vmem %s6, 2
    %v2368 = vld [vmem:[%s2367] sm:$0x1]
    %v2370 = vlaneseq
    %v2371 = vshrl.u32 %v2370, 7
    %v2372 = vsub.s32 0, %v2371
    %v2373 = vrot.slane %v2368, %v2372
    %v2375 = vadd.f32 %v2361, %v2373
    %v2376 = vadd.f32 %v2362, %v2373
    %v2377 = vadd.f32 %v2363, %v2373
    %v2378 = vadd.f32 %v2364, %v2373
    %v2379 = vadd.f32 %v2365, %v2373
    %v2380 = vadd.f32 %v2366, %v2373
    %v2381 = vmax.f32 %v2375, 0.0
    %v2382 = vmax.f32 %v2376, 0.0
    %v2383 = vmax.f32 %v2377, 0.0
    %v2384 = vmax.f32 %v2378, 0.0
    %v2385 = vmax.f32 %v2379, 0.0
    %v2386 = vmax.f32 %v2380, 0.0
    %v2387 = vpack.c.bf16 %v2382, %v2381
    %v2388 = vpack.c.bf16 %v2384, %v2383
    %v2389 = vpack.c.bf16 %v2386, %v2385
    %s2390 = scalar_lea.vmem [#allocation7], 128
    %v2391 = vld [vmem:[%s2390] sm:$0xf]
    %v2392 = vld [vmem:[%s2390 + $0x4] sm:$0xf]
    %v2393 = vld [vmem:[%s2390 + $0x8] sm:$0xf]
    %v2394 = vld [vmem:[%s2390 + $0xc] sm:$0xf]
    %v2395 = vld [vmem:[%s2390 + $0x10] sm:$0xf]
    %v2396 = vld [vmem:[%s2390 + $0x14] sm:$0xf]
    %v2397 = vld [vmem:[%s2390 + $0x18] sm:$0xf]
    %v2398 = vld [vmem:[%s2390 + $0x1c] sm:$0xf]
    %v2399 = vld [vmem:[%s2390 + $0x20] sm:$0xf]
    %v2400 = vld [vmem:[%s2390 + $0x24] sm:$0xf]
    %v2401 = vld [vmem:[%s2390 + $0x28] sm:$0xf]
    %v2402 = vld [vmem:[%s2390 + $0x2c] sm:$0xf]
    %v2403 = vld [vmem:[%s2390 + $0x30] sm:$0xf]
    %v2404 = vld [vmem:[%s2390 + $0x34] sm:$0xf]
    %v2405 = vld [vmem:[%s2390 + $0x38] sm:$0xf]
    %v2406 = vld [vmem:[%s2390 + $0x3c] sm:$0xf]
    %v2423 = vunpack.c.l.b16 %v2391
    %v2424 = vunpack.c.l.b16 %v2392
    %v2425 = vunpack.c.l.b16 %v2393
    %v2426 = vunpack.c.l.b16 %v2394
    %v2427 = vunpack.c.l.b16 %v2395
    %v2428 = vunpack.c.l.b16 %v2396
    %v2429 = vunpack.c.l.b16 %v2397
    %v2430 = vunpack.c.l.b16 %v2398
    %v2431 = vunpack.c.l.b16 %v2399
    %v2432 = vunpack.c.l.b16 %v2400
    %v2433 = vunpack.c.l.b16 %v2401
    %v2434 = vunpack.c.l.b16 %v2402
    %v2435 = vunpack.c.l.b16 %v2403
    %v2436 = vunpack.c.l.b16 %v2404
    %v2437 = vunpack.c.l.b16 %v2405
    %v2438 = vunpack.c.l.b16 %v2406
    %v2439 = vpack.c.b16 %v2424, %v2423
    %v2440 = vpack.c.b16 %v2426, %v2425
    %v2441 = vpack.c.b16 %v2428, %v2427
    %v2442 = vpack.c.b16 %v2430, %v2429
    %v2443 = vpack.c.b16 %v2432, %v2431
    %v2444 = vpack.c.b16 %v2434, %v2433
    %v2445 = vpack.c.b16 %v2436, %v2435
    %v2446 = vpack.c.b16 %v2438, %v2437
    %2455 = vmatprep.subr.bf16.mxu0 0
    %2456 = vmatpush1.bf16.msra.mxu0 %v2446
    %2457 = vmatprep.subr.bf16.mxu0 0
    %2458 = vmatpush1.bf16.msra.mxu0 %v2445
    %2459 = vmatprep.subr.bf16.mxu0 0
    %2460 = vmatpush1.bf16.msra.mxu0 %v2444
    %2461 = vmatprep.subr.bf16.mxu0 0
    %2462 = vmatpush1.bf16.msra.mxu0 %v2443
    %2463 = vmatprep.subr.bf16.mxu0 0
    %2464 = vmatpush1.bf16.msra.mxu0 %v2442
    %2465 = vmatprep.subr.bf16.mxu0 0
    %2466 = vmatpush1.bf16.msra.mxu0 %v2441
    %2467 = vmatprep.subr.bf16.mxu0 0
    %2468 = vmatpush1.bf16.msra.mxu0 %v2440
    %2469 = vmatprep.subr.bf16.mxu0 0
    %2470 = vmatpush1.bf16.msra.mxu0 %v2439
    %2471 = vmatprep.subr.bf16.mxu0 0
    %2472 = vmatpush2.bf16.msra.mxu0 0
    %2473 = vmatprep.subr.bf16.mxu0 0
    %2474 = vmatpush2.bf16.msra.mxu0 0
    %2475 = vmatprep.subr.bf16.mxu0 0
    %2476 = vmatpush2.bf16.msra.mxu0 0
    %2477 = vmatprep.subr.bf16.mxu0 0
    %2478 = vmatpush2.bf16.msra.mxu0 0
    %2479 = vmatprep.subr.bf16.mxu0 0
    %2480 = vmatpush2.bf16.msra.mxu0 0
    %2481 = vmatprep.subr.bf16.mxu0 0
    %2482 = vmatpush2.bf16.msra.mxu0 0
    %2483 = vmatprep.subr.bf16.mxu0 0
    %2484 = vmatpush2.bf16.msra.mxu0 0
    %2485 = vmatprep.subr.bf16.mxu0 0
    %2486 = vmatpush2.bf16.msra.mxu0 0
    %2487 = vmatprep.mubr.bf16.mxu0 0
    %2488 = vmatmul.mubr.bf16.gmra.mxu0 %v2387
    %v2489 = vpop.f32.mrf.mxu0
    %v2490 = vpop.f32.mrf.mxu0
    %v2491 = vpop.f32.mrf.mxu0
    %v2492 = vadd.f32 0.0, %v2491
    %v2493 = vpop.f32.mrf.mxu0
    %2494 = vmatprep.mubr.bf16.mxu0 0
    %2495 = vmatmul.mubr.bf16.gmra.mxu0 %v2388
    %v2496 = vpop.f32.mrf.mxu0
    %v2497 = vadd.f32 0.0, %v2496
    %v2498 = vpop.f32.mrf.mxu0
    %v2499 = vpop.f32.mrf.mxu0
    %v2500 = vadd.f32 0.0, %v2499
    %v2501 = vpop.f32.mrf.mxu0
    %2502 = vmatprep.mubr.bf16.mxu0 0
    %2503 = vmatmul.mubr.bf16.gmra.mxu0 %v2389
    %v2504 = vpop.f32.mrf.mxu0
    %v2505 = vadd.f32 0.0, %v2504
    %v2506 = vpop.f32.mrf.mxu0
    %v2507 = vpop.f32.mrf.mxu0
    %v2508 = vpop.f32.mrf.mxu0
    %2509 = vdwg.mxu0
    %v2510 = vadd.f32 %v1775, %v2492
    %v2511 = vadd.f32 %v1776, %v2497
    %v2512 = vadd.f32 %v1777, %v2500
    %v2513 = vadd.f32 %v1778, %v2505
    %s2514 = scalar_lea.vmem %s8, 2
    %v2515 = vld [vmem:[%s2514] sm:$0x1]
    %v2517 = vlaneseq
    %v2518 = vshrl.u32 %v2517, 7
    %v2519 = vsub.s32 0, %v2518
    %v2520 = vrot.slane %v2515, %v2519
    %v2522 = vadd.f32 %v2510, %v2520
    %v2523 = vadd.f32 %v2511, %v2520
    %v2524 = vadd.f32 %v2512, %v2520
    %v2525 = vadd.f32 %v2513, %v2520
    %2526 = vst [vmem:[#allocation8] sm:$0xff] %v2522
    %2527 = vst [vmem:[#allocation8 + $0x8] sm:$0xff] %v2523
    %2528 = vst [vmem:[#allocation8 + $0x10] sm:$0xff] %v2524
    %2529 = vst [vmem:[#allocation8 + $0x18] sm:$0xff] %v2525
    // Predicated region
    $region50: #{tpu_custom_call.1} parent=1 // pred_check
      _
    $region51: #{tpu_custom_call.1} parent=1 // pred_check_branch
      %2531 = sbr.rel (0) target = $region53
    $region52: #{tpu_custom_call.1} parent=1 // pred_region
      %s2533 = ssub.s32 512, 512
      %2534 = vsyncadd [#allocation4], %s2533
      %s2535 = sshll.u32 [#allocation8], 4
      %s2536 = int_to_ptr.vmem [resolvable:$true] %s2535
      %2541 = dma.vmem_to_hbm [thread:$0]  %s2536, 512, %s9, [#allocation4], 128, 128, 8
    $region53: #{tpu_custom_call.1} parent=1 // pred_fallthru
      _
    // Predicated region
    $region54: #{tpu_custom_call.1} parent=1 // pred_check
      _
    $region55: #{tpu_custom_call.1} parent=1 // pred_check_branch
      %2543 = sbr.rel (0) target = $region57
    $region56: #{tpu_custom_call.1} parent=1 // pred_region
      %2544 = dma.done [#allocation4], 512
    $region57: #{tpu_custom_call.1} parent=1 // pred_fallthru
      _
    %2545 = vsyncpa [#allocation3], 1
    %2546 = vsyncpa [#allocation6], 1
    %2547 = vsyncpa [#allocation4], 1

</llo_original>
